<compile_context>
chip_gen: v7x
topology: tpu7x:2x2x1
jax: 0.10.0
libtpu: 0.0.40
codegen_flags: <defaults>
</compile_context>

<pallas_src>
import functools
import math

import jax
import jax.numpy as jnp
from jax.experimental import pallas as pl
from jax.experimental.pallas import tpu as pltpu


# ----------------------------- in-kernel helpers -----------------------------

def _erf_approx(z):
    # Abramowitz & Stegun 7.1.26 (max abs error ~1.5e-7).
    a1, a2, a3, a4, a5 = 0.254829592, -0.284496736, 1.421413741, -1.453152027, 1.061405429
    p = 0.3275911
    az = jnp.abs(z)
    w = 1.0 + p * az
    # Divide -> EUP approx reciprocal + one Newton step (leaves the VALU path).
    t = pl.reciprocal(w, approx=True)
    t = t * (2.0 - w * t)
    poly = ((((a5 * t + a4) * t + a3) * t + a2) * t + a1) * t
    y = 1.0 - poly * jnp.exp(-az * az)
    return jnp.where(z >= 0.0, y, -y)


def _gelu_exact(x):
    # nn.GELU() default = exact erf-based GELU.
    return 0.5 * x * (1.0 + _erf_approx(x * (1.0 / math.sqrt(2.0))))


def _layernorm(x, gamma, beta, eps=1e-5):
    # Biased variance, as in the reference LayerNorm.
    mean = jnp.mean(x, axis=-1, keepdims=True)
    xc = x - mean
    var = jnp.mean(xc * xc, axis=-1, keepdims=True)
    inv = jax.lax.rsqrt(var + eps)
    return xc * inv * gamma + beta


# --------------------------------- kernel ------------------------------------

def _transformer_layer_kernel(x_ref, prm_ref, wqkv_ref, wo_ref, w1_ref, w2_ref,
                              o_ref, *, batch, seq, dim, num_heads):
    hd = dim // num_heads
    scale = 1.0 / math.sqrt(float(hd))

    x = x_ref[...].astype(jnp.float32)              # (B*T, D), batch in sublanes

    # Packed parameter slab: one row per vector (sublane slices are free).
    prm = prm_ref[...]                              # (8, >=128)
    ln1_g = prm[0:1, :dim]
    ln1_b = prm[1:2, :dim]
    bo    = prm[2:3, :dim]
    ln2_g = prm[3:4, :dim]
    ln2_b = prm[4:5, :dim]
    b1    = prm[5:6, :]                             # (1, F) (F fills the row)
    b2    = prm[6:7, :dim]

    # ---- pre-norm 1 ----
    x_n = _layernorm(x, ln1_g, ln1_b)

    # Per-head weights: head on leading dims -> slicing is free.
    w_qkv = wqkv_ref[...]                           # (3, H, D, hd)
    w_o   = wo_ref[...]                             # (H, hd, D)

    # Bug-for-bug causal mask (lower triangle incl. diagonal filled), built
    # in-kernel and hoisted out of the head/batch loops.
    row = jax.lax.broadcasted_iota(jnp.int32, (seq, seq), 0)
    col = jax.lax.broadcasted_iota(jnp.int32, (seq, seq), 1)
    fill_mask = col <= row

    # Per-head Q/K/V over all B*T rows at once (sublane-stacked batches).
    q_heads = [jnp.dot(x_n, w_qkv[0, h], preferred_element_type=jnp.float32)
               for h in range(num_heads)]
    k_heads = [jnp.dot(x_n, w_qkv[1, h], preferred_element_type=jnp.float32)
               for h in range(num_heads)]
    v_heads = [jnp.dot(x_n, w_qkv[2, h], preferred_element_type=jnp.float32)
               for h in range(num_heads)]

    attn_blocks = []
    for b in range(batch):                          # static unroll (B = 2)
        lo = b * seq
        acc_b = jnp.zeros((seq, dim), jnp.float32)
        for h in range(num_heads):                  # static unroll (H = 4)
            q = q_heads[h][lo:lo + seq, :]          # sublane slices: free
            k = k_heads[h][lo:lo + seq, :]
            v = v_heads[h][lo:lo + seq, :]

            # s = q @ k^T without an explicit transpose (MXU contracts last dims).
            s = jax.lax.dot_general(q, k, (((1,), (1,)), ((), ())),
                                    preferred_element_type=jnp.float32) * scale
            s = jnp.where(fill_mask, jnp.float32(-1e9), s)

            m = jnp.max(s, axis=-1, keepdims=True)
            e = jnp.exp(s - m)
            l = jnp.sum(e, axis=-1, keepdims=True)
            r = pl.reciprocal(l, approx=True)       # EUP reciprocal (free slot)
            r = r * (2.0 - l * r)                   # one Newton step -> ~f32-exact
            p = e * r

            hv = jnp.dot(p, v, preferred_element_type=jnp.float32)        # (T, hd)
            # Fold head output straight into the output projection (no lane concat).
            acc_b = acc_b + jnp.dot(hv, w_o[h], preferred_element_type=jnp.float32)
        attn_blocks.append(acc_b)

    attn = jnp.concatenate(attn_blocks, axis=0) + bo                       # (B*T, D)
    x1 = x + attn                                                          # residual 1

    # ---- pre-norm 2 + feed-forward ----
    x2 = _layernorm(x1, ln2_g, ln2_b)
    h1 = jnp.dot(x2, w1_ref[...], preferred_element_type=jnp.float32) + b1
    g = _gelu_exact(h1)
    h2 = jnp.dot(g, w2_ref[...], preferred_element_type=jnp.float32) + b2

    o_ref[...] = (x1 + h2).astype(o_ref.dtype)                             # residual 2


# -------------------------------- wrapper ------------------------------------

def transformer_layer(x, ln1_g, ln1_b, wq, wk, wv, wo, bo, ln2_g, ln2_b,
                      w1, b1, w2, b2, *, num_heads):
    """x: (B, T, D). wq/wk/wv: (H, D, hd) per-head (x@W form). wo: (D, D),
    w1: (D, F), w2: (F, D); 1-D biases / LN affine params."""
    B, T, D = x.shape
    F = w1.shape[1]
    hd = D // num_heads

    # Free, contiguous reshape: batch rows stacked along sublanes.
    x2d = x.reshape(B * T, D)

    # Head axis on leading dims -> free in-kernel slicing (no lane extracts).
    qkv_w = jnp.stack([wq, wk, wv], axis=0)                      # (3, H, D, hd)
    wo_h = wo.reshape(num_heads, hd, D)                          # (H, hd, D)

    # Pack the 7 small vectors into a single (8, max(128, F)) slab -> one DMA.
    slab_lanes = max(128, F)
    prm = jnp.zeros((8, slab_lanes), jnp.float32)
    prm = prm.at[0, :D].set(ln1_g.astype(jnp.float32))
    prm = prm.at[1, :D].set(ln1_b.astype(jnp.float32))
    prm = prm.at[2, :D].set(bo.astype(jnp.float32))
    prm = prm.at[3, :D].set(ln2_g.astype(jnp.float32))
    prm = prm.at[4, :D].set(ln2_b.astype(jnp.float32))
    prm = prm.at[5, :F].set(b1.astype(jnp.float32))
    prm = prm.at[6, :D].set(b2.astype(jnp.float32))

    flops = (
        2 * (B * T) * D * hd * 3 * num_heads                      # per-head QKV
        + B * num_heads * (2 * T * T * hd + 2 * T * T * hd        # q k^T, p v
                           + 2 * T * hd * D)                      # per-head out proj
        + 2 * (B * T) * D * F + 2 * (B * T) * F * D               # FFN
    )
    transcendentals = B * num_heads * T * T + B * T * F
    bytes_accessed = 4 * (2 * B * T * D + 3 * num_heads * D * hd + D * D
                          + D * F + F * D + 8 * slab_lanes)

    kernel = functools.partial(_transformer_layer_kernel,
                               batch=B, seq=T, dim=D, num_heads=num_heads)

    out2d = pl.pallas_call(
        kernel,
        out_shape=jax.ShapeDtypeStruct((B * T, D), x.dtype),
        grid_spec=pltpu.PrefetchScalarGridSpec(
            num_scalar_prefetch=0,
            grid=(1,),                                            # single step: no per-batch pipeline bubble
            in_specs=[
                pl.BlockSpec((B * T, D), lambda i: (0, 0)),               # x (flattened)
                pl.BlockSpec((8, slab_lanes), lambda i: (0, 0)),          # packed params
                pl.BlockSpec((3, num_heads, D, hd), lambda i: (0, 0, 0, 0)),  # QKV weights
                pl.BlockSpec((num_heads, hd, D), lambda i: (0, 0, 0)),    # out-proj weight
                pl.BlockSpec((D, F), lambda i: (0, 0)),                   # ffn fc1 weight
                pl.BlockSpec((F, D), lambda i: (0, 0)),                   # ffn fc2 weight
            ],
            out_specs=pl.BlockSpec((B * T, D), lambda i: (0, 0)),
        ),
        compiler_params=pltpu.CompilerParams(
            dimension_semantics=("arbitrary",)),
        cost_estimate=pl.CostEstimate(
            flops=int(flops),
            transcendentals=int(transcendentals),
            bytes_accessed=int(bytes_accessed)),
    )(x2d, prm, qkv_w, wo_h, w1, w2)

    return out2d.reshape(B, T, D)


# ------------------------- plain-JAX reference (spec) ------------------------

def _layernorm_ref(x, gamma, beta, eps=1e-5):
    mean = x.mean(-1, keepdims=True)
    var = ((x - mean) ** 2).mean(-1, keepdims=True)
    return (x - mean) / jnp.sqrt(var + eps) * gamma + beta


def reference_transformer_layer(x, ln1_g, ln1_b, wq, wk, wv, wo, bo,
                                ln2_g, ln2_b, w1, b1, w2, b2):
    """Mirrors the PyTorch TransformerLayer forward (eval mode)."""
    H, _, hd = wq.shape
    T = x.shape[1]

    residual1 = x
    xn = _layernorm_ref(x, ln1_g, ln1_b)

    rows = jnp.arange(T)[:, None]
    cols = jnp.arange(T)[None, :]
    mask = cols <= rows                        # triu(ones).T -> lower triangle filled

    outs = []
    for h in range(H):
        q = xn @ wq[h]
        k = xn @ wk[h]
        v = xn @ wv[h]
        s = jnp.einsum("btd,bsd->bts", q, k) / math.sqrt(hd)
        s = jnp.where(mask[None], -1e9, s)
        p = jax.nn.softmax(s, axis=-1)
        outs.append(jnp.einsum("bts,bsd->btd", p, v))
    concat = jnp.concatenate(outs, axis=-1)
    attn = concat @ wo + bo
    x1 = attn + residual1

    residual2 = x1
    xn2 = _layernorm_ref(x1, ln2_g, ln2_b)
    h1 = xn2 @ w1 + b1
    g = 0.5 * h1 * (1.0 + jax.scipy.special.erf(h1 / jnp.sqrt(2.0)))   # exact GELU
    h2 = g @ w2 + b2
    return h2 + residual2


# ----------------------------------- main ------------------------------------

if __name__ == "__main__":
    B, T, D, H = 2, 8, 32, 4
    hd = D // H
    F = 4 * D

    key = jax.random.PRNGKey(0)
    (kx, kq, kk, kv, kwo, kbo, kg1, kb1n, kg2, kb2n,
     kw1, kbf1, kw2, kbf2) = jax.random.split(key, 14)

    x = jax.random.normal(kx, (B, T, D), dtype=jnp.float32)

    # nn.Linear-style uniform(-1/sqrt(fan_in), 1/sqrt(fan_in)) init, in x@W form.
    lim_d = 1.0 / math.sqrt(D)
    lim_f = 1.0 / math.sqrt(F)
    wq = jax.random.uniform(kq, (H, D, hd), jnp.float32, -lim_d, lim_d)
    wk = jax.random.uniform(kk, (H, D, hd), jnp.float32, -lim_d, lim_d)
    wv = jax.random.uniform(kv, (H, D, hd), jnp.float32, -lim_d, lim_d)
    wo = jax.random.uniform(kwo, (D, D), jnp.float32, -lim_d, lim_d)
    bo = jax.random.uniform(kbo, (D,), jnp.float32, -lim_d, lim_d)

    ln1_g = 1.0 + 0.05 * jax.random.normal(kg1, (D,), jnp.float32)
    ln1_b = 0.05 * jax.random.normal(kb1n, (D,), jnp.float32)
    ln2_g = 1.0 + 0.05 * jax.random.normal(kg2, (D,), jnp.float32)
    ln2_b = 0.05 * jax.random.normal(kb2n, (D,), jnp.float32)

    w1 = jax.random.uniform(kw1, (D, F), jnp.float32, -lim_d, lim_d)
    b1 = jax.random.uniform(kbf1, (F,), jnp.float32, -lim_d, lim_d)
    w2 = jax.random.uniform(kw2, (F, D), jnp.float32, -lim_f, lim_f)
    b2 = jax.random.uniform(kbf2, (D,), jnp.float32, -lim_f, lim_f)

    out = transformer_layer(x, ln1_g, ln1_b, wq, wk, wv, wo, bo,
                            ln2_g, ln2_b, w1, b1, w2, b2, num_heads=H)
    out = jax.block_until_ready(out)

    ref = reference_transformer_layer(x, ln1_g, ln1_b, wq, wk, wv, wo, bo,
                                      ln2_g, ln2_b, w1, b1, w2, b2)

    assert out.shape == (B, T, D)
    assert jnp.allclose(out, ref, atol=1e-4, rtol=1e-4), \
        f"max abs diff {float(jnp.max(jnp.abs(out - ref)))}"

    print("KERNEL_OK")
</pallas_src>

<mosaic_0001>
module attributes {stable_mosaic.version = 11 : i64} {
  func.func @_transformer_layer_kernel(%arg0: i32, %arg1: memref<16x32xf32, #tpu.memory_space<vmem>>, %arg2: memref<8x128xf32, #tpu.memory_space<vmem>>, %arg3: memref<3x4x32x8xf32, #tpu.memory_space<vmem>>, %arg4: memref<4x8x32xf32, #tpu.memory_space<vmem>>, %arg5: memref<32x128xf32, #tpu.memory_space<vmem>>, %arg6: memref<128x32xf32, #tpu.memory_space<vmem>>, %arg7: memref<16x32xf32, #tpu.memory_space<vmem>>) attributes {dimension_semantics = [#tpu.dimension_semantics<arbitrary>], iteration_bounds = array<i64: 1>, scalar_prefetch = 0 : i64, scratch_operands = 0 : i64, tpu.core_type = #tpu.core_type<tc>, window_params = [{pipeline_mode = #tpu.pipeline_mode<synchronous>, transform_indices = @transform_0, window_bounds = array<i64: 16, 32>}, {pipeline_mode = #tpu.pipeline_mode<synchronous>, transform_indices = @transform_1, window_bounds = array<i64: 8, 128>}, {pipeline_mode = #tpu.pipeline_mode<synchronous>, transform_indices = @transform_2, window_bounds = array<i64: 3, 4, 32, 8>}, {pipeline_mode = #tpu.pipeline_mode<synchronous>, transform_indices = @transform_3, window_bounds = array<i64: 4, 8, 32>}, {pipeline_mode = #tpu.pipeline_mode<synchronous>, transform_indices = @transform_4, window_bounds = array<i64: 32, 128>}, {pipeline_mode = #tpu.pipeline_mode<synchronous>, transform_indices = @transform_5, window_bounds = array<i64: 128, 32>}, {pipeline_mode = #tpu.pipeline_mode<synchronous>, transform_indices = @transform_6, window_bounds = array<i64: 16, 32>}]} {
    %c0 = arith.constant 0 : index
    %c0_0 = arith.constant 0 : index
    %0 = vector.load %arg1[%c0, %c0_0] : memref<16x32xf32, #tpu.memory_space<vmem>>, vector<16x32xf32>
    %c0_1 = arith.constant 0 : index
    %c0_2 = arith.constant 0 : index
    %1 = vector.load %arg2[%c0_1, %c0_2] : memref<8x128xf32, #tpu.memory_space<vmem>>, vector<8x128xf32>
    %2 = vector.extract_strided_slice %1 {offsets = [0, 0], sizes = [1, 32], strides = [1, 1]} : vector<8x128xf32> to vector<1x32xf32>
    %3 = vector.extract_strided_slice %1 {offsets = [1, 0], sizes = [1, 32], strides = [1, 1]} : vector<8x128xf32> to vector<1x32xf32>
    %4 = vector.extract_strided_slice %1 {offsets = [2, 0], sizes = [1, 32], strides = [1, 1]} : vector<8x128xf32> to vector<1x32xf32>
    %5 = vector.extract_strided_slice %1 {offsets = [3, 0], sizes = [1, 32], strides = [1, 1]} : vector<8x128xf32> to vector<1x32xf32>
    %6 = vector.extract_strided_slice %1 {offsets = [4, 0], sizes = [1, 32], strides = [1, 1]} : vector<8x128xf32> to vector<1x32xf32>
    %7 = vector.extract_strided_slice %1 {offsets = [5, 0], sizes = [1, 128], strides = [1, 1]} : vector<8x128xf32> to vector<1x128xf32>
    %8 = vector.extract_strided_slice %1 {offsets = [6, 0], sizes = [1, 32], strides = [1, 1]} : vector<8x128xf32> to vector<1x32xf32>
    %cst = arith.constant dense<0.000000e+00> : vector<16xf32>
    %9 = vector.multi_reduction <add>, %0, %cst [1] : vector<16x32xf32> to vector<16xf32>
    %10 = vector.shape_cast %9 : vector<16xf32> to vector<16x1xf32>
    %cst_3 = arith.constant 3.200000e+01 : f32
    %11 = vector.broadcast %cst_3 : f32 to vector<16x1xf32>
    %12 = arith.divf %10, %11 : vector<16x1xf32>
    %13 = vector.broadcast %12 : vector<16x1xf32> to vector<16x32xf32>
    %14 = arith.subf %0, %13 : vector<16x32xf32>
    %15 = arith.mulf %14, %14 : vector<16x32xf32>
    %cst_4 = arith.constant dense<0.000000e+00> : vector<16xf32>
    %16 = vector.multi_reduction <add>, %15, %cst_4 [1] : vector<16x32xf32> to vector<16xf32>
    %17 = vector.shape_cast %16 : vector<16xf32> to vector<16x1xf32>
    %cst_5 = arith.constant 3.200000e+01 : f32
    %18 = vector.broadcast %cst_5 : f32 to vector<16x1xf32>
    %19 = arith.divf %17, %18 : vector<16x1xf32>
    %cst_6 = arith.constant 9.99999974E-6 : f32
    %20 = vector.broadcast %cst_6 : f32 to vector<16x1xf32>
    %21 = arith.addf %19, %20 : vector<16x1xf32>
    %22 = math.rsqrt %21 : vector<16x1xf32>
    %23 = vector.broadcast %22 : vector<16x1xf32> to vector<16x32xf32>
    %24 = arith.mulf %14, %23 : vector<16x32xf32>
    %25 = vector.broadcast %2 : vector<1x32xf32> to vector<16x32xf32>
    %26 = arith.mulf %24, %25 : vector<16x32xf32>
    %27 = vector.broadcast %3 : vector<1x32xf32> to vector<16x32xf32>
    %28 = arith.addf %26, %27 : vector<16x32xf32>
    %c0_7 = arith.constant 0 : index
    %c0_8 = arith.constant 0 : index
    %c0_9 = arith.constant 0 : index
    %c0_10 = arith.constant 0 : index
    %29 = vector.load %arg3[%c0_7, %c0_8, %c0_9, %c0_10] : memref<3x4x32x8xf32, #tpu.memory_space<vmem>>, vector<3x4x32x8xf32>
    %c0_11 = arith.constant 0 : index
    %c0_12 = arith.constant 0 : index
    %c0_13 = arith.constant 0 : index
    %30 = vector.load %arg4[%c0_11, %c0_12, %c0_13] : memref<4x8x32xf32, #tpu.memory_space<vmem>>, vector<4x8x32xf32>
    %31 = tpu.iota {dimensions = array<i32: 0>} : vector<8x8xi32>
    %32 = tpu.iota {dimensions = array<i32: 1>} : vector<8x8xi32>
    %33 = arith.cmpi sle, %32, %31 : vector<8x8xi32>
    %34 = vector.extract_strided_slice %29 {offsets = [0, 0, 0, 0], sizes = [1, 1, 32, 8], strides = [1, 1, 1, 1]} : vector<3x4x32x8xf32> to vector<1x1x32x8xf32>
    %35 = vector.shape_cast %34 : vector<1x1x32x8xf32> to vector<32x8xf32>
    %cst_14 = arith.constant dense<0.000000e+00> : vector<16x8xf32>
    %36 = tpu.matmul %28, %35, %cst_14 {dimension_numbers = #tpu.dot_dimension_numbers<[1], [0], [0], [1], [0, 0, 1, 1], [], []>} : vector<16x32xf32>, vector<32x8xf32>, vector<16x8xf32> -> vector<16x8xf32>
    %37 = vector.extract_strided_slice %29 {offsets = [0, 1, 0, 0], sizes = [1, 1, 32, 8], strides = [1, 1, 1, 1]} : vector<3x4x32x8xf32> to vector<1x1x32x8xf32>
    %38 = vector.shape_cast %37 : vector<1x1x32x8xf32> to vector<32x8xf32>
    %cst_15 = arith.constant dense<0.000000e+00> : vector<16x8xf32>
    %39 = tpu.matmul %28, %38, %cst_15 {dimension_numbers = #tpu.dot_dimension_numbers<[1], [0], [0], [1], [0, 0, 1, 1], [], []>} : vector<16x32xf32>, vector<32x8xf32>, vector<16x8xf32> -> vector<16x8xf32>
    %40 = vector.extract_strided_slice %29 {offsets = [0, 2, 0, 0], sizes = [1, 1, 32, 8], strides = [1, 1, 1, 1]} : vector<3x4x32x8xf32> to vector<1x1x32x8xf32>
    %41 = vector.shape_cast %40 : vector<1x1x32x8xf32> to vector<32x8xf32>
    %cst_16 = arith.constant dense<0.000000e+00> : vector<16x8xf32>
    %42 = tpu.matmul %28, %41, %cst_16 {dimension_numbers = #tpu.dot_dimension_numbers<[1], [0], [0], [1], [0, 0, 1, 1], [], []>} : vector<16x32xf32>, vector<32x8xf32>, vector<16x8xf32> -> vector<16x8xf32>
    %43 = vector.extract_strided_slice %29 {offsets = [0, 3, 0, 0], sizes = [1, 1, 32, 8], strides = [1, 1, 1, 1]} : vector<3x4x32x8xf32> to vector<1x1x32x8xf32>
    %44 = vector.shape_cast %43 : vector<1x1x32x8xf32> to vector<32x8xf32>
    %cst_17 = arith.constant dense<0.000000e+00> : vector<16x8xf32>
    %45 = tpu.matmul %28, %44, %cst_17 {dimension_numbers = #tpu.dot_dimension_numbers<[1], [0], [0], [1], [0, 0, 1, 1], [], []>} : vector<16x32xf32>, vector<32x8xf32>, vector<16x8xf32> -> vector<16x8xf32>
    %46 = vector.extract_strided_slice %29 {offsets = [1, 0, 0, 0], sizes = [1, 1, 32, 8], strides = [1, 1, 1, 1]} : vector<3x4x32x8xf32> to vector<1x1x32x8xf32>
    %47 = vector.shape_cast %46 : vector<1x1x32x8xf32> to vector<32x8xf32>
    %cst_18 = arith.constant dense<0.000000e+00> : vector<16x8xf32>
    %48 = tpu.matmul %28, %47, %cst_18 {dimension_numbers = #tpu.dot_dimension_numbers<[1], [0], [0], [1], [0, 0, 1, 1], [], []>} : vector<16x32xf32>, vector<32x8xf32>, vector<16x8xf32> -> vector<16x8xf32>
    %49 = vector.extract_strided_slice %29 {offsets = [1, 1, 0, 0], sizes = [1, 1, 32, 8], strides = [1, 1, 1, 1]} : vector<3x4x32x8xf32> to vector<1x1x32x8xf32>
    %50 = vector.shape_cast %49 : vector<1x1x32x8xf32> to vector<32x8xf32>
    %cst_19 = arith.constant dense<0.000000e+00> : vector<16x8xf32>
    %51 = tpu.matmul %28, %50, %cst_19 {dimension_numbers = #tpu.dot_dimension_numbers<[1], [0], [0], [1], [0, 0, 1, 1], [], []>} : vector<16x32xf32>, vector<32x8xf32>, vector<16x8xf32> -> vector<16x8xf32>
    %52 = vector.extract_strided_slice %29 {offsets = [1, 2, 0, 0], sizes = [1, 1, 32, 8], strides = [1, 1, 1, 1]} : vector<3x4x32x8xf32> to vector<1x1x32x8xf32>
    %53 = vector.shape_cast %52 : vector<1x1x32x8xf32> to vector<32x8xf32>
    %cst_20 = arith.constant dense<0.000000e+00> : vector<16x8xf32>
    %54 = tpu.matmul %28, %53, %cst_20 {dimension_numbers = #tpu.dot_dimension_numbers<[1], [0], [0], [1], [0, 0, 1, 1], [], []>} : vector<16x32xf32>, vector<32x8xf32>, vector<16x8xf32> -> vector<16x8xf32>
    %55 = vector.extract_strided_slice %29 {offsets = [1, 3, 0, 0], sizes = [1, 1, 32, 8], strides = [1, 1, 1, 1]} : vector<3x4x32x8xf32> to vector<1x1x32x8xf32>
    %56 = vector.shape_cast %55 : vector<1x1x32x8xf32> to vector<32x8xf32>
    %cst_21 = arith.constant dense<0.000000e+00> : vector<16x8xf32>
    %57 = tpu.matmul %28, %56, %cst_21 {dimension_numbers = #tpu.dot_dimension_numbers<[1], [0], [0], [1], [0, 0, 1, 1], [], []>} : vector<16x32xf32>, vector<32x8xf32>, vector<16x8xf32> -> vector<16x8xf32>
    %58 = vector.extract_strided_slice %29 {offsets = [2, 0, 0, 0], sizes = [1, 1, 32, 8], strides = [1, 1, 1, 1]} : vector<3x4x32x8xf32> to vector<1x1x32x8xf32>
    %59 = vector.shape_cast %58 : vector<1x1x32x8xf32> to vector<32x8xf32>
    %cst_22 = arith.constant dense<0.000000e+00> : vector<16x8xf32>
    %60 = tpu.matmul %28, %59, %cst_22 {dimension_numbers = #tpu.dot_dimension_numbers<[1], [0], [0], [1], [0, 0, 1, 1], [], []>} : vector<16x32xf32>, vector<32x8xf32>, vector<16x8xf32> -> vector<16x8xf32>
    %61 = vector.extract_strided_slice %29 {offsets = [2, 1, 0, 0], sizes = [1, 1, 32, 8], strides = [1, 1, 1, 1]} : vector<3x4x32x8xf32> to vector<1x1x32x8xf32>
    %62 = vector.shape_cast %61 : vector<1x1x32x8xf32> to vector<32x8xf32>
    %cst_23 = arith.constant dense<0.000000e+00> : vector<16x8xf32>
    %63 = tpu.matmul %28, %62, %cst_23 {dimension_numbers = #tpu.dot_dimension_numbers<[1], [0], [0], [1], [0, 0, 1, 1], [], []>} : vector<16x32xf32>, vector<32x8xf32>, vector<16x8xf32> -> vector<16x8xf32>
    %64 = vector.extract_strided_slice %29 {offsets = [2, 2, 0, 0], sizes = [1, 1, 32, 8], strides = [1, 1, 1, 1]} : vector<3x4x32x8xf32> to vector<1x1x32x8xf32>
    %65 = vector.shape_cast %64 : vector<1x1x32x8xf32> to vector<32x8xf32>
    %cst_24 = arith.constant dense<0.000000e+00> : vector<16x8xf32>
    %66 = tpu.matmul %28, %65, %cst_24 {dimension_numbers = #tpu.dot_dimension_numbers<[1], [0], [0], [1], [0, 0, 1, 1], [], []>} : vector<16x32xf32>, vector<32x8xf32>, vector<16x8xf32> -> vector<16x8xf32>
    %67 = vector.extract_strided_slice %29 {offsets = [2, 3, 0, 0], sizes = [1, 1, 32, 8], strides = [1, 1, 1, 1]} : vector<3x4x32x8xf32> to vector<1x1x32x8xf32>
    %68 = vector.shape_cast %67 : vector<1x1x32x8xf32> to vector<32x8xf32>
    %cst_25 = arith.constant dense<0.000000e+00> : vector<16x8xf32>
    %69 = tpu.matmul %28, %68, %cst_25 {dimension_numbers = #tpu.dot_dimension_numbers<[1], [0], [0], [1], [0, 0, 1, 1], [], []>} : vector<16x32xf32>, vector<32x8xf32>, vector<16x8xf32> -> vector<16x8xf32>
    %cst_26 = arith.constant 0.000000e+00 : f32
    %70 = vector.broadcast %cst_26 : f32 to vector<8x32xf32>
    %71 = vector.extract_strided_slice %36 {offsets = [0, 0], sizes = [8, 8], strides = [1, 1]} : vector<16x8xf32> to vector<8x8xf32>
    %72 = vector.extract_strided_slice %48 {offsets = [0, 0], sizes = [8, 8], strides = [1, 1]} : vector<16x8xf32> to vector<8x8xf32>
    %73 = vector.extract_strided_slice %60 {offsets = [0, 0], sizes = [8, 8], strides = [1, 1]} : vector<16x8xf32> to vector<8x8xf32>
    %cst_27 = arith.constant dense<0.000000e+00> : vector<8x8xf32>
    %74 = tpu.matmul %71, %72, %cst_27 {dimension_numbers = #tpu.dot_dimension_numbers<[1], [1], [0], [0], [0, 0, 1, 0], [], []>} : vector<8x8xf32>, vector<8x8xf32>, vector<8x8xf32> -> vector<8x8xf32>
    %cst_28 = arith.constant 0.353553385 : f32
    %75 = vector.broadcast %cst_28 : f32 to vector<8x8xf32>
    %76 = arith.mulf %74, %75 : vector<8x8xf32>
    %cst_29 = arith.constant -1.000000e+09 : f32
    %77 = vector.broadcast %cst_29 : f32 to vector<8x8xf32>
    %78 = arith.select %33, %77, %76 : vector<8x8xi1>, vector<8x8xf32>
    %cst_30 = arith.constant dense<0xFF800000> : vector<8xf32>
    %79 = vector.multi_reduction <maximumf>, %78, %cst_30 [1] : vector<8x8xf32> to vector<8xf32>
    %80 = vector.shape_cast %79 : vector<8xf32> to vector<8x1xf32>
    %81 = vector.broadcast %80 : vector<8x1xf32> to vector<8x8xf32>
    %82 = arith.subf %78, %81 : vector<8x8xf32>
    %83 = math.exp %82 : vector<8x8xf32>
    %cst_31 = arith.constant dense<0.000000e+00> : vector<8xf32>
    %84 = vector.multi_reduction <add>, %83, %cst_31 [1] : vector<8x8xf32> to vector<8xf32>
    %85 = vector.shape_cast %84 : vector<8xf32> to vector<8x1xf32>
    %86 = tpu.reciprocal %85 {approx = true} : vector<8x1xf32> -> vector<8x1xf32>
    %87 = arith.mulf %85, %86 : vector<8x1xf32>
    %cst_32 = arith.constant 2.000000e+00 : f32
    %88 = vector.broadcast %cst_32 : f32 to vector<8x1xf32>
    %89 = arith.subf %88, %87 : vector<8x1xf32>
    %90 = arith.mulf %86, %89 : vector<8x1xf32>
    %91 = vector.broadcast %90 : vector<8x1xf32> to vector<8x8xf32>
    %92 = arith.mulf %83, %91 : vector<8x8xf32>
    %cst_33 = arith.constant dense<0.000000e+00> : vector<8x8xf32>
    %93 = tpu.matmul %92, %73, %cst_33 {dimension_numbers = #tpu.dot_dimension_numbers<[1], [0], [0], [1], [0, 0, 1, 1], [], []>} : vector<8x8xf32>, vector<8x8xf32>, vector<8x8xf32> -> vector<8x8xf32>
    %94 = vector.extract_strided_slice %30 {offsets = [0, 0, 0], sizes = [1, 8, 32], strides = [1, 1, 1]} : vector<4x8x32xf32> to vector<1x8x32xf32>
    %95 = vector.shape_cast %94 : vector<1x8x32xf32> to vector<8x32xf32>
    %cst_34 = arith.constant dense<0.000000e+00> : vector<8x32xf32>
    %96 = tpu.matmul %93, %95, %cst_34 {dimension_numbers = #tpu.dot_dimension_numbers<[1], [0], [0], [1], [0, 0, 1, 1], [], []>} : vector<8x8xf32>, vector<8x32xf32>, vector<8x32xf32> -> vector<8x32xf32>
    %97 = arith.addf %70, %96 : vector<8x32xf32>
    %98 = vector.extract_strided_slice %39 {offsets = [0, 0], sizes = [8, 8], strides = [1, 1]} : vector<16x8xf32> to vector<8x8xf32>
    %99 = vector.extract_strided_slice %51 {offsets = [0, 0], sizes = [8, 8], strides = [1, 1]} : vector<16x8xf32> to vector<8x8xf32>
    %100 = vector.extract_strided_slice %63 {offsets = [0, 0], sizes = [8, 8], strides = [1, 1]} : vector<16x8xf32> to vector<8x8xf32>
    %cst_35 = arith.constant dense<0.000000e+00> : vector<8x8xf32>
    %101 = tpu.matmul %98, %99, %cst_35 {dimension_numbers = #tpu.dot_dimension_numbers<[1], [1], [0], [0], [0, 0, 1, 0], [], []>} : vector<8x8xf32>, vector<8x8xf32>, vector<8x8xf32> -> vector<8x8xf32>
    %cst_36 = arith.constant 0.353553385 : f32
    %102 = vector.broadcast %cst_36 : f32 to vector<8x8xf32>
    %103 = arith.mulf %101, %102 : vector<8x8xf32>
    %cst_37 = arith.constant -1.000000e+09 : f32
    %104 = vector.broadcast %cst_37 : f32 to vector<8x8xf32>
    %105 = arith.select %33, %104, %103 : vector<8x8xi1>, vector<8x8xf32>
    %cst_38 = arith.constant dense<0xFF800000> : vector<8xf32>
    %106 = vector.multi_reduction <maximumf>, %105, %cst_38 [1] : vector<8x8xf32> to vector<8xf32>
    %107 = vector.shape_cast %106 : vector<8xf32> to vector<8x1xf32>
    %108 = vector.broadcast %107 : vector<8x1xf32> to vector<8x8xf32>
    %109 = arith.subf %105, %108 : vector<8x8xf32>
    %110 = math.exp %109 : vector<8x8xf32>
    %cst_39 = arith.constant dense<0.000000e+00> : vector<8xf32>
    %111 = vector.multi_reduction <add>, %110, %cst_39 [1] : vector<8x8xf32> to vector<8xf32>
    %112 = vector.shape_cast %111 : vector<8xf32> to vector<8x1xf32>
    %113 = tpu.reciprocal %112 {approx = true} : vector<8x1xf32> -> vector<8x1xf32>
    %114 = arith.mulf %112, %113 : vector<8x1xf32>
    %cst_40 = arith.constant 2.000000e+00 : f32
    %115 = vector.broadcast %cst_40 : f32 to vector<8x1xf32>
    %116 = arith.subf %115, %114 : vector<8x1xf32>
    %117 = arith.mulf %113, %116 : vector<8x1xf32>
    %118 = vector.broadcast %117 : vector<8x1xf32> to vector<8x8xf32>
    %119 = arith.mulf %110, %118 : vector<8x8xf32>
    %cst_41 = arith.constant dense<0.000000e+00> : vector<8x8xf32>
    %120 = tpu.matmul %119, %100, %cst_41 {dimension_numbers = #tpu.dot_dimension_numbers<[1], [0], [0], [1], [0, 0, 1, 1], [], []>} : vector<8x8xf32>, vector<8x8xf32>, vector<8x8xf32> -> vector<8x8xf32>
    %121 = vector.extract_strided_slice %30 {offsets = [1, 0, 0], sizes = [1, 8, 32], strides = [1, 1, 1]} : vector<4x8x32xf32> to vector<1x8x32xf32>
    %122 = vector.shape_cast %121 : vector<1x8x32xf32> to vector<8x32xf32>
    %cst_42 = arith.constant dense<0.000000e+00> : vector<8x32xf32>
    %123 = tpu.matmul %120, %122, %cst_42 {dimension_numbers = #tpu.dot_dimension_numbers<[1], [0], [0], [1], [0, 0, 1, 1], [], []>} : vector<8x8xf32>, vector<8x32xf32>, vector<8x32xf32> -> vector<8x32xf32>
    %124 = arith.addf %97, %123 : vector<8x32xf32>
    %125 = vector.extract_strided_slice %42 {offsets = [0, 0], sizes = [8, 8], strides = [1, 1]} : vector<16x8xf32> to vector<8x8xf32>
    %126 = vector.extract_strided_slice %54 {offsets = [0, 0], sizes = [8, 8], strides = [1, 1]} : vector<16x8xf32> to vector<8x8xf32>
    %127 = vector.extract_strided_slice %66 {offsets = [0, 0], sizes = [8, 8], strides = [1, 1]} : vector<16x8xf32> to vector<8x8xf32>
    %cst_43 = arith.constant dense<0.000000e+00> : vector<8x8xf32>
    %128 = tpu.matmul %125, %126, %cst_43 {dimension_numbers = #tpu.dot_dimension_numbers<[1], [1], [0], [0], [0, 0, 1, 0], [], []>} : vector<8x8xf32>, vector<8x8xf32>, vector<8x8xf32> -> vector<8x8xf32>
    %cst_44 = arith.constant 0.353553385 : f32
    %129 = vector.broadcast %cst_44 : f32 to vector<8x8xf32>
    %130 = arith.mulf %128, %129 : vector<8x8xf32>
    %cst_45 = arith.constant -1.000000e+09 : f32
    %131 = vector.broadcast %cst_45 : f32 to vector<8x8xf32>
    %132 = arith.select %33, %131, %130 : vector<8x8xi1>, vector<8x8xf32>
    %cst_46 = arith.constant dense<0xFF800000> : vector<8xf32>
    %133 = vector.multi_reduction <maximumf>, %132, %cst_46 [1] : vector<8x8xf32> to vector<8xf32>
    %134 = vector.shape_cast %133 : vector<8xf32> to vector<8x1xf32>
    %135 = vector.broadcast %134 : vector<8x1xf32> to vector<8x8xf32>
    %136 = arith.subf %132, %135 : vector<8x8xf32>
    %137 = math.exp %136 : vector<8x8xf32>
    %cst_47 = arith.constant dense<0.000000e+00> : vector<8xf32>
    %138 = vector.multi_reduction <add>, %137, %cst_47 [1] : vector<8x8xf32> to vector<8xf32>
    %139 = vector.shape_cast %138 : vector<8xf32> to vector<8x1xf32>
    %140 = tpu.reciprocal %139 {approx = true} : vector<8x1xf32> -> vector<8x1xf32>
    %141 = arith.mulf %139, %140 : vector<8x1xf32>
    %cst_48 = arith.constant 2.000000e+00 : f32
    %142 = vector.broadcast %cst_48 : f32 to vector<8x1xf32>
    %143 = arith.subf %142, %141 : vector<8x1xf32>
    %144 = arith.mulf %140, %143 : vector<8x1xf32>
    %145 = vector.broadcast %144 : vector<8x1xf32> to vector<8x8xf32>
    %146 = arith.mulf %137, %145 : vector<8x8xf32>
    %cst_49 = arith.constant dense<0.000000e+00> : vector<8x8xf32>
    %147 = tpu.matmul %146, %127, %cst_49 {dimension_numbers = #tpu.dot_dimension_numbers<[1], [0], [0], [1], [0, 0, 1, 1], [], []>} : vector<8x8xf32>, vector<8x8xf32>, vector<8x8xf32> -> vector<8x8xf32>
    %148 = vector.extract_strided_slice %30 {offsets = [2, 0, 0], sizes = [1, 8, 32], strides = [1, 1, 1]} : vector<4x8x32xf32> to vector<1x8x32xf32>
    %149 = vector.shape_cast %148 : vector<1x8x32xf32> to vector<8x32xf32>
    %cst_50 = arith.constant dense<0.000000e+00> : vector<8x32xf32>
    %150 = tpu.matmul %147, %149, %cst_50 {dimension_numbers = #tpu.dot_dimension_numbers<[1], [0], [0], [1], [0, 0, 1, 1], [], []>} : vector<8x8xf32>, vector<8x32xf32>, vector<8x32xf32> -> vector<8x32xf32>
    %151 = arith.addf %124, %150 : vector<8x32xf32>
    %152 = vector.extract_strided_slice %45 {offsets = [0, 0], sizes = [8, 8], strides = [1, 1]} : vector<16x8xf32> to vector<8x8xf32>
    %153 = vector.extract_strided_slice %57 {offsets = [0, 0], sizes = [8, 8], strides = [1, 1]} : vector<16x8xf32> to vector<8x8xf32>
    %154 = vector.extract_strided_slice %69 {offsets = [0, 0], sizes = [8, 8], strides = [1, 1]} : vector<16x8xf32> to vector<8x8xf32>
    %cst_51 = arith.constant dense<0.000000e+00> : vector<8x8xf32>
    %155 = tpu.matmul %152, %153, %cst_51 {dimension_numbers = #tpu.dot_dimension_numbers<[1], [1], [0], [0], [0, 0, 1, 0], [], []>} : vector<8x8xf32>, vector<8x8xf32>, vector<8x8xf32> -> vector<8x8xf32>
    %cst_52 = arith.constant 0.353553385 : f32
    %156 = vector.broadcast %cst_52 : f32 to vector<8x8xf32>
    %157 = arith.mulf %155, %156 : vector<8x8xf32>
    %cst_53 = arith.constant -1.000000e+09 : f32
    %158 = vector.broadcast %cst_53 : f32 to vector<8x8xf32>
    %159 = arith.select %33, %158, %157 : vector<8x8xi1>, vector<8x8xf32>
    %cst_54 = arith.constant dense<0xFF800000> : vector<8xf32>
    %160 = vector.multi_reduction <maximumf>, %159, %cst_54 [1] : vector<8x8xf32> to vector<8xf32>
    %161 = vector.shape_cast %160 : vector<8xf32> to vector<8x1xf32>
    %162 = vector.broadcast %161 : vector<8x1xf32> to vector<8x8xf32>
    %163 = arith.subf %159, %162 : vector<8x8xf32>
    %164 = math.exp %163 : vector<8x8xf32>
    %cst_55 = arith.constant dense<0.000000e+00> : vector<8xf32>
    %165 = vector.multi_reduction <add>, %164, %cst_55 [1] : vector<8x8xf32> to vector<8xf32>
    %166 = vector.shape_cast %165 : vector<8xf32> to vector<8x1xf32>
    %167 = tpu.reciprocal %166 {approx = true} : vector<8x1xf32> -> vector<8x1xf32>
    %168 = arith.mulf %166, %167 : vector<8x1xf32>
    %cst_56 = arith.constant 2.000000e+00 : f32
    %169 = vector.broadcast %cst_56 : f32 to vector<8x1xf32>
    %170 = arith.subf %169, %168 : vector<8x1xf32>
    %171 = arith.mulf %167, %170 : vector<8x1xf32>
    %172 = vector.broadcast %171 : vector<8x1xf32> to vector<8x8xf32>
    %173 = arith.mulf %164, %172 : vector<8x8xf32>
    %cst_57 = arith.constant dense<0.000000e+00> : vector<8x8xf32>
    %174 = tpu.matmul %173, %154, %cst_57 {dimension_numbers = #tpu.dot_dimension_numbers<[1], [0], [0], [1], [0, 0, 1, 1], [], []>} : vector<8x8xf32>, vector<8x8xf32>, vector<8x8xf32> -> vector<8x8xf32>
    %175 = vector.extract_strided_slice %30 {offsets = [3, 0, 0], sizes = [1, 8, 32], strides = [1, 1, 1]} : vector<4x8x32xf32> to vector<1x8x32xf32>
    %176 = vector.shape_cast %175 : vector<1x8x32xf32> to vector<8x32xf32>
    %cst_58 = arith.constant dense<0.000000e+00> : vector<8x32xf32>
    %177 = tpu.matmul %174, %176, %cst_58 {dimension_numbers = #tpu.dot_dimension_numbers<[1], [0], [0], [1], [0, 0, 1, 1], [], []>} : vector<8x8xf32>, vector<8x32xf32>, vector<8x32xf32> -> vector<8x32xf32>
    %178 = arith.addf %151, %177 : vector<8x32xf32>
    %cst_59 = arith.constant 0.000000e+00 : f32
    %179 = vector.broadcast %cst_59 : f32 to vector<8x32xf32>
    %180 = vector.extract_strided_slice %36 {offsets = [8, 0], sizes = [8, 8], strides = [1, 1]} : vector<16x8xf32> to vector<8x8xf32>
    %181 = vector.extract_strided_slice %48 {offsets = [8, 0], sizes = [8, 8], strides = [1, 1]} : vector<16x8xf32> to vector<8x8xf32>
    %182 = vector.extract_strided_slice %60 {offsets = [8, 0], sizes = [8, 8], strides = [1, 1]} : vector<16x8xf32> to vector<8x8xf32>
    %cst_60 = arith.constant dense<0.000000e+00> : vector<8x8xf32>
    %183 = tpu.matmul %180, %181, %cst_60 {dimension_numbers = #tpu.dot_dimension_numbers<[1], [1], [0], [0], [0, 0, 1, 0], [], []>} : vector<8x8xf32>, vector<8x8xf32>, vector<8x8xf32> -> vector<8x8xf32>
    %cst_61 = arith.constant 0.353553385 : f32
    %184 = vector.broadcast %cst_61 : f32 to vector<8x8xf32>
    %185 = arith.mulf %183, %184 : vector<8x8xf32>
    %cst_62 = arith.constant -1.000000e+09 : f32
    %186 = vector.broadcast %cst_62 : f32 to vector<8x8xf32>
    %187 = arith.select %33, %186, %185 : vector<8x8xi1>, vector<8x8xf32>
    %cst_63 = arith.constant dense<0xFF800000> : vector<8xf32>
    %188 = vector.multi_reduction <maximumf>, %187, %cst_63 [1] : vector<8x8xf32> to vector<8xf32>
    %189 = vector.shape_cast %188 : vector<8xf32> to vector<8x1xf32>
    %190 = vector.broadcast %189 : vector<8x1xf32> to vector<8x8xf32>
    %191 = arith.subf %187, %190 : vector<8x8xf32>
    %192 = math.exp %191 : vector<8x8xf32>
    %cst_64 = arith.constant dense<0.000000e+00> : vector<8xf32>
    %193 = vector.multi_reduction <add>, %192, %cst_64 [1] : vector<8x8xf32> to vector<8xf32>
    %194 = vector.shape_cast %193 : vector<8xf32> to vector<8x1xf32>
    %195 = tpu.reciprocal %194 {approx = true} : vector<8x1xf32> -> vector<8x1xf32>
    %196 = arith.mulf %194, %195 : vector<8x1xf32>
    %cst_65 = arith.constant 2.000000e+00 : f32
    %197 = vector.broadcast %cst_65 : f32 to vector<8x1xf32>
    %198 = arith.subf %197, %196 : vector<8x1xf32>
    %199 = arith.mulf %195, %198 : vector<8x1xf32>
    %200 = vector.broadcast %199 : vector<8x1xf32> to vector<8x8xf32>
    %201 = arith.mulf %192, %200 : vector<8x8xf32>
    %cst_66 = arith.constant dense<0.000000e+00> : vector<8x8xf32>
    %202 = tpu.matmul %201, %182, %cst_66 {dimension_numbers = #tpu.dot_dimension_numbers<[1], [0], [0], [1], [0, 0, 1, 1], [], []>} : vector<8x8xf32>, vector<8x8xf32>, vector<8x8xf32> -> vector<8x8xf32>
    %203 = vector.extract_strided_slice %30 {offsets = [0, 0, 0], sizes = [1, 8, 32], strides = [1, 1, 1]} : vector<4x8x32xf32> to vector<1x8x32xf32>
    %204 = vector.shape_cast %203 : vector<1x8x32xf32> to vector<8x32xf32>
    %cst_67 = arith.constant dense<0.000000e+00> : vector<8x32xf32>
    %205 = tpu.matmul %202, %204, %cst_67 {dimension_numbers = #tpu.dot_dimension_numbers<[1], [0], [0], [1], [0, 0, 1, 1], [], []>} : vector<8x8xf32>, vector<8x32xf32>, vector<8x32xf32> -> vector<8x32xf32>
    %206 = arith.addf %179, %205 : vector<8x32xf32>
    %207 = vector.extract_strided_slice %39 {offsets = [8, 0], sizes = [8, 8], strides = [1, 1]} : vector<16x8xf32> to vector<8x8xf32>
    %208 = vector.extract_strided_slice %51 {offsets = [8, 0], sizes = [8, 8], strides = [1, 1]} : vector<16x8xf32> to vector<8x8xf32>
    %209 = vector.extract_strided_slice %63 {offsets = [8, 0], sizes = [8, 8], strides = [1, 1]} : vector<16x8xf32> to vector<8x8xf32>
    %cst_68 = arith.constant dense<0.000000e+00> : vector<8x8xf32>
    %210 = tpu.matmul %207, %208, %cst_68 {dimension_numbers = #tpu.dot_dimension_numbers<[1], [1], [0], [0], [0, 0, 1, 0], [], []>} : vector<8x8xf32>, vector<8x8xf32>, vector<8x8xf32> -> vector<8x8xf32>
    %cst_69 = arith.constant 0.353553385 : f32
    %211 = vector.broadcast %cst_69 : f32 to vector<8x8xf32>
    %212 = arith.mulf %210, %211 : vector<8x8xf32>
    %cst_70 = arith.constant -1.000000e+09 : f32
    %213 = vector.broadcast %cst_70 : f32 to vector<8x8xf32>
    %214 = arith.select %33, %213, %212 : vector<8x8xi1>, vector<8x8xf32>
    %cst_71 = arith.constant dense<0xFF800000> : vector<8xf32>
    %215 = vector.multi_reduction <maximumf>, %214, %cst_71 [1] : vector<8x8xf32> to vector<8xf32>
    %216 = vector.shape_cast %215 : vector<8xf32> to vector<8x1xf32>
    %217 = vector.broadcast %216 : vector<8x1xf32> to vector<8x8xf32>
    %218 = arith.subf %214, %217 : vector<8x8xf32>
    %219 = math.exp %218 : vector<8x8xf32>
    %cst_72 = arith.constant dense<0.000000e+00> : vector<8xf32>
    %220 = vector.multi_reduction <add>, %219, %cst_72 [1] : vector<8x8xf32> to vector<8xf32>
    %221 = vector.shape_cast %220 : vector<8xf32> to vector<8x1xf32>
    %222 = tpu.reciprocal %221 {approx = true} : vector<8x1xf32> -> vector<8x1xf32>
    %223 = arith.mulf %221, %222 : vector<8x1xf32>
    %cst_73 = arith.constant 2.000000e+00 : f32
    %224 = vector.broadcast %cst_73 : f32 to vector<8x1xf32>
    %225 = arith.subf %224, %223 : vector<8x1xf32>
    %226 = arith.mulf %222, %225 : vector<8x1xf32>
    %227 = vector.broadcast %226 : vector<8x1xf32> to vector<8x8xf32>
    %228 = arith.mulf %219, %227 : vector<8x8xf32>
    %cst_74 = arith.constant dense<0.000000e+00> : vector<8x8xf32>
    %229 = tpu.matmul %228, %209, %cst_74 {dimension_numbers = #tpu.dot_dimension_numbers<[1], [0], [0], [1], [0, 0, 1, 1], [], []>} : vector<8x8xf32>, vector<8x8xf32>, vector<8x8xf32> -> vector<8x8xf32>
    %230 = vector.extract_strided_slice %30 {offsets = [1, 0, 0], sizes = [1, 8, 32], strides = [1, 1, 1]} : vector<4x8x32xf32> to vector<1x8x32xf32>
    %231 = vector.shape_cast %230 : vector<1x8x32xf32> to vector<8x32xf32>
    %cst_75 = arith.constant dense<0.000000e+00> : vector<8x32xf32>
    %232 = tpu.matmul %229, %231, %cst_75 {dimension_numbers = #tpu.dot_dimension_numbers<[1], [0], [0], [1], [0, 0, 1, 1], [], []>} : vector<8x8xf32>, vector<8x32xf32>, vector<8x32xf32> -> vector<8x32xf32>
    %233 = arith.addf %206, %232 : vector<8x32xf32>
    %234 = vector.extract_strided_slice %42 {offsets = [8, 0], sizes = [8, 8], strides = [1, 1]} : vector<16x8xf32> to vector<8x8xf32>
    %235 = vector.extract_strided_slice %54 {offsets = [8, 0], sizes = [8, 8], strides = [1, 1]} : vector<16x8xf32> to vector<8x8xf32>
    %236 = vector.extract_strided_slice %66 {offsets = [8, 0], sizes = [8, 8], strides = [1, 1]} : vector<16x8xf32> to vector<8x8xf32>
    %cst_76 = arith.constant dense<0.000000e+00> : vector<8x8xf32>
    %237 = tpu.matmul %234, %235, %cst_76 {dimension_numbers = #tpu.dot_dimension_numbers<[1], [1], [0], [0], [0, 0, 1, 0], [], []>} : vector<8x8xf32>, vector<8x8xf32>, vector<8x8xf32> -> vector<8x8xf32>
    %cst_77 = arith.constant 0.353553385 : f32
    %238 = vector.broadcast %cst_77 : f32 to vector<8x8xf32>
    %239 = arith.mulf %237, %238 : vector<8x8xf32>
    %cst_78 = arith.constant -1.000000e+09 : f32
    %240 = vector.broadcast %cst_78 : f32 to vector<8x8xf32>
    %241 = arith.select %33, %240, %239 : vector<8x8xi1>, vector<8x8xf32>
    %cst_79 = arith.constant dense<0xFF800000> : vector<8xf32>
    %242 = vector.multi_reduction <maximumf>, %241, %cst_79 [1] : vector<8x8xf32> to vector<8xf32>
    %243 = vector.shape_cast %242 : vector<8xf32> to vector<8x1xf32>
    %244 = vector.broadcast %243 : vector<8x1xf32> to vector<8x8xf32>
    %245 = arith.subf %241, %244 : vector<8x8xf32>
    %246 = math.exp %245 : vector<8x8xf32>
    %cst_80 = arith.constant dense<0.000000e+00> : vector<8xf32>
    %247 = vector.multi_reduction <add>, %246, %cst_80 [1] : vector<8x8xf32> to vector<8xf32>
    %248 = vector.shape_cast %247 : vector<8xf32> to vector<8x1xf32>
    %249 = tpu.reciprocal %248 {approx = true} : vector<8x1xf32> -> vector<8x1xf32>
    %250 = arith.mulf %248, %249 : vector<8x1xf32>
    %cst_81 = arith.constant 2.000000e+00 : f32
    %251 = vector.broadcast %cst_81 : f32 to vector<8x1xf32>
    %252 = arith.subf %251, %250 : vector<8x1xf32>
    %253 = arith.mulf %249, %252 : vector<8x1xf32>
    %254 = vector.broadcast %253 : vector<8x1xf32> to vector<8x8xf32>
    %255 = arith.mulf %246, %254 : vector<8x8xf32>
    %cst_82 = arith.constant dense<0.000000e+00> : vector<8x8xf32>
    %256 = tpu.matmul %255, %236, %cst_82 {dimension_numbers = #tpu.dot_dimension_numbers<[1], [0], [0], [1], [0, 0, 1, 1], [], []>} : vector<8x8xf32>, vector<8x8xf32>, vector<8x8xf32> -> vector<8x8xf32>
    %257 = vector.extract_strided_slice %30 {offsets = [2, 0, 0], sizes = [1, 8, 32], strides = [1, 1, 1]} : vector<4x8x32xf32> to vector<1x8x32xf32>
    %258 = vector.shape_cast %257 : vector<1x8x32xf32> to vector<8x32xf32>
    %cst_83 = arith.constant dense<0.000000e+00> : vector<8x32xf32>
    %259 = tpu.matmul %256, %258, %cst_83 {dimension_numbers = #tpu.dot_dimension_numbers<[1], [0], [0], [1], [0, 0, 1, 1], [], []>} : vector<8x8xf32>, vector<8x32xf32>, vector<8x32xf32> -> vector<8x32xf32>
    %260 = arith.addf %233, %259 : vector<8x32xf32>
    %261 = vector.extract_strided_slice %45 {offsets = [8, 0], sizes = [8, 8], strides = [1, 1]} : vector<16x8xf32> to vector<8x8xf32>
    %262 = vector.extract_strided_slice %57 {offsets = [8, 0], sizes = [8, 8], strides = [1, 1]} : vector<16x8xf32> to vector<8x8xf32>
    %263 = vector.extract_strided_slice %69 {offsets = [8, 0], sizes = [8, 8], strides = [1, 1]} : vector<16x8xf32> to vector<8x8xf32>
    %cst_84 = arith.constant dense<0.000000e+00> : vector<8x8xf32>
    %264 = tpu.matmul %261, %262, %cst_84 {dimension_numbers = #tpu.dot_dimension_numbers<[1], [1], [0], [0], [0, 0, 1, 0], [], []>} : vector<8x8xf32>, vector<8x8xf32>, vector<8x8xf32> -> vector<8x8xf32>
    %cst_85 = arith.constant 0.353553385 : f32
    %265 = vector.broadcast %cst_85 : f32 to vector<8x8xf32>
    %266 = arith.mulf %264, %265 : vector<8x8xf32>
    %cst_86 = arith.constant -1.000000e+09 : f32
    %267 = vector.broadcast %cst_86 : f32 to vector<8x8xf32>
    %268 = arith.select %33, %267, %266 : vector<8x8xi1>, vector<8x8xf32>
    %cst_87 = arith.constant dense<0xFF800000> : vector<8xf32>
    %269 = vector.multi_reduction <maximumf>, %268, %cst_87 [1] : vector<8x8xf32> to vector<8xf32>
    %270 = vector.shape_cast %269 : vector<8xf32> to vector<8x1xf32>
    %271 = vector.broadcast %270 : vector<8x1xf32> to vector<8x8xf32>
    %272 = arith.subf %268, %271 : vector<8x8xf32>
    %273 = math.exp %272 : vector<8x8xf32>
    %cst_88 = arith.constant dense<0.000000e+00> : vector<8xf32>
    %274 = vector.multi_reduction <add>, %273, %cst_88 [1] : vector<8x8xf32> to vector<8xf32>
    %275 = vector.shape_cast %274 : vector<8xf32> to vector<8x1xf32>
    %276 = tpu.reciprocal %275 {approx = true} : vector<8x1xf32> -> vector<8x1xf32>
    %277 = arith.mulf %275, %276 : vector<8x1xf32>
    %cst_89 = arith.constant 2.000000e+00 : f32
    %278 = vector.broadcast %cst_89 : f32 to vector<8x1xf32>
    %279 = arith.subf %278, %277 : vector<8x1xf32>
    %280 = arith.mulf %276, %279 : vector<8x1xf32>
    %281 = vector.broadcast %280 : vector<8x1xf32> to vector<8x8xf32>
    %282 = arith.mulf %273, %281 : vector<8x8xf32>
    %cst_90 = arith.constant dense<0.000000e+00> : vector<8x8xf32>
    %283 = tpu.matmul %282, %263, %cst_90 {dimension_numbers = #tpu.dot_dimension_numbers<[1], [0], [0], [1], [0, 0, 1, 1], [], []>} : vector<8x8xf32>, vector<8x8xf32>, vector<8x8xf32> -> vector<8x8xf32>
    %284 = vector.extract_strided_slice %30 {offsets = [3, 0, 0], sizes = [1, 8, 32], strides = [1, 1, 1]} : vector<4x8x32xf32> to vector<1x8x32xf32>
    %285 = vector.shape_cast %284 : vector<1x8x32xf32> to vector<8x32xf32>
    %cst_91 = arith.constant dense<0.000000e+00> : vector<8x32xf32>
    %286 = tpu.matmul %283, %285, %cst_91 {dimension_numbers = #tpu.dot_dimension_numbers<[1], [0], [0], [1], [0, 0, 1, 1], [], []>} : vector<8x8xf32>, vector<8x32xf32>, vector<8x32xf32> -> vector<8x32xf32>
    %287 = arith.addf %260, %286 : vector<8x32xf32>
    %288 = tpu.concatenate %178, %287 in 0 : vector<8x32xf32>, vector<8x32xf32> -> vector<16x32xf32>
    %289 = vector.broadcast %4 : vector<1x32xf32> to vector<16x32xf32>
    %290 = arith.addf %288, %289 : vector<16x32xf32>
    %291 = arith.addf %0, %290 : vector<16x32xf32>
    %cst_92 = arith.constant dense<0.000000e+00> : vector<16xf32>
    %292 = vector.multi_reduction <add>, %291, %cst_92 [1] : vector<16x32xf32> to vector<16xf32>
    %293 = vector.shape_cast %292 : vector<16xf32> to vector<16x1xf32>
    %cst_93 = arith.constant 3.200000e+01 : f32
    %294 = vector.broadcast %cst_93 : f32 to vector<16x1xf32>
    %295 = arith.divf %293, %294 : vector<16x1xf32>
    %296 = vector.broadcast %295 : vector<16x1xf32> to vector<16x32xf32>
    %297 = arith.subf %291, %296 : vector<16x32xf32>
    %298 = arith.mulf %297, %297 : vector<16x32xf32>
    %cst_94 = arith.constant dense<0.000000e+00> : vector<16xf32>
    %299 = vector.multi_reduction <add>, %298, %cst_94 [1] : vector<16x32xf32> to vector<16xf32>
    %300 = vector.shape_cast %299 : vector<16xf32> to vector<16x1xf32>
    %cst_95 = arith.constant 3.200000e+01 : f32
    %301 = vector.broadcast %cst_95 : f32 to vector<16x1xf32>
    %302 = arith.divf %300, %301 : vector<16x1xf32>
    %cst_96 = arith.constant 9.99999974E-6 : f32
    %303 = vector.broadcast %cst_96 : f32 to vector<16x1xf32>
    %304 = arith.addf %302, %303 : vector<16x1xf32>
    %305 = math.rsqrt %304 : vector<16x1xf32>
    %306 = vector.broadcast %305 : vector<16x1xf32> to vector<16x32xf32>
    %307 = arith.mulf %297, %306 : vector<16x32xf32>
    %308 = vector.broadcast %5 : vector<1x32xf32> to vector<16x32xf32>
    %309 = arith.mulf %307, %308 : vector<16x32xf32>
    %310 = vector.broadcast %6 : vector<1x32xf32> to vector<16x32xf32>
    %311 = arith.addf %309, %310 : vector<16x32xf32>
    %c0_97 = arith.constant 0 : index
    %c0_98 = arith.constant 0 : index
    %312 = vector.load %arg5[%c0_97, %c0_98] : memref<32x128xf32, #tpu.memory_space<vmem>>, vector<32x128xf32>
    %cst_99 = arith.constant dense<0.000000e+00> : vector<16x128xf32>
    %313 = tpu.matmul %311, %312, %cst_99 {dimension_numbers = #tpu.dot_dimension_numbers<[1], [0], [0], [1], [0, 0, 1, 1], [], []>} : vector<16x32xf32>, vector<32x128xf32>, vector<16x128xf32> -> vector<16x128xf32>
    %314 = vector.broadcast %7 : vector<1x128xf32> to vector<16x128xf32>
    %315 = arith.addf %313, %314 : vector<16x128xf32>
    %cst_100 = arith.constant 5.000000e-01 : f32
    %316 = vector.broadcast %cst_100 : f32 to vector<16x128xf32>
    %317 = arith.mulf %316, %315 : vector<16x128xf32>
    %cst_101 = arith.constant 0.707106769 : f32
    %318 = vector.broadcast %cst_101 : f32 to vector<16x128xf32>
    %319 = arith.mulf %315, %318 : vector<16x128xf32>
    %320 = math.absf %319 : vector<16x128xf32>
    %cst_102 = arith.constant 0.327591091 : f32
    %321 = vector.broadcast %cst_102 : f32 to vector<16x128xf32>
    %322 = arith.mulf %321, %320 : vector<16x128xf32>
    %cst_103 = arith.constant 1.000000e+00 : f32
    %323 = vector.broadcast %cst_103 : f32 to vector<16x128xf32>
    %324 = arith.addf %323, %322 : vector<16x128xf32>
    %325 = tpu.reciprocal %324 {approx = true} : vector<16x128xf32> -> vector<16x128xf32>
    %326 = arith.mulf %324, %325 : vector<16x128xf32>
    %cst_104 = arith.constant 2.000000e+00 : f32
    %327 = vector.broadcast %cst_104 : f32 to vector<16x128xf32>
    %328 = arith.subf %327, %326 : vector<16x128xf32>
    %329 = arith.mulf %325, %328 : vector<16x128xf32>
    %cst_105 = arith.constant 1.06140542 : f32
    %330 = vector.broadcast %cst_105 : f32 to vector<16x128xf32>
    %331 = arith.mulf %330, %329 : vector<16x128xf32>
    %cst_106 = arith.constant -1.45315206 : f32
    %332 = vector.broadcast %cst_106 : f32 to vector<16x128xf32>
    %333 = arith.addf %331, %332 : vector<16x128xf32>
    %334 = arith.mulf %333, %329 : vector<16x128xf32>
    %cst_107 = arith.constant 1.42141378 : f32
    %335 = vector.broadcast %cst_107 : f32 to vector<16x128xf32>
    %336 = arith.addf %334, %335 : vector<16x128xf32>
    %337 = arith.mulf %336, %329 : vector<16x128xf32>
    %cst_108 = arith.constant -0.284496725 : f32
    %338 = vector.broadcast %cst_108 : f32 to vector<16x128xf32>
    %339 = arith.addf %337, %338 : vector<16x128xf32>
    %340 = arith.mulf %339, %329 : vector<16x128xf32>
    %cst_109 = arith.constant 0.254829586 : f32
    %341 = vector.broadcast %cst_109 : f32 to vector<16x128xf32>
    %342 = arith.addf %340, %341 : vector<16x128xf32>
    %343 = arith.mulf %342, %329 : vector<16x128xf32>
    %cst_110 = arith.constant 0.000000e+00 : f32
    %344 = vector.broadcast %cst_110 : f32 to vector<16x128xf32>
    %345 = arith.subf %344, %320 : vector<16x128xf32>
    %346 = arith.mulf %345, %320 : vector<16x128xf32>
    %347 = math.exp %346 : vector<16x128xf32>
    %348 = arith.mulf %343, %347 : vector<16x128xf32>
    %cst_111 = arith.constant 1.000000e+00 : f32
    %349 = vector.broadcast %cst_111 : f32 to vector<16x128xf32>
    %350 = arith.subf %349, %348 : vector<16x128xf32>
    %cst_112 = arith.constant 0.000000e+00 : f32
    %351 = vector.broadcast %cst_112 : f32 to vector<16x128xf32>
    %352 = arith.cmpf oge, %319, %351 : vector<16x128xf32>
    %cst_113 = arith.constant 0.000000e+00 : f32
    %353 = vector.broadcast %cst_113 : f32 to vector<16x128xf32>
    %354 = arith.subf %353, %350 : vector<16x128xf32>
    %355 = arith.select %352, %350, %354 : vector<16x128xi1>, vector<16x128xf32>
    %cst_114 = arith.constant 1.000000e+00 : f32
    %356 = vector.broadcast %cst_114 : f32 to vector<16x128xf32>
    %357 = arith.addf %356, %355 : vector<16x128xf32>
    %358 = arith.mulf %317, %357 : vector<16x128xf32>
    %c0_115 = arith.constant 0 : index
    %c0_116 = arith.constant 0 : index
    %359 = vector.load %arg6[%c0_115, %c0_116] : memref<128x32xf32, #tpu.memory_space<vmem>>, vector<128x32xf32>
    %cst_117 = arith.constant dense<0.000000e+00> : vector<16x32xf32>
    %360 = tpu.matmul %358, %359, %cst_117 {dimension_numbers = #tpu.dot_dimension_numbers<[1], [0], [0], [1], [0, 0, 1, 1], [], []>} : vector<16x128xf32>, vector<128x32xf32>, vector<16x32xf32> -> vector<16x32xf32>
    %361 = vector.broadcast %8 : vector<1x32xf32> to vector<16x32xf32>
    %362 = arith.addf %360, %361 : vector<16x32xf32>
    %363 = arith.addf %291, %362 : vector<16x32xf32>
    %c0_118 = arith.constant 0 : index
    %c0_119 = arith.constant 0 : index
    %364 = vector.load %arg7[%c0_118, %c0_119] : memref<16x32xf32, #tpu.memory_space<vmem>>, vector<16x32xf32>
    tpu.vector_store %arg7[%c0_118, %c0_119], %363 {strides = array<i32>} : memref<16x32xf32, #tpu.memory_space<vmem>>, vector<16x32xf32>,
    return
  }
  func.func @transform_0(%arg0: i32) -> (i32, i32) {
    %c0_i32 = arith.constant 0 : i32
    %c0_i32_0 = arith.constant 0 : i32
    %c0_i32_1 = arith.constant 0 : i32
    return %c0_i32, %c0_i32_0 : i32, i32
  }
  func.func @transform_1(%arg0: i32) -> (i32, i32) {
    %c0_i32 = arith.constant 0 : i32
    %c0_i32_0 = arith.constant 0 : i32
    %c0_i32_1 = arith.constant 0 : i32
    return %c0_i32, %c0_i32_0 : i32, i32
  }
  func.func @transform_2(%arg0: i32) -> (i32, i32, i32, i32) {
    %c0_i32 = arith.constant 0 : i32
    %c0_i32_0 = arith.constant 0 : i32
    %c0_i32_1 = arith.constant 0 : i32
    %c0_i32_2 = arith.constant 0 : i32
    %c0_i32_3 = arith.constant 0 : i32
    return %c0_i32, %c0_i32_0, %c0_i32_1, %c0_i32_2 : i32, i32, i32, i32
  }
  func.func @transform_3(%arg0: i32) -> (i32, i32, i32) {
    %c0_i32 = arith.constant 0 : i32
    %c0_i32_0 = arith.constant 0 : i32
    %c0_i32_1 = arith.constant 0 : i32
    %c0_i32_2 = arith.constant 0 : i32
    return %c0_i32, %c0_i32_0, %c0_i32_1 : i32, i32, i32
  }
  func.func @transform_4(%arg0: i32) -> (i32, i32) {
    %c0_i32 = arith.constant 0 : i32
    %c0_i32_0 = arith.constant 0 : i32
    %c0_i32_1 = arith.constant 0 : i32
    return %c0_i32, %c0_i32_0 : i32, i32
  }
  func.func @transform_5(%arg0: i32) -> (i32, i32) {
    %c0_i32 = arith.constant 0 : i32
    %c0_i32_0 = arith.constant 0 : i32
    %c0_i32_1 = arith.constant 0 : i32
    return %c0_i32, %c0_i32_0 : i32, i32
  }
  func.func @transform_6(%arg0: i32) -> (i32, i32) {
    %c0_i32 = arith.constant 0 : i32
    %c0_i32_0 = arith.constant 0 : i32
    %c0_i32_1 = arith.constant 0 : i32
    return %c0_i32, %c0_i32_0 : i32, i32
  }
}

</mosaic_0001>

<llo_original>
// kernel: tpu_custom_call.1
$region0: #{tpu_custom_call.1}
  #allocation0 [shape = 'u32[]', space=smem, size = 0x4, offset = 0x4, fixed_abs, tag = 'smem constant byte address 0x4 - core index']
  #allocation1 [shape = 'u32[144,128]{1,0:T(1,128)}', space=vmem, size = 0x12000, scoped, tag = 'internal scratch']
  %s0 = inlined_call_operand.vmem [shape: f32[16,32], index: 0, kind: input, shape index: {}]
  %s1 = inlined_call_operand.vmem [shape: f32[8,128], index: 1, kind: input, shape index: {}]
  %s2 = inlined_call_operand.vmem [shape: f32[3,4,32,8], index: 2, kind: input, shape index: {}]
  %s3 = inlined_call_operand.vmem [shape: f32[4,8,32], index: 3, kind: input, shape index: {}]
  %s4 = inlined_call_operand.vmem [shape: f32[32,128], index: 4, kind: input, shape index: {}]
  %s5 = inlined_call_operand.vmem [shape: f32[128,32], index: 5, kind: input, shape index: {}]
  %s6 = inlined_call_operand.hbm [shape: f32[16,32], index: 6, kind: output, shape index: {}]
  %s7 = sld [smem:[#allocation0]]
  $region34: #{tpu_custom_call.1} parent=0
    _
  %s9 = ssub.s32 1, %s7
  %s10 = scalar_select 0, %s9, %s7
  $region1: #{tpu_custom_call.1} parent=0
    #allocation2 [shape = 'u8[8192]{0}', space=vmem, size = 0x2000, scoped, tag = 'output window, operand 0, single buffered']
    #allocation3 [shape = 's32[1]{0}', space=sflag, size = 0x4, scoped, tag = 'scoped memory for tpu_custom_call.1']
    %11 = vsyncpa [#allocation3], 0
    // Predicated region
    $region2: #{tpu_custom_call.1} parent=1 // pred_check
      _
    $region3: #{tpu_custom_call.1} parent=1 // pred_check_branch
      %13 = sbr.rel (0) target = $region5
    $region4: #{tpu_custom_call.1} parent=1 // pred_region
      _
    $region5: #{tpu_custom_call.1} parent=1 // pred_fallthru
      _
    // Predicated region
    $region6: #{tpu_custom_call.1} parent=1 // pred_check
      _
    $region7: #{tpu_custom_call.1} parent=1 // pred_check_branch
      %15 = sbr.rel (0) target = $region9
    $region8: #{tpu_custom_call.1} parent=1 // pred_region
      _
    $region9: #{tpu_custom_call.1} parent=1 // pred_fallthru
      _
    // Predicated region
    $region10: #{tpu_custom_call.1} parent=1 // pred_check
      _
    $region11: #{tpu_custom_call.1} parent=1 // pred_check_branch
      %17 = sbr.rel (0) target = $region13
    $region12: #{tpu_custom_call.1} parent=1 // pred_region
      _
    $region13: #{tpu_custom_call.1} parent=1 // pred_fallthru
      _
    // Predicated region
    $region14: #{tpu_custom_call.1} parent=1 // pred_check
      _
    $region15: #{tpu_custom_call.1} parent=1 // pred_check_branch
      %19 = sbr.rel (0) target = $region17
    $region16: #{tpu_custom_call.1} parent=1 // pred_region
      _
    $region17: #{tpu_custom_call.1} parent=1 // pred_fallthru
      _
    // Predicated region
    $region18: #{tpu_custom_call.1} parent=1 // pred_check
      _
    $region19: #{tpu_custom_call.1} parent=1 // pred_check_branch
      %21 = sbr.rel (0) target = $region21
    $region20: #{tpu_custom_call.1} parent=1 // pred_region
      _
    $region21: #{tpu_custom_call.1} parent=1 // pred_fallthru
      _
    // Predicated region
    $region22: #{tpu_custom_call.1} parent=1 // pred_check
      _
    $region23: #{tpu_custom_call.1} parent=1 // pred_check_branch
      %23 = sbr.rel (0) target = $region25
    $region24: #{tpu_custom_call.1} parent=1 // pred_region
      _
    $region25: #{tpu_custom_call.1} parent=1 // pred_fallthru
      _
    %v24 = vld [vmem:[%s0] sm:$0xff]
    %v25 = vld [vmem:[%s0 + $0x8] sm:$0xff]
    %v26 = vld [vmem:[%s1] sm:$0xff]
    %vm27 = vcmask 261120
    %v28 = vsel %vm27, %v24, 0.0
    %29 = vadd.xlane.f32.xlu0 %v28
    %v30 = vpop.xlane.xlu0 %29
    %v31 = vsel %vm27, %v25, 0.0
    %32 = vadd.xlane.f32.xlu0 %v31
    %v33 = vpop.xlane.xlu0 %32
    %v34 = vrcp.pop 32.0
    %v35 = vmul.f32 %v30, %v34
    %v36 = vmul.f32 %v33, %v34
    %v37 = vsub.f32 %v24, %v35
    %v38 = vsub.f32 %v25, %v36
    %v39 = vmul.f32 %v37, %v37
    %v40 = vmul.f32 %v38, %v38
    %v41 = vsel %vm27, %v39, 0.0
    %42 = vadd.xlane.f32.xlu0 %v41
    %v43 = vpop.xlane.xlu0 %42
    %v44 = vsel %vm27, %v40, 0.0
    %45 = vadd.xlane.f32.xlu0 %v44
    %v46 = vpop.xlane.xlu0 %45
    %v47 = vmul.f32 %v43, %v34
    %v48 = vmul.f32 %v46, %v34
    %v49 = vadd.f32 %v47, 1e-05
    %v50 = vadd.f32 %v48, 1e-05
    %v51 = vrsqrt.pop %v49
    %v52 = vrsqrt.pop %v50
    %v53 = vmul.f32 %v37, %v51
    %v54 = vmul.f32 %v38, %v52
    %v55 = vlaneseq
    %v56 = vshrl.u32 %v55, 7
    %v57 = vsub.s32 0, %v56
    %v58 = vrot.slane %v26, %v57
    %v59 = vmul.f32 %v53, %v58
    %v60 = vmul.f32 %v54, %v58
    %v61 = vlaneseq
    %v62 = vshrl.u32 %v61, 7
    %v63 = vsub.s32 1, %v62
    %v64 = vrot.slane %v26, %v63
    %v65 = vadd.f32 %v59, %v64
    %v66 = vadd.f32 %v60, %v64
    %v67 = vld [vmem:[%s2] sm:$0xff]
    %v68 = vld [vmem:[%s2 + $0x8] sm:$0xff]
    %v69 = vld [vmem:[%s2 + $0x10] sm:$0xff]
    %v70 = vld [vmem:[%s2 + $0x18] sm:$0xff]
    %v71 = vld [vmem:[%s2 + $0x20] sm:$0xff]
    %v72 = vld [vmem:[%s2 + $0x28] sm:$0xff]
    %v73 = vld [vmem:[%s2 + $0x30] sm:$0xff]
    %v74 = vld [vmem:[%s2 + $0x38] sm:$0xff]
    %v75 = vld [vmem:[%s2 + $0x40] sm:$0xff]
    %v76 = vld [vmem:[%s2 + $0x48] sm:$0xff]
    %v77 = vld [vmem:[%s2 + $0x50] sm:$0xff]
    %v78 = vld [vmem:[%s2 + $0x58] sm:$0xff]
    %v79 = vld [vmem:[%s2 + $0x60] sm:$0xff]
    %v80 = vld [vmem:[%s2 + $0x68] sm:$0xff]
    %v81 = vld [vmem:[%s2 + $0x70] sm:$0xff]
    %v82 = vld [vmem:[%s2 + $0x78] sm:$0xff]
    %v83 = vld [vmem:[%s2 + $0x80] sm:$0xff]
    %v84 = vld [vmem:[%s2 + $0x88] sm:$0xff]
    %v85 = vld [vmem:[%s2 + $0x90] sm:$0xff]
    %v86 = vld [vmem:[%s2 + $0x98] sm:$0xff]
    %v87 = vld [vmem:[%s2 + $0xa0] sm:$0xff]
    %v88 = vld [vmem:[%s2 + $0xa8] sm:$0xff]
    %v89 = vld [vmem:[%s2 + $0xb0] sm:$0xff]
    %v90 = vld [vmem:[%s2 + $0xb8] sm:$0xff]
    %v91 = vld [vmem:[%s2 + $0xc0] sm:$0xff]
    %v92 = vld [vmem:[%s2 + $0xc8] sm:$0xff]
    %v93 = vld [vmem:[%s2 + $0xd0] sm:$0xff]
    %v94 = vld [vmem:[%s2 + $0xd8] sm:$0xff]
    %v95 = vld [vmem:[%s2 + $0xe0] sm:$0xff]
    %v96 = vld [vmem:[%s2 + $0xe8] sm:$0xff]
    %v97 = vld [vmem:[%s2 + $0xf0] sm:$0xff]
    %v98 = vld [vmem:[%s2 + $0xf8] sm:$0xff]
    %v99 = vld [vmem:[%s2 + $0x100] sm:$0xff]
    %v100 = vld [vmem:[%s2 + $0x108] sm:$0xff]
    %v101 = vld [vmem:[%s2 + $0x110] sm:$0xff]
    %v102 = vld [vmem:[%s2 + $0x118] sm:$0xff]
    %v103 = vld [vmem:[%s2 + $0x120] sm:$0xff]
    %v104 = vld [vmem:[%s2 + $0x128] sm:$0xff]
    %v105 = vld [vmem:[%s2 + $0x130] sm:$0xff]
    %v106 = vld [vmem:[%s2 + $0x138] sm:$0xff]
    %v107 = vld [vmem:[%s2 + $0x140] sm:$0xff]
    %v108 = vld [vmem:[%s2 + $0x148] sm:$0xff]
    %v109 = vld [vmem:[%s2 + $0x150] sm:$0xff]
    %v110 = vld [vmem:[%s2 + $0x158] sm:$0xff]
    %v111 = vld [vmem:[%s2 + $0x160] sm:$0xff]
    %v112 = vld [vmem:[%s2 + $0x168] sm:$0xff]
    %v113 = vld [vmem:[%s2 + $0x170] sm:$0xff]
    %v114 = vld [vmem:[%s2 + $0x178] sm:$0xff]
    %v115 = vld [vmem:[%s3] sm:$0xff]
    %v116 = vld [vmem:[%s3 + $0x8] sm:$0xff]
    %v117 = vld [vmem:[%s3 + $0x10] sm:$0xff]
    %v118 = vld [vmem:[%s3 + $0x18] sm:$0xff]
    %v119 = vlaneseq
    %v120 = vshrl.u32 %v119, 7
    %v121 = vlaneseq
    %v122 = vand.u32 %v121, 127
    %vm123 = vcmp.le.s32.totalorder %v122, %v120
    %v125 = vsel %vm27, %v65, 0
    %v128 = vsel %vm27, %v66, 0
    %130 = vmatprep.subr.mxu0 0.0
    %131 = vmatpush1.msra.mxu0 %v67
    %132 = vmatprep.subr.mxu0 0.0
    %133 = vmatpush1.msra.mxu0 %v68
    %134 = vmatprep.subr.mxu0 0.0
    %135 = vmatpush1.msra.mxu0 %v69
    %136 = vmatprep.subr.mxu0 0.0
    %137 = vmatpush1.msra.mxu0 %v70
    %138 = vmatprep.subr.mxu0 0.0
    %139 = vmatpush1.msra.mxu0 0.0
    %140 = vmatprep.subr.mxu0 0.0
    %141 = vmatpush1.msra.mxu0 0.0
    %142 = vmatprep.subr.mxu0 0.0
    %143 = vmatpush1.msra.mxu0 0.0
    %144 = vmatprep.subr.mxu0 0.0
    %145 = vmatpush1.msra.mxu0 0.0
    %146 = vmatprep.subr.mxu0 0.0
    %147 = vmatpush1.msra.mxu0 0.0
    %148 = vmatprep.subr.mxu0 0.0
    %149 = vmatpush1.msra.mxu0 0.0
    %150 = vmatprep.subr.mxu0 0.0
    %151 = vmatpush1.msra.mxu0 0.0
    %152 = vmatprep.subr.mxu0 0.0
    %153 = vmatpush1.msra.mxu0 0.0
    %154 = vmatprep.subr.mxu0 0.0
    %155 = vmatpush1.msra.mxu0 0.0
    %156 = vmatprep.subr.mxu0 0.0
    %157 = vmatpush1.msra.mxu0 0.0
    %158 = vmatprep.subr.mxu0 0.0
    %159 = vmatpush1.msra.mxu0 0.0
    %160 = vmatprep.subr.mxu0 0.0
    %161 = vmatpush1.msra.mxu0 0.0
    %162 = vmatprep.subr.mxu0 0.0
    %163 = vmatpush1.msra.mxu0 0.0
    %164 = vmatprep.subr.mxu0 0.0
    %165 = vmatpush1.msra.mxu0 0.0
    %166 = vmatprep.subr.mxu0 0.0
    %167 = vmatpush1.msra.mxu0 0.0
    %168 = vmatprep.subr.mxu0 0.0
    %169 = vmatpush1.msra.mxu0 0.0
    %170 = vmatprep.subr.mxu0 0.0
    %171 = vmatpush1.msra.mxu0 0.0
    %172 = vmatprep.subr.mxu0 0.0
    %173 = vmatpush1.msra.mxu0 0.0
    %174 = vmatprep.subr.mxu0 0.0
    %175 = vmatpush1.msra.mxu0 0.0
    %176 = vmatprep.subr.mxu0 0.0
    %177 = vmatpush1.msra.mxu0 0.0
    %178 = vmatprep.subr.mxu0 0.0
    %179 = vmatpush1.msra.mxu0 0.0
    %180 = vmatprep.subr.mxu0 0.0
    %181 = vmatpush1.msra.mxu0 0.0
    %182 = vmatprep.subr.mxu0 0.0
    %183 = vmatpush1.msra.mxu0 0.0
    %184 = vmatprep.subr.mxu0 0.0
    %185 = vmatpush1.msra.mxu0 0.0
    %186 = vmatprep.subr.mxu0 0.0
    %187 = vmatpush1.msra.mxu0 0.0
    %188 = vmatprep.subr.mxu0 0.0
    %189 = vmatpush1.msra.mxu0 0.0
    %190 = vmatprep.subr.mxu0 0.0
    %191 = vmatpush1.msra.mxu0 0.0
    %192 = vmatprep.subr.mxu0 0.0
    %193 = vmatpush1.msra.mxu0 0.0
    %194 = vmatprep.mubr.f32.mxu0 0.0
    %195 = vmatmul.mubr.f32.gmra.mrb[0].mxu0 %v125
    %v196 = vpop.f32.mrb[0].mxu0
    %v197 = vadd.f32 0.0, %v196
    %v198 = vpop.f32.mrb[0].mxu0
    %199 = vmatprep.mubr.f32.mxu0 0.0
    %200 = vmatmul.mubr.f32.gmra.mrb[0].mxu0 %v128
    %v201 = vpop.f32.mrb[0].mxu0
    %v202 = vadd.f32 0.0, %v201
    %v203 = vpop.f32.mrb[0].mxu0
    %204 = vdwg.mxu0
    %205 = vmatprep.subr.mxu0 0.0
    %206 = vmatpush1.msra.mxu0 %v71
    %207 = vmatprep.subr.mxu0 0.0
    %208 = vmatpush1.msra.mxu0 %v72
    %209 = vmatprep.subr.mxu0 0.0
    %210 = vmatpush1.msra.mxu0 %v73
    %211 = vmatprep.subr.mxu0 0.0
    %212 = vmatpush1.msra.mxu0 %v74
    %213 = vmatprep.subr.mxu0 0.0
    %214 = vmatpush1.msra.mxu0 0.0
    %215 = vmatprep.subr.mxu0 0.0
    %216 = vmatpush1.msra.mxu0 0.0
    %217 = vmatprep.subr.mxu0 0.0
    %218 = vmatpush1.msra.mxu0 0.0
    %219 = vmatprep.subr.mxu0 0.0
    %220 = vmatpush1.msra.mxu0 0.0
    %221 = vmatprep.subr.mxu0 0.0
    %222 = vmatpush1.msra.mxu0 0.0
    %223 = vmatprep.subr.mxu0 0.0
    %224 = vmatpush1.msra.mxu0 0.0
    %225 = vmatprep.subr.mxu0 0.0
    %226 = vmatpush1.msra.mxu0 0.0
    %227 = vmatprep.subr.mxu0 0.0
    %228 = vmatpush1.msra.mxu0 0.0
    %229 = vmatprep.subr.mxu0 0.0
    %230 = vmatpush1.msra.mxu0 0.0
    %231 = vmatprep.subr.mxu0 0.0
    %232 = vmatpush1.msra.mxu0 0.0
    %233 = vmatprep.subr.mxu0 0.0
    %234 = vmatpush1.msra.mxu0 0.0
    %235 = vmatprep.subr.mxu0 0.0
    %236 = vmatpush1.msra.mxu0 0.0
    %237 = vmatprep.subr.mxu0 0.0
    %238 = vmatpush1.msra.mxu0 0.0
    %239 = vmatprep.subr.mxu0 0.0
    %240 = vmatpush1.msra.mxu0 0.0
    %241 = vmatprep.subr.mxu0 0.0
    %242 = vmatpush1.msra.mxu0 0.0
    %243 = vmatprep.subr.mxu0 0.0
    %244 = vmatpush1.msra.mxu0 0.0
    %245 = vmatprep.subr.mxu0 0.0
    %246 = vmatpush1.msra.mxu0 0.0
    %247 = vmatprep.subr.mxu0 0.0
    %248 = vmatpush1.msra.mxu0 0.0
    %249 = vmatprep.subr.mxu0 0.0
    %250 = vmatpush1.msra.mxu0 0.0
    %251 = vmatprep.subr.mxu0 0.0
    %252 = vmatpush1.msra.mxu0 0.0
    %253 = vmatprep.subr.mxu0 0.0
    %254 = vmatpush1.msra.mxu0 0.0
    %255 = vmatprep.subr.mxu0 0.0
    %256 = vmatpush1.msra.mxu0 0.0
    %257 = vmatprep.subr.mxu0 0.0
    %258 = vmatpush1.msra.mxu0 0.0
    %259 = vmatprep.subr.mxu0 0.0
    %260 = vmatpush1.msra.mxu0 0.0
    %261 = vmatprep.subr.mxu0 0.0
    %262 = vmatpush1.msra.mxu0 0.0
    %263 = vmatprep.subr.mxu0 0.0
    %264 = vmatpush1.msra.mxu0 0.0
    %265 = vmatprep.subr.mxu0 0.0
    %266 = vmatpush1.msra.mxu0 0.0
    %267 = vmatprep.subr.mxu0 0.0
    %268 = vmatpush1.msra.mxu0 0.0
    %269 = vmatprep.mubr.f32.mxu0 0.0
    %270 = vmatmul.mubr.f32.gmra.mrb[0].mxu0 %v125
    %v271 = vpop.f32.mrb[0].mxu0
    %v272 = vadd.f32 0.0, %v271
    %v273 = vpop.f32.mrb[0].mxu0
    %274 = vmatprep.mubr.f32.mxu0 0.0
    %275 = vmatmul.mubr.f32.gmra.mrb[0].mxu0 %v128
    %v276 = vpop.f32.mrb[0].mxu0
    %v277 = vadd.f32 0.0, %v276
    %v278 = vpop.f32.mrb[0].mxu0
    %279 = vdwg.mxu0
    %280 = vmatprep.subr.mxu0 0.0
    %281 = vmatpush1.msra.mxu0 %v75
    %282 = vmatprep.subr.mxu0 0.0
    %283 = vmatpush1.msra.mxu0 %v76
    %284 = vmatprep.subr.mxu0 0.0
    %285 = vmatpush1.msra.mxu0 %v77
    %286 = vmatprep.subr.mxu0 0.0
    %287 = vmatpush1.msra.mxu0 %v78
    %288 = vmatprep.subr.mxu0 0.0
    %289 = vmatpush1.msra.mxu0 0.0
    %290 = vmatprep.subr.mxu0 0.0
    %291 = vmatpush1.msra.mxu0 0.0
    %292 = vmatprep.subr.mxu0 0.0
    %293 = vmatpush1.msra.mxu0 0.0
    %294 = vmatprep.subr.mxu0 0.0
    %295 = vmatpush1.msra.mxu0 0.0
    %296 = vmatprep.subr.mxu0 0.0
    %297 = vmatpush1.msra.mxu0 0.0
    %298 = vmatprep.subr.mxu0 0.0
    %299 = vmatpush1.msra.mxu0 0.0
    %300 = vmatprep.subr.mxu0 0.0
    %301 = vmatpush1.msra.mxu0 0.0
    %302 = vmatprep.subr.mxu0 0.0
    %303 = vmatpush1.msra.mxu0 0.0
    %304 = vmatprep.subr.mxu0 0.0
    %305 = vmatpush1.msra.mxu0 0.0
    %306 = vmatprep.subr.mxu0 0.0
    %307 = vmatpush1.msra.mxu0 0.0
    %308 = vmatprep.subr.mxu0 0.0
    %309 = vmatpush1.msra.mxu0 0.0
    %310 = vmatprep.subr.mxu0 0.0
    %311 = vmatpush1.msra.mxu0 0.0
    %312 = vmatprep.subr.mxu0 0.0
    %313 = vmatpush1.msra.mxu0 0.0
    %314 = vmatprep.subr.mxu0 0.0
    %315 = vmatpush1.msra.mxu0 0.0
    %316 = vmatprep.subr.mxu0 0.0
    %317 = vmatpush1.msra.mxu0 0.0
    %318 = vmatprep.subr.mxu0 0.0
    %319 = vmatpush1.msra.mxu0 0.0
    %320 = vmatprep.subr.mxu0 0.0
    %321 = vmatpush1.msra.mxu0 0.0
    %322 = vmatprep.subr.mxu0 0.0
    %323 = vmatpush1.msra.mxu0 0.0
    %324 = vmatprep.subr.mxu0 0.0
    %325 = vmatpush1.msra.mxu0 0.0
    %326 = vmatprep.subr.mxu0 0.0
    %327 = vmatpush1.msra.mxu0 0.0
    %328 = vmatprep.subr.mxu0 0.0
    %329 = vmatpush1.msra.mxu0 0.0
    %330 = vmatprep.subr.mxu0 0.0
    %331 = vmatpush1.msra.mxu0 0.0
    %332 = vmatprep.subr.mxu0 0.0
    %333 = vmatpush1.msra.mxu0 0.0
    %334 = vmatprep.subr.mxu0 0.0
    %335 = vmatpush1.msra.mxu0 0.0
    %336 = vmatprep.subr.mxu0 0.0
    %337 = vmatpush1.msra.mxu0 0.0
    %338 = vmatprep.subr.mxu0 0.0
    %339 = vmatpush1.msra.mxu0 0.0
    %340 = vmatprep.subr.mxu0 0.0
    %341 = vmatpush1.msra.mxu0 0.0
    %342 = vmatprep.subr.mxu0 0.0
    %343 = vmatpush1.msra.mxu0 0.0
    %344 = vmatprep.mubr.f32.mxu0 0.0
    %345 = vmatmul.mubr.f32.gmra.mrb[0].mxu0 %v125
    %v346 = vpop.f32.mrb[0].mxu0
    %v347 = vadd.f32 0.0, %v346
    %v348 = vpop.f32.mrb[0].mxu0
    %349 = vmatprep.mubr.f32.mxu0 0.0
    %350 = vmatmul.mubr.f32.gmra.mrb[0].mxu0 %v128
    %v351 = vpop.f32.mrb[0].mxu0
    %v352 = vadd.f32 0.0, %v351
    %v353 = vpop.f32.mrb[0].mxu0
    %354 = vdwg.mxu0
    %355 = vmatprep.subr.mxu0 0.0
    %356 = vmatpush1.msra.mxu0 %v79
    %357 = vmatprep.subr.mxu0 0.0
    %358 = vmatpush1.msra.mxu0 %v80
    %359 = vmatprep.subr.mxu0 0.0
    %360 = vmatpush1.msra.mxu0 %v81
    %361 = vmatprep.subr.mxu0 0.0
    %362 = vmatpush1.msra.mxu0 %v82
    %363 = vmatprep.subr.mxu0 0.0
    %364 = vmatpush1.msra.mxu0 0.0
    %365 = vmatprep.subr.mxu0 0.0
    %366 = vmatpush1.msra.mxu0 0.0
    %367 = vmatprep.subr.mxu0 0.0
    %368 = vmatpush1.msra.mxu0 0.0
    %369 = vmatprep.subr.mxu0 0.0
    %370 = vmatpush1.msra.mxu0 0.0
    %371 = vmatprep.subr.mxu0 0.0
    %372 = vmatpush1.msra.mxu0 0.0
    %373 = vmatprep.subr.mxu0 0.0
    %374 = vmatpush1.msra.mxu0 0.0
    %375 = vmatprep.subr.mxu0 0.0
    %376 = vmatpush1.msra.mxu0 0.0
    %377 = vmatprep.subr.mxu0 0.0
    %378 = vmatpush1.msra.mxu0 0.0
    %379 = vmatprep.subr.mxu0 0.0
    %380 = vmatpush1.msra.mxu0 0.0
    %381 = vmatprep.subr.mxu0 0.0
    %382 = vmatpush1.msra.mxu0 0.0
    %383 = vmatprep.subr.mxu0 0.0
    %384 = vmatpush1.msra.mxu0 0.0
    %385 = vmatprep.subr.mxu0 0.0
    %386 = vmatpush1.msra.mxu0 0.0
    %387 = vmatprep.subr.mxu0 0.0
    %388 = vmatpush1.msra.mxu0 0.0
    %389 = vmatprep.subr.mxu0 0.0
    %390 = vmatpush1.msra.mxu0 0.0
    %391 = vmatprep.subr.mxu0 0.0
    %392 = vmatpush1.msra.mxu0 0.0
    %393 = vmatprep.subr.mxu0 0.0
    %394 = vmatpush1.msra.mxu0 0.0
    %395 = vmatprep.subr.mxu0 0.0
    %396 = vmatpush1.msra.mxu0 0.0
    %397 = vmatprep.subr.mxu0 0.0
    %398 = vmatpush1.msra.mxu0 0.0
    %399 = vmatprep.subr.mxu0 0.0
    %400 = vmatpush1.msra.mxu0 0.0
    %401 = vmatprep.subr.mxu0 0.0
    %402 = vmatpush1.msra.mxu0 0.0
    %403 = vmatprep.subr.mxu0 0.0
    %404 = vmatpush1.msra.mxu0 0.0
    %405 = vmatprep.subr.mxu0 0.0
    %406 = vmatpush1.msra.mxu0 0.0
    %407 = vmatprep.subr.mxu0 0.0
    %408 = vmatpush1.msra.mxu0 0.0
    %409 = vmatprep.subr.mxu0 0.0
    %410 = vmatpush1.msra.mxu0 0.0
    %411 = vmatprep.subr.mxu0 0.0
    %412 = vmatpush1.msra.mxu0 0.0
    %413 = vmatprep.subr.mxu0 0.0
    %414 = vmatpush1.msra.mxu0 0.0
    %415 = vmatprep.subr.mxu0 0.0
    %416 = vmatpush1.msra.mxu0 0.0
    %417 = vmatprep.subr.mxu0 0.0
    %418 = vmatpush1.msra.mxu0 0.0
    %419 = vmatprep.mubr.f32.mxu0 0.0
    %420 = vmatmul.mubr.f32.gmra.mrb[0].mxu0 %v125
    %v421 = vpop.f32.mrb[0].mxu0
    %v422 = vadd.f32 0.0, %v421
    %v423 = vpop.f32.mrb[0].mxu0
    %424 = vmatprep.mubr.f32.mxu0 0.0
    %425 = vmatmul.mubr.f32.gmra.mrb[0].mxu0 %v128
    %v426 = vpop.f32.mrb[0].mxu0
    %v427 = vadd.f32 0.0, %v426
    %v428 = vpop.f32.mrb[0].mxu0
    %429 = vdwg.mxu0
    %430 = vmatprep.subr.mxu0 0.0
    %431 = vmatpush1.msra.mxu0 %v83
    %432 = vmatprep.subr.mxu0 0.0
    %433 = vmatpush1.msra.mxu0 %v84
    %434 = vmatprep.subr.mxu0 0.0
    %435 = vmatpush1.msra.mxu0 %v85
    %436 = vmatprep.subr.mxu0 0.0
    %437 = vmatpush1.msra.mxu0 %v86
    %438 = vmatprep.subr.mxu0 0.0
    %439 = vmatpush1.msra.mxu0 0.0
    %440 = vmatprep.subr.mxu0 0.0
    %441 = vmatpush1.msra.mxu0 0.0
    %442 = vmatprep.subr.mxu0 0.0
    %443 = vmatpush1.msra.mxu0 0.0
    %444 = vmatprep.subr.mxu0 0.0
    %445 = vmatpush1.msra.mxu0 0.0
    %446 = vmatprep.subr.mxu0 0.0
    %447 = vmatpush1.msra.mxu0 0.0
    %448 = vmatprep.subr.mxu0 0.0
    %449 = vmatpush1.msra.mxu0 0.0
    %450 = vmatprep.subr.mxu0 0.0
    %451 = vmatpush1.msra.mxu0 0.0
    %452 = vmatprep.subr.mxu0 0.0
    %453 = vmatpush1.msra.mxu0 0.0
    %454 = vmatprep.subr.mxu0 0.0
    %455 = vmatpush1.msra.mxu0 0.0
    %456 = vmatprep.subr.mxu0 0.0
    %457 = vmatpush1.msra.mxu0 0.0
    %458 = vmatprep.subr.mxu0 0.0
    %459 = vmatpush1.msra.mxu0 0.0
    %460 = vmatprep.subr.mxu0 0.0
    %461 = vmatpush1.msra.mxu0 0.0
    %462 = vmatprep.subr.mxu0 0.0
    %463 = vmatpush1.msra.mxu0 0.0
    %464 = vmatprep.subr.mxu0 0.0
    %465 = vmatpush1.msra.mxu0 0.0
    %466 = vmatprep.subr.mxu0 0.0
    %467 = vmatpush1.msra.mxu0 0.0
    %468 = vmatprep.subr.mxu0 0.0
    %469 = vmatpush1.msra.mxu0 0.0
    %470 = vmatprep.subr.mxu0 0.0
    %471 = vmatpush1.msra.mxu0 0.0
    %472 = vmatprep.subr.mxu0 0.0
    %473 = vmatpush1.msra.mxu0 0.0
    %474 = vmatprep.subr.mxu0 0.0
    %475 = vmatpush1.msra.mxu0 0.0
    %476 = vmatprep.subr.mxu0 0.0
    %477 = vmatpush1.msra.mxu0 0.0
    %478 = vmatprep.subr.mxu0 0.0
    %479 = vmatpush1.msra.mxu0 0.0
    %480 = vmatprep.subr.mxu0 0.0
    %481 = vmatpush1.msra.mxu0 0.0
    %482 = vmatprep.subr.mxu0 0.0
    %483 = vmatpush1.msra.mxu0 0.0
    %484 = vmatprep.subr.mxu0 0.0
    %485 = vmatpush1.msra.mxu0 0.0
    %486 = vmatprep.subr.mxu0 0.0
    %487 = vmatpush1.msra.mxu0 0.0
    %488 = vmatprep.subr.mxu0 0.0
    %489 = vmatpush1.msra.mxu0 0.0
    %490 = vmatprep.subr.mxu0 0.0
    %491 = vmatpush1.msra.mxu0 0.0
    %492 = vmatprep.subr.mxu0 0.0
    %493 = vmatpush1.msra.mxu0 0.0
    %494 = vmatprep.mubr.f32.mxu0 0.0
    %495 = vmatmul.mubr.f32.gmra.mrb[0].mxu0 %v125
    %v496 = vpop.f32.mrb[0].mxu0
    %v497 = vadd.f32 0.0, %v496
    %v498 = vpop.f32.mrb[0].mxu0
    %499 = vmatprep.mubr.f32.mxu0 0.0
    %500 = vmatmul.mubr.f32.gmra.mrb[0].mxu0 %v128
    %v501 = vpop.f32.mrb[0].mxu0
    %v502 = vadd.f32 0.0, %v501
    %v503 = vpop.f32.mrb[0].mxu0
    %504 = vdwg.mxu0
    %505 = vmatprep.subr.mxu0 0.0
    %506 = vmatpush1.msra.mxu0 %v87
    %507 = vmatprep.subr.mxu0 0.0
    %508 = vmatpush1.msra.mxu0 %v88
    %509 = vmatprep.subr.mxu0 0.0
    %510 = vmatpush1.msra.mxu0 %v89
    %511 = vmatprep.subr.mxu0 0.0
    %512 = vmatpush1.msra.mxu0 %v90
    %513 = vmatprep.subr.mxu0 0.0
    %514 = vmatpush1.msra.mxu0 0.0
    %515 = vmatprep.subr.mxu0 0.0
    %516 = vmatpush1.msra.mxu0 0.0
    %517 = vmatprep.subr.mxu0 0.0
    %518 = vmatpush1.msra.mxu0 0.0
    %519 = vmatprep.subr.mxu0 0.0
    %520 = vmatpush1.msra.mxu0 0.0
    %521 = vmatprep.subr.mxu0 0.0
    %522 = vmatpush1.msra.mxu0 0.0
    %523 = vmatprep.subr.mxu0 0.0
    %524 = vmatpush1.msra.mxu0 0.0
    %525 = vmatprep.subr.mxu0 0.0
    %526 = vmatpush1.msra.mxu0 0.0
    %527 = vmatprep.subr.mxu0 0.0
    %528 = vmatpush1.msra.mxu0 0.0
    %529 = vmatprep.subr.mxu0 0.0
    %530 = vmatpush1.msra.mxu0 0.0
    %531 = vmatprep.subr.mxu0 0.0
    %532 = vmatpush1.msra.mxu0 0.0
    %533 = vmatprep.subr.mxu0 0.0
    %534 = vmatpush1.msra.mxu0 0.0
    %535 = vmatprep.subr.mxu0 0.0
    %536 = vmatpush1.msra.mxu0 0.0
    %537 = vmatprep.subr.mxu0 0.0
    %538 = vmatpush1.msra.mxu0 0.0
    %539 = vmatprep.subr.mxu0 0.0
    %540 = vmatpush1.msra.mxu0 0.0
    %541 = vmatprep.subr.mxu0 0.0
    %542 = vmatpush1.msra.mxu0 0.0
    %543 = vmatprep.subr.mxu0 0.0
    %544 = vmatpush1.msra.mxu0 0.0
    %545 = vmatprep.subr.mxu0 0.0
    %546 = vmatpush1.msra.mxu0 0.0
    %547 = vmatprep.subr.mxu0 0.0
    %548 = vmatpush1.msra.mxu0 0.0
    %549 = vmatprep.subr.mxu0 0.0
    %550 = vmatpush1.msra.mxu0 0.0
    %551 = vmatprep.subr.mxu0 0.0
    %552 = vmatpush1.msra.mxu0 0.0
    %553 = vmatprep.subr.mxu0 0.0
    %554 = vmatpush1.msra.mxu0 0.0
    %555 = vmatprep.subr.mxu0 0.0
    %556 = vmatpush1.msra.mxu0 0.0
    %557 = vmatprep.subr.mxu0 0.0
    %558 = vmatpush1.msra.mxu0 0.0
    %559 = vmatprep.subr.mxu0 0.0
    %560 = vmatpush1.msra.mxu0 0.0
    %561 = vmatprep.subr.mxu0 0.0
    %562 = vmatpush1.msra.mxu0 0.0
    %563 = vmatprep.subr.mxu0 0.0
    %564 = vmatpush1.msra.mxu0 0.0
    %565 = vmatprep.subr.mxu0 0.0
    %566 = vmatpush1.msra.mxu0 0.0
    %567 = vmatprep.subr.mxu0 0.0
    %568 = vmatpush1.msra.mxu0 0.0
    %569 = vmatprep.mubr.f32.mxu0 0.0
    %570 = vmatmul.mubr.f32.gmra.mrb[0].mxu0 %v125
    %v571 = vpop.f32.mrb[0].mxu0
    %v572 = vadd.f32 0.0, %v571
    %v573 = vpop.f32.mrb[0].mxu0
    %574 = vmatprep.mubr.f32.mxu0 0.0
    %575 = vmatmul.mubr.f32.gmra.mrb[0].mxu0 %v128
    %v576 = vpop.f32.mrb[0].mxu0
    %v577 = vadd.f32 0.0, %v576
    %v578 = vpop.f32.mrb[0].mxu0
    %579 = vdwg.mxu0
    %580 = vmatprep.subr.mxu0 0.0
    %581 = vmatpush1.msra.mxu0 %v91
    %582 = vmatprep.subr.mxu0 0.0
    %583 = vmatpush1.msra.mxu0 %v92
    %584 = vmatprep.subr.mxu0 0.0
    %585 = vmatpush1.msra.mxu0 %v93
    %586 = vmatprep.subr.mxu0 0.0
    %587 = vmatpush1.msra.mxu0 %v94
    %588 = vmatprep.subr.mxu0 0.0
    %589 = vmatpush1.msra.mxu0 0.0
    %590 = vmatprep.subr.mxu0 0.0
    %591 = vmatpush1.msra.mxu0 0.0
    %592 = vmatprep.subr.mxu0 0.0
    %593 = vmatpush1.msra.mxu0 0.0
    %594 = vmatprep.subr.mxu0 0.0
    %595 = vmatpush1.msra.mxu0 0.0
    %596 = vmatprep.subr.mxu0 0.0
    %597 = vmatpush1.msra.mxu0 0.0
    %598 = vmatprep.subr.mxu0 0.0
    %599 = vmatpush1.msra.mxu0 0.0
    %600 = vmatprep.subr.mxu0 0.0
    %601 = vmatpush1.msra.mxu0 0.0
    %602 = vmatprep.subr.mxu0 0.0
    %603 = vmatpush1.msra.mxu0 0.0
    %604 = vmatprep.subr.mxu0 0.0
    %605 = vmatpush1.msra.mxu0 0.0
    %606 = vmatprep.subr.mxu0 0.0
    %607 = vmatpush1.msra.mxu0 0.0
    %608 = vmatprep.subr.mxu0 0.0
    %609 = vmatpush1.msra.mxu0 0.0
    %610 = vmatprep.subr.mxu0 0.0
    %611 = vmatpush1.msra.mxu0 0.0
    %612 = vmatprep.subr.mxu0 0.0
    %613 = vmatpush1.msra.mxu0 0.0
    %614 = vmatprep.subr.mxu0 0.0
    %615 = vmatpush1.msra.mxu0 0.0
    %616 = vmatprep.subr.mxu0 0.0
    %617 = vmatpush1.msra.mxu0 0.0
    %618 = vmatprep.subr.mxu0 0.0
    %619 = vmatpush1.msra.mxu0 0.0
    %620 = vmatprep.subr.mxu0 0.0
    %621 = vmatpush1.msra.mxu0 0.0
    %622 = vmatprep.subr.mxu0 0.0
    %623 = vmatpush1.msra.mxu0 0.0
    %624 = vmatprep.subr.mxu0 0.0
    %625 = vmatpush1.msra.mxu0 0.0
    %626 = vmatprep.subr.mxu0 0.0
    %627 = vmatpush1.msra.mxu0 0.0
    %628 = vmatprep.subr.mxu0 0.0
    %629 = vmatpush1.msra.mxu0 0.0
    %630 = vmatprep.subr.mxu0 0.0
    %631 = vmatpush1.msra.mxu0 0.0
    %632 = vmatprep.subr.mxu0 0.0
    %633 = vmatpush1.msra.mxu0 0.0
    %634 = vmatprep.subr.mxu0 0.0
    %635 = vmatpush1.msra.mxu0 0.0
    %636 = vmatprep.subr.mxu0 0.0
    %637 = vmatpush1.msra.mxu0 0.0
    %638 = vmatprep.subr.mxu0 0.0
    %639 = vmatpush1.msra.mxu0 0.0
    %640 = vmatprep.subr.mxu0 0.0
    %641 = vmatpush1.msra.mxu0 0.0
    %642 = vmatprep.subr.mxu0 0.0
    %643 = vmatpush1.msra.mxu0 0.0
    %644 = vmatprep.mubr.f32.mxu0 0.0
    %645 = vmatmul.mubr.f32.gmra.mrb[0].mxu0 %v125
    %v646 = vpop.f32.mrb[0].mxu0
    %v647 = vadd.f32 0.0, %v646
    %v648 = vpop.f32.mrb[0].mxu0
    %649 = vmatprep.mubr.f32.mxu0 0.0
    %650 = vmatmul.mubr.f32.gmra.mrb[0].mxu0 %v128
    %v651 = vpop.f32.mrb[0].mxu0
    %v652 = vadd.f32 0.0, %v651
    %v653 = vpop.f32.mrb[0].mxu0
    %654 = vdwg.mxu0
    %655 = vmatprep.subr.mxu0 0.0
    %656 = vmatpush1.msra.mxu0 %v95
    %657 = vmatprep.subr.mxu0 0.0
    %658 = vmatpush1.msra.mxu0 %v96
    %659 = vmatprep.subr.mxu0 0.0
    %660 = vmatpush1.msra.mxu0 %v97
    %661 = vmatprep.subr.mxu0 0.0
    %662 = vmatpush1.msra.mxu0 %v98
    %663 = vmatprep.subr.mxu0 0.0
    %664 = vmatpush1.msra.mxu0 0.0
    %665 = vmatprep.subr.mxu0 0.0
    %666 = vmatpush1.msra.mxu0 0.0
    %667 = vmatprep.subr.mxu0 0.0
    %668 = vmatpush1.msra.mxu0 0.0
    %669 = vmatprep.subr.mxu0 0.0
    %670 = vmatpush1.msra.mxu0 0.0
    %671 = vmatprep.subr.mxu0 0.0
    %672 = vmatpush1.msra.mxu0 0.0
    %673 = vmatprep.subr.mxu0 0.0
    %674 = vmatpush1.msra.mxu0 0.0
    %675 = vmatprep.subr.mxu0 0.0
    %676 = vmatpush1.msra.mxu0 0.0
    %677 = vmatprep.subr.mxu0 0.0
    %678 = vmatpush1.msra.mxu0 0.0
    %679 = vmatprep.subr.mxu0 0.0
    %680 = vmatpush1.msra.mxu0 0.0
    %681 = vmatprep.subr.mxu0 0.0
    %682 = vmatpush1.msra.mxu0 0.0
    %683 = vmatprep.subr.mxu0 0.0
    %684 = vmatpush1.msra.mxu0 0.0
    %685 = vmatprep.subr.mxu0 0.0
    %686 = vmatpush1.msra.mxu0 0.0
    %687 = vmatprep.subr.mxu0 0.0
    %688 = vmatpush1.msra.mxu0 0.0
    %689 = vmatprep.subr.mxu0 0.0
    %690 = vmatpush1.msra.mxu0 0.0
    %691 = vmatprep.subr.mxu0 0.0
    %692 = vmatpush1.msra.mxu0 0.0
    %693 = vmatprep.subr.mxu0 0.0
    %694 = vmatpush1.msra.mxu0 0.0
    %695 = vmatprep.subr.mxu0 0.0
    %696 = vmatpush1.msra.mxu0 0.0
    %697 = vmatprep.subr.mxu0 0.0
    %698 = vmatpush1.msra.mxu0 0.0
    %699 = vmatprep.subr.mxu0 0.0
    %700 = vmatpush1.msra.mxu0 0.0
    %701 = vmatprep.subr.mxu0 0.0
    %702 = vmatpush1.msra.mxu0 0.0
    %703 = vmatprep.subr.mxu0 0.0
    %704 = vmatpush1.msra.mxu0 0.0
    %705 = vmatprep.subr.mxu0 0.0
    %706 = vmatpush1.msra.mxu0 0.0
    %707 = vmatprep.subr.mxu0 0.0
    %708 = vmatpush1.msra.mxu0 0.0
    %709 = vmatprep.subr.mxu0 0.0
    %710 = vmatpush1.msra.mxu0 0.0
    %711 = vmatprep.subr.mxu0 0.0
    %712 = vmatpush1.msra.mxu0 0.0
    %713 = vmatprep.subr.mxu0 0.0
    %714 = vmatpush1.msra.mxu0 0.0
    %715 = vmatprep.subr.mxu0 0.0
    %716 = vmatpush1.msra.mxu0 0.0
    %717 = vmatprep.subr.mxu0 0.0
    %718 = vmatpush1.msra.mxu0 0.0
    %719 = vmatprep.mubr.f32.mxu0 0.0
    %720 = vmatmul.mubr.f32.gmra.mrb[0].mxu0 %v125
    %v721 = vpop.f32.mrb[0].mxu0
    %v722 = vadd.f32 0.0, %v721
    %v723 = vpop.f32.mrb[0].mxu0
    %724 = vmatprep.mubr.f32.mxu0 0.0
    %725 = vmatmul.mubr.f32.gmra.mrb[0].mxu0 %v128
    %v726 = vpop.f32.mrb[0].mxu0
    %v727 = vadd.f32 0.0, %v726
    %v728 = vpop.f32.mrb[0].mxu0
    %729 = vdwg.mxu0
    %730 = vmatprep.subr.mxu0 0.0
    %731 = vmatpush1.msra.mxu0 %v99
    %732 = vmatprep.subr.mxu0 0.0
    %733 = vmatpush1.msra.mxu0 %v100
    %734 = vmatprep.subr.mxu0 0.0
    %735 = vmatpush1.msra.mxu0 %v101
    %736 = vmatprep.subr.mxu0 0.0
    %737 = vmatpush1.msra.mxu0 %v102
    %738 = vmatprep.subr.mxu0 0.0
    %739 = vmatpush1.msra.mxu0 0.0
    %740 = vmatprep.subr.mxu0 0.0
    %741 = vmatpush1.msra.mxu0 0.0
    %742 = vmatprep.subr.mxu0 0.0
    %743 = vmatpush1.msra.mxu0 0.0
    %744 = vmatprep.subr.mxu0 0.0
    %745 = vmatpush1.msra.mxu0 0.0
    %746 = vmatprep.subr.mxu0 0.0
    %747 = vmatpush1.msra.mxu0 0.0
    %748 = vmatprep.subr.mxu0 0.0
    %749 = vmatpush1.msra.mxu0 0.0
    %750 = vmatprep.subr.mxu0 0.0
    %751 = vmatpush1.msra.mxu0 0.0
    %752 = vmatprep.subr.mxu0 0.0
    %753 = vmatpush1.msra.mxu0 0.0
    %754 = vmatprep.subr.mxu0 0.0
    %755 = vmatpush1.msra.mxu0 0.0
    %756 = vmatprep.subr.mxu0 0.0
    %757 = vmatpush1.msra.mxu0 0.0
    %758 = vmatprep.subr.mxu0 0.0
    %759 = vmatpush1.msra.mxu0 0.0
    %760 = vmatprep.subr.mxu0 0.0
    %761 = vmatpush1.msra.mxu0 0.0
    %762 = vmatprep.subr.mxu0 0.0
    %763 = vmatpush1.msra.mxu0 0.0
    %764 = vmatprep.subr.mxu0 0.0
    %765 = vmatpush1.msra.mxu0 0.0
    %766 = vmatprep.subr.mxu0 0.0
    %767 = vmatpush1.msra.mxu0 0.0
    %768 = vmatprep.subr.mxu0 0.0
    %769 = vmatpush1.msra.mxu0 0.0
    %770 = vmatprep.subr.mxu0 0.0
    %771 = vmatpush1.msra.mxu0 0.0
    %772 = vmatprep.subr.mxu0 0.0
    %773 = vmatpush1.msra.mxu0 0.0
    %774 = vmatprep.subr.mxu0 0.0
    %775 = vmatpush1.msra.mxu0 0.0
    %776 = vmatprep.subr.mxu0 0.0
    %777 = vmatpush1.msra.mxu0 0.0
    %778 = vmatprep.subr.mxu0 0.0
    %779 = vmatpush1.msra.mxu0 0.0
    %780 = vmatprep.subr.mxu0 0.0
    %781 = vmatpush1.msra.mxu0 0.0
    %782 = vmatprep.subr.mxu0 0.0
    %783 = vmatpush1.msra.mxu0 0.0
    %784 = vmatprep.subr.mxu0 0.0
    %785 = vmatpush1.msra.mxu0 0.0
    %786 = vmatprep.subr.mxu0 0.0
    %787 = vmatpush1.msra.mxu0 0.0
    %788 = vmatprep.subr.mxu0 0.0
    %789 = vmatpush1.msra.mxu0 0.0
    %790 = vmatprep.subr.mxu0 0.0
    %791 = vmatpush1.msra.mxu0 0.0
    %792 = vmatprep.subr.mxu0 0.0
    %793 = vmatpush1.msra.mxu0 0.0
    %794 = vmatprep.mubr.f32.mxu0 0.0
    %795 = vmatmul.mubr.f32.gmra.mrb[0].mxu0 %v125
    %v796 = vpop.f32.mrb[0].mxu0
    %v797 = vadd.f32 0.0, %v796
    %v798 = vpop.f32.mrb[0].mxu0
    %799 = vmatprep.mubr.f32.mxu0 0.0
    %800 = vmatmul.mubr.f32.gmra.mrb[0].mxu0 %v128
    %v801 = vpop.f32.mrb[0].mxu0
    %v802 = vadd.f32 0.0, %v801
    %v803 = vpop.f32.mrb[0].mxu0
    %804 = vdwg.mxu0
    %805 = vmatprep.subr.mxu0 0.0
    %806 = vmatpush1.msra.mxu0 %v103
    %807 = vmatprep.subr.mxu0 0.0
    %808 = vmatpush1.msra.mxu0 %v104
    %809 = vmatprep.subr.mxu0 0.0
    %810 = vmatpush1.msra.mxu0 %v105
    %811 = vmatprep.subr.mxu0 0.0
    %812 = vmatpush1.msra.mxu0 %v106
    %813 = vmatprep.subr.mxu0 0.0
    %814 = vmatpush1.msra.mxu0 0.0
    %815 = vmatprep.subr.mxu0 0.0
    %816 = vmatpush1.msra.mxu0 0.0
    %817 = vmatprep.subr.mxu0 0.0
    %818 = vmatpush1.msra.mxu0 0.0
    %819 = vmatprep.subr.mxu0 0.0
    %820 = vmatpush1.msra.mxu0 0.0
    %821 = vmatprep.subr.mxu0 0.0
    %822 = vmatpush1.msra.mxu0 0.0
    %823 = vmatprep.subr.mxu0 0.0
    %824 = vmatpush1.msra.mxu0 0.0
    %825 = vmatprep.subr.mxu0 0.0
    %826 = vmatpush1.msra.mxu0 0.0
    %827 = vmatprep.subr.mxu0 0.0
    %828 = vmatpush1.msra.mxu0 0.0
    %829 = vmatprep.subr.mxu0 0.0
    %830 = vmatpush1.msra.mxu0 0.0
    %831 = vmatprep.subr.mxu0 0.0
    %832 = vmatpush1.msra.mxu0 0.0
    %833 = vmatprep.subr.mxu0 0.0
    %834 = vmatpush1.msra.mxu0 0.0
    %835 = vmatprep.subr.mxu0 0.0
    %836 = vmatpush1.msra.mxu0 0.0
    %837 = vmatprep.subr.mxu0 0.0
    %838 = vmatpush1.msra.mxu0 0.0
    %839 = vmatprep.subr.mxu0 0.0
    %840 = vmatpush1.msra.mxu0 0.0
    %841 = vmatprep.subr.mxu0 0.0
    %842 = vmatpush1.msra.mxu0 0.0
    %843 = vmatprep.subr.mxu0 0.0
    %844 = vmatpush1.msra.mxu0 0.0
    %845 = vmatprep.subr.mxu0 0.0
    %846 = vmatpush1.msra.mxu0 0.0
    %847 = vmatprep.subr.mxu0 0.0
    %848 = vmatpush1.msra.mxu0 0.0
    %849 = vmatprep.subr.mxu0 0.0
    %850 = vmatpush1.msra.mxu0 0.0
    %851 = vmatprep.subr.mxu0 0.0
    %852 = vmatpush1.msra.mxu0 0.0
    %853 = vmatprep.subr.mxu0 0.0
    %854 = vmatpush1.msra.mxu0 0.0
    %855 = vmatprep.subr.mxu0 0.0
    %856 = vmatpush1.msra.mxu0 0.0
    %857 = vmatprep.subr.mxu0 0.0
    %858 = vmatpush1.msra.mxu0 0.0
    %859 = vmatprep.subr.mxu0 0.0
    %860 = vmatpush1.msra.mxu0 0.0
    %861 = vmatprep.subr.mxu0 0.0
    %862 = vmatpush1.msra.mxu0 0.0
    %863 = vmatprep.subr.mxu0 0.0
    %864 = vmatpush1.msra.mxu0 0.0
    %865 = vmatprep.subr.mxu0 0.0
    %866 = vmatpush1.msra.mxu0 0.0
    %867 = vmatprep.subr.mxu0 0.0
    %868 = vmatpush1.msra.mxu0 0.0
    %869 = vmatprep.mubr.f32.mxu0 0.0
    %870 = vmatmul.mubr.f32.gmra.mrb[0].mxu0 %v125
    %v871 = vpop.f32.mrb[0].mxu0
    %v872 = vadd.f32 0.0, %v871
    %v873 = vpop.f32.mrb[0].mxu0
    %874 = vmatprep.mubr.f32.mxu0 0.0
    %875 = vmatmul.mubr.f32.gmra.mrb[0].mxu0 %v128
    %v876 = vpop.f32.mrb[0].mxu0
    %v877 = vadd.f32 0.0, %v876
    %v878 = vpop.f32.mrb[0].mxu0
    %879 = vdwg.mxu0
    %880 = vmatprep.subr.mxu0 0.0
    %881 = vmatpush1.msra.mxu0 %v107
    %882 = vmatprep.subr.mxu0 0.0
    %883 = vmatpush1.msra.mxu0 %v108
    %884 = vmatprep.subr.mxu0 0.0
    %885 = vmatpush1.msra.mxu0 %v109
    %886 = vmatprep.subr.mxu0 0.0
    %887 = vmatpush1.msra.mxu0 %v110
    %888 = vmatprep.subr.mxu0 0.0
    %889 = vmatpush1.msra.mxu0 0.0
    %890 = vmatprep.subr.mxu0 0.0
    %891 = vmatpush1.msra.mxu0 0.0
    %892 = vmatprep.subr.mxu0 0.0
    %893 = vmatpush1.msra.mxu0 0.0
    %894 = vmatprep.subr.mxu0 0.0
    %895 = vmatpush1.msra.mxu0 0.0
    %896 = vmatprep.subr.mxu0 0.0
    %897 = vmatpush1.msra.mxu0 0.0
    %898 = vmatprep.subr.mxu0 0.0
    %899 = vmatpush1.msra.mxu0 0.0
    %900 = vmatprep.subr.mxu0 0.0
    %901 = vmatpush1.msra.mxu0 0.0
    %902 = vmatprep.subr.mxu0 0.0
    %903 = vmatpush1.msra.mxu0 0.0
    %904 = vmatprep.subr.mxu0 0.0
    %905 = vmatpush1.msra.mxu0 0.0
    %906 = vmatprep.subr.mxu0 0.0
    %907 = vmatpush1.msra.mxu0 0.0
    %908 = vmatprep.subr.mxu0 0.0
    %909 = vmatpush1.msra.mxu0 0.0
    %910 = vmatprep.subr.mxu0 0.0
    %911 = vmatpush1.msra.mxu0 0.0
    %912 = vmatprep.subr.mxu0 0.0
    %913 = vmatpush1.msra.mxu0 0.0
    %914 = vmatprep.subr.mxu0 0.0
    %915 = vmatpush1.msra.mxu0 0.0
    %916 = vmatprep.subr.mxu0 0.0
    %917 = vmatpush1.msra.mxu0 0.0
    %918 = vmatprep.subr.mxu0 0.0
    %919 = vmatpush1.msra.mxu0 0.0
    %920 = vmatprep.subr.mxu0 0.0
    %921 = vmatpush1.msra.mxu0 0.0
    %922 = vmatprep.subr.mxu0 0.0
    %923 = vmatpush1.msra.mxu0 0.0
    %924 = vmatprep.subr.mxu0 0.0
    %925 = vmatpush1.msra.mxu0 0.0
    %926 = vmatprep.subr.mxu0 0.0
    %927 = vmatpush1.msra.mxu0 0.0
    %928 = vmatprep.subr.mxu0 0.0
    %929 = vmatpush1.msra.mxu0 0.0
    %930 = vmatprep.subr.mxu0 0.0
    %931 = vmatpush1.msra.mxu0 0.0
    %932 = vmatprep.subr.mxu0 0.0
    %933 = vmatpush1.msra.mxu0 0.0
    %934 = vmatprep.subr.mxu0 0.0
    %935 = vmatpush1.msra.mxu0 0.0
    %936 = vmatprep.subr.mxu0 0.0
    %937 = vmatpush1.msra.mxu0 0.0
    %938 = vmatprep.subr.mxu0 0.0
    %939 = vmatpush1.msra.mxu0 0.0
    %940 = vmatprep.subr.mxu0 0.0
    %941 = vmatpush1.msra.mxu0 0.0
    %942 = vmatprep.subr.mxu0 0.0
    %943 = vmatpush1.msra.mxu0 0.0
    %944 = vmatprep.mubr.f32.mxu0 0.0
    %945 = vmatmul.mubr.f32.gmra.mrb[0].mxu0 %v125
    %v946 = vpop.f32.mrb[0].mxu0
    %v947 = vadd.f32 0.0, %v946
    %v948 = vpop.f32.mrb[0].mxu0
    %949 = vmatprep.mubr.f32.mxu0 0.0
    %950 = vmatmul.mubr.f32.gmra.mrb[0].mxu0 %v128
    %v951 = vpop.f32.mrb[0].mxu0
    %v952 = vadd.f32 0.0, %v951
    %v953 = vpop.f32.mrb[0].mxu0
    %954 = vdwg.mxu0
    %955 = vmatprep.subr.mxu0 0.0
    %956 = vmatpush1.msra.mxu0 %v111
    %957 = vmatprep.subr.mxu0 0.0
    %958 = vmatpush1.msra.mxu0 %v112
    %959 = vmatprep.subr.mxu0 0.0
    %960 = vmatpush1.msra.mxu0 %v113
    %961 = vmatprep.subr.mxu0 0.0
    %962 = vmatpush1.msra.mxu0 %v114
    %963 = vmatprep.subr.mxu0 0.0
    %964 = vmatpush1.msra.mxu0 0.0
    %965 = vmatprep.subr.mxu0 0.0
    %966 = vmatpush1.msra.mxu0 0.0
    %967 = vmatprep.subr.mxu0 0.0
    %968 = vmatpush1.msra.mxu0 0.0
    %969 = vmatprep.subr.mxu0 0.0
    %970 = vmatpush1.msra.mxu0 0.0
    %971 = vmatprep.subr.mxu0 0.0
    %972 = vmatpush1.msra.mxu0 0.0
    %973 = vmatprep.subr.mxu0 0.0
    %974 = vmatpush1.msra.mxu0 0.0
    %975 = vmatprep.subr.mxu0 0.0
    %976 = vmatpush1.msra.mxu0 0.0
    %977 = vmatprep.subr.mxu0 0.0
    %978 = vmatpush1.msra.mxu0 0.0
    %979 = vmatprep.subr.mxu0 0.0
    %980 = vmatpush1.msra.mxu0 0.0
    %981 = vmatprep.subr.mxu0 0.0
    %982 = vmatpush1.msra.mxu0 0.0
    %983 = vmatprep.subr.mxu0 0.0
    %984 = vmatpush1.msra.mxu0 0.0
    %985 = vmatprep.subr.mxu0 0.0
    %986 = vmatpush1.msra.mxu0 0.0
    %987 = vmatprep.subr.mxu0 0.0
    %988 = vmatpush1.msra.mxu0 0.0
    %989 = vmatprep.subr.mxu0 0.0
    %990 = vmatpush1.msra.mxu0 0.0
    %991 = vmatprep.subr.mxu0 0.0
    %992 = vmatpush1.msra.mxu0 0.0
    %993 = vmatprep.subr.mxu0 0.0
    %994 = vmatpush1.msra.mxu0 0.0
    %995 = vmatprep.subr.mxu0 0.0
    %996 = vmatpush1.msra.mxu0 0.0
    %997 = vmatprep.subr.mxu0 0.0
    %998 = vmatpush1.msra.mxu0 0.0
    %999 = vmatprep.subr.mxu0 0.0
    %1000 = vmatpush1.msra.mxu0 0.0
    %1001 = vmatprep.subr.mxu0 0.0
    %1002 = vmatpush1.msra.mxu0 0.0
    %1003 = vmatprep.subr.mxu0 0.0
    %1004 = vmatpush1.msra.mxu0 0.0
    %1005 = vmatprep.subr.mxu0 0.0
    %1006 = vmatpush1.msra.mxu0 0.0
    %1007 = vmatprep.subr.mxu0 0.0
    %1008 = vmatpush1.msra.mxu0 0.0
    %1009 = vmatprep.subr.mxu0 0.0
    %1010 = vmatpush1.msra.mxu0 0.0
    %1011 = vmatprep.subr.mxu0 0.0
    %1012 = vmatpush1.msra.mxu0 0.0
    %1013 = vmatprep.subr.mxu0 0.0
    %1014 = vmatpush1.msra.mxu0 0.0
    %1015 = vmatprep.subr.mxu0 0.0
    %1016 = vmatpush1.msra.mxu0 0.0
    %1017 = vmatprep.subr.mxu0 0.0
    %1018 = vmatpush1.msra.mxu0 0.0
    %1019 = vmatprep.mubr.f32.mxu0 0.0
    %1020 = vmatmul.mubr.f32.gmra.mrb[0].mxu0 %v125
    %v1021 = vpop.f32.mrb[0].mxu0
    %v1022 = vadd.f32 0.0, %v1021
    %v1023 = vpop.f32.mrb[0].mxu0
    %1024 = vmatprep.mubr.f32.mxu0 0.0
    %1025 = vmatmul.mubr.f32.gmra.mrb[0].mxu0 %v128
    %v1026 = vpop.f32.mrb[0].mxu0
    %v1027 = vadd.f32 0.0, %v1026
    %v1028 = vpop.f32.mrb[0].mxu0
    %1029 = vdwg.mxu0
    %vm1030 = vcmask 64512
    %v1032 = vsel %vm1030, %v197, 0
    %v1035 = vsel %vm1030, %v497, 0
    %1037 = vmatprep.subr.mxu0 0.0
    %1038 = vmatpush1.xpose.msra.mxu0 %v1035
    %1039 = vmatprep.subr.mxu0 0.0
    %1040 = vmatpush1.xpose.msra.mxu0 0.0
    %1041 = vmatprep.subr.mxu0 0.0
    %1042 = vmatpush1.xpose.msra.mxu0 0.0
    %1043 = vmatprep.subr.mxu0 0.0
    %1044 = vmatpush1.xpose.msra.mxu0 0.0
    %1045 = vmatprep.subr.mxu0 0.0
    %1046 = vmatpush1.xpose.msra.mxu0 0.0
    %1047 = vmatprep.subr.mxu0 0.0
    %1048 = vmatpush1.xpose.msra.mxu0 0.0
    %1049 = vmatprep.subr.mxu0 0.0
    %1050 = vmatpush1.xpose.msra.mxu0 0.0
    %1051 = vmatprep.subr.mxu0 0.0
    %1052 = vmatpush1.xpose.msra.mxu0 0.0
    %1053 = vmatprep.subr.mxu0 0.0
    %1054 = vmatpush1.xpose.msra.mxu0 0.0
    %1055 = vmatprep.subr.mxu0 0.0
    %1056 = vmatpush1.xpose.msra.mxu0 0.0
    %1057 = vmatprep.subr.mxu0 0.0
    %1058 = vmatpush1.xpose.msra.mxu0 0.0
    %1059 = vmatprep.subr.mxu0 0.0
    %1060 = vmatpush1.xpose.msra.mxu0 0.0
    %1061 = vmatprep.subr.mxu0 0.0
    %1062 = vmatpush1.xpose.msra.mxu0 0.0
    %1063 = vmatprep.subr.mxu0 0.0
    %1064 = vmatpush1.xpose.msra.mxu0 0.0
    %1065 = vmatprep.subr.mxu0 0.0
    %1066 = vmatpush1.xpose.msra.mxu0 0.0
    %1067 = vmatprep.subr.mxu0 0.0
    %1068 = vmatpush1.xpose.msra.mxu0 0.0
    %1069 = vmatprep.subr.mxu0 0.0
    %1070 = vmatpush1.xpose.msra.mxu0 0.0
    %1071 = vmatprep.subr.mxu0 0.0
    %1072 = vmatpush1.xpose.msra.mxu0 0.0
    %1073 = vmatprep.subr.mxu0 0.0
    %1074 = vmatpush1.xpose.msra.mxu0 0.0
    %1075 = vmatprep.subr.mxu0 0.0
    %1076 = vmatpush1.xpose.msra.mxu0 0.0
    %1077 = vmatprep.subr.mxu0 0.0
    %1078 = vmatpush1.xpose.msra.mxu0 0.0
    %1079 = vmatprep.subr.mxu0 0.0
    %1080 = vmatpush1.xpose.msra.mxu0 0.0
    %1081 = vmatprep.subr.mxu0 0.0
    %1082 = vmatpush1.xpose.msra.mxu0 0.0
    %1083 = vmatprep.subr.mxu0 0.0
    %1084 = vmatpush1.xpose.msra.mxu0 0.0
    %1085 = vmatprep.subr.mxu0 0.0
    %1086 = vmatpush1.xpose.msra.mxu0 0.0
    %1087 = vmatprep.subr.mxu0 0.0
    %1088 = vmatpush1.xpose.msra.mxu0 0.0
    %1089 = vmatprep.subr.mxu0 0.0
    %1090 = vmatpush1.xpose.msra.mxu0 0.0
    %1091 = vmatprep.subr.mxu0 0.0
    %1092 = vmatpush1.xpose.msra.mxu0 0.0
    %1093 = vmatprep.subr.mxu0 0.0
    %1094 = vmatpush1.xpose.msra.mxu0 0.0
    %1095 = vmatprep.subr.mxu0 0.0
    %1096 = vmatpush1.xpose.msra.mxu0 0.0
    %1097 = vmatprep.subr.mxu0 0.0
    %1098 = vmatpush1.xpose.msra.mxu0 0.0
    %1099 = vmatprep.subr.mxu0 0.0
    %1100 = vmatpush1.xpose.msra.mxu0 0.0
    %1101 = vmatprep.mubr.f32.mxu0 0.0
    %1102 = vmatmul.mubr.f32.gmra.mrb[0].mxu0 %v1032
    %v1103 = vpop.f32.mrb[0].mxu0
    %v1104 = vadd.f32 0.0, %v1103
    %v1105 = vpop.f32.mrb[0].mxu0
    %1106 = vdwg.mxu0
    %v1107 = vmul.f32 %v1104, 0.35355338
    %v1108 = vsel %vm123, -1e+09, %v1107
    %v1109 = vsel %vm1030, %v1108, -inf
    %1110 = vmax.xlane.f32.xlu0 %v1109
    %v1111 = vpop.xlane.xlu0 %1110
    %v1112 = vsub.f32 %v1108, %v1111
    %v1113 = vmul.f32 %v1112, 1.442695
    %v1114 = vpow.pop %v1113
    %v1115 = vsel %vm1030, %v1114, 0.0
    %1116 = vadd.xlane.f32.xlu0 %v1115
    %v1117 = vpop.xlane.xlu0 %1116
    %v1118 = vrcp.pop %v1117
    %v1119 = vmul.f32 %v1117, %v1118
    %v1120 = vsub.f32 2.0, %v1119
    %v1121 = vmul.f32 %v1118, %v1120
    %v1122 = vmul.f32 %v1114, %v1121
    %v1124 = vsel %vm1030, %v1122, 0
    %1126 = vmatprep.subr.mxu0 0.0
    %1127 = vmatpush1.msra.mxu0 %v797
    %1128 = vmatprep.subr.mxu0 0.0
    %1129 = vmatpush1.msra.mxu0 0.0
    %1130 = vmatprep.subr.mxu0 0.0
    %1131 = vmatpush1.msra.mxu0 0.0
    %1132 = vmatprep.subr.mxu0 0.0
    %1133 = vmatpush1.msra.mxu0 0.0
    %1134 = vmatprep.subr.mxu0 0.0
    %1135 = vmatpush1.msra.mxu0 0.0
    %1136 = vmatprep.subr.mxu0 0.0
    %1137 = vmatpush1.msra.mxu0 0.0
    %1138 = vmatprep.subr.mxu0 0.0
    %1139 = vmatpush1.msra.mxu0 0.0
    %1140 = vmatprep.subr.mxu0 0.0
    %1141 = vmatpush1.msra.mxu0 0.0
    %1142 = vmatprep.subr.mxu0 0.0
    %1143 = vmatpush1.msra.mxu0 0.0
    %1144 = vmatprep.subr.mxu0 0.0
    %1145 = vmatpush1.msra.mxu0 0.0
    %1146 = vmatprep.subr.mxu0 0.0
    %1147 = vmatpush1.msra.mxu0 0.0
    %1148 = vmatprep.subr.mxu0 0.0
    %1149 = vmatpush1.msra.mxu0 0.0
    %1150 = vmatprep.subr.mxu0 0.0
    %1151 = vmatpush1.msra.mxu0 0.0
    %1152 = vmatprep.subr.mxu0 0.0
    %1153 = vmatpush1.msra.mxu0 0.0
    %1154 = vmatprep.subr.mxu0 0.0
    %1155 = vmatpush1.msra.mxu0 0.0
    %1156 = vmatprep.subr.mxu0 0.0
    %1157 = vmatpush1.msra.mxu0 0.0
    %1158 = vmatprep.subr.mxu0 0.0
    %1159 = vmatpush1.msra.mxu0 0.0
    %1160 = vmatprep.subr.mxu0 0.0
    %1161 = vmatpush1.msra.mxu0 0.0
    %1162 = vmatprep.subr.mxu0 0.0
    %1163 = vmatpush1.msra.mxu0 0.0
    %1164 = vmatprep.subr.mxu0 0.0
    %1165 = vmatpush1.msra.mxu0 0.0
    %1166 = vmatprep.subr.mxu0 0.0
    %1167 = vmatpush1.msra.mxu0 0.0
    %1168 = vmatprep.subr.mxu0 0.0
    %1169 = vmatpush1.msra.mxu0 0.0
    %1170 = vmatprep.subr.mxu0 0.0
    %1171 = vmatpush1.msra.mxu0 0.0
    %1172 = vmatprep.subr.mxu0 0.0
    %1173 = vmatpush1.msra.mxu0 0.0
    %1174 = vmatprep.subr.mxu0 0.0
    %1175 = vmatpush1.msra.mxu0 0.0
    %1176 = vmatprep.subr.mxu0 0.0
    %1177 = vmatpush1.msra.mxu0 0.0
    %1178 = vmatprep.subr.mxu0 0.0
    %1179 = vmatpush1.msra.mxu0 0.0
    %1180 = vmatprep.subr.mxu0 0.0
    %1181 = vmatpush1.msra.mxu0 0.0
    %1182 = vmatprep.subr.mxu0 0.0
    %1183 = vmatpush1.msra.mxu0 0.0
    %1184 = vmatprep.subr.mxu0 0.0
    %1185 = vmatpush1.msra.mxu0 0.0
    %1186 = vmatprep.subr.mxu0 0.0
    %1187 = vmatpush1.msra.mxu0 0.0
    %1188 = vmatprep.subr.mxu0 0.0
    %1189 = vmatpush1.msra.mxu0 0.0
    %1190 = vmatprep.mubr.f32.mxu0 0.0
    %1191 = vmatmul.mubr.f32.gmra.mrb[0].mxu0 %v1124
    %v1192 = vpop.f32.mrb[0].mxu0
    %v1193 = vadd.f32 0.0, %v1192
    %v1194 = vpop.f32.mrb[0].mxu0
    %1195 = vdwg.mxu0
    %v1197 = vsel %vm1030, %v272, 0
    %v1200 = vsel %vm1030, %v572, 0
    %1202 = vmatprep.subr.mxu0 0.0
    %1203 = vmatpush1.xpose.msra.mxu0 %v1200
    %1204 = vmatprep.subr.mxu0 0.0
    %1205 = vmatpush1.xpose.msra.mxu0 0.0
    %1206 = vmatprep.subr.mxu0 0.0
    %1207 = vmatpush1.xpose.msra.mxu0 0.0
    %1208 = vmatprep.subr.mxu0 0.0
    %1209 = vmatpush1.xpose.msra.mxu0 0.0
    %1210 = vmatprep.subr.mxu0 0.0
    %1211 = vmatpush1.xpose.msra.mxu0 0.0
    %1212 = vmatprep.subr.mxu0 0.0
    %1213 = vmatpush1.xpose.msra.mxu0 0.0
    %1214 = vmatprep.subr.mxu0 0.0
    %1215 = vmatpush1.xpose.msra.mxu0 0.0
    %1216 = vmatprep.subr.mxu0 0.0
    %1217 = vmatpush1.xpose.msra.mxu0 0.0
    %1218 = vmatprep.subr.mxu0 0.0
    %1219 = vmatpush1.xpose.msra.mxu0 0.0
    %1220 = vmatprep.subr.mxu0 0.0
    %1221 = vmatpush1.xpose.msra.mxu0 0.0
    %1222 = vmatprep.subr.mxu0 0.0
    %1223 = vmatpush1.xpose.msra.mxu0 0.0
    %1224 = vmatprep.subr.mxu0 0.0
    %1225 = vmatpush1.xpose.msra.mxu0 0.0
    %1226 = vmatprep.subr.mxu0 0.0
    %1227 = vmatpush1.xpose.msra.mxu0 0.0
    %1228 = vmatprep.subr.mxu0 0.0
    %1229 = vmatpush1.xpose.msra.mxu0 0.0
    %1230 = vmatprep.subr.mxu0 0.0
    %1231 = vmatpush1.xpose.msra.mxu0 0.0
    %1232 = vmatprep.subr.mxu0 0.0
    %1233 = vmatpush1.xpose.msra.mxu0 0.0
    %1234 = vmatprep.subr.mxu0 0.0
    %1235 = vmatpush1.xpose.msra.mxu0 0.0
    %1236 = vmatprep.subr.mxu0 0.0
    %1237 = vmatpush1.xpose.msra.mxu0 0.0
    %1238 = vmatprep.subr.mxu0 0.0
    %1239 = vmatpush1.xpose.msra.mxu0 0.0
    %1240 = vmatprep.subr.mxu0 0.0
    %1241 = vmatpush1.xpose.msra.mxu0 0.0
    %1242 = vmatprep.subr.mxu0 0.0
    %1243 = vmatpush1.xpose.msra.mxu0 0.0
    %1244 = vmatprep.subr.mxu0 0.0
    %1245 = vmatpush1.xpose.msra.mxu0 0.0
    %1246 = vmatprep.subr.mxu0 0.0
    %1247 = vmatpush1.xpose.msra.mxu0 0.0
    %1248 = vmatprep.subr.mxu0 0.0
    %1249 = vmatpush1.xpose.msra.mxu0 0.0
    %1250 = vmatprep.subr.mxu0 0.0
    %1251 = vmatpush1.xpose.msra.mxu0 0.0
    %1252 = vmatprep.subr.mxu0 0.0
    %1253 = vmatpush1.xpose.msra.mxu0 0.0
    %1254 = vmatprep.subr.mxu0 0.0
    %1255 = vmatpush1.xpose.msra.mxu0 0.0
    %1256 = vmatprep.subr.mxu0 0.0
    %1257 = vmatpush1.xpose.msra.mxu0 0.0
    %1258 = vmatprep.subr.mxu0 0.0
    %1259 = vmatpush1.xpose.msra.mxu0 0.0
    %1260 = vmatprep.subr.mxu0 0.0
    %1261 = vmatpush1.xpose.msra.mxu0 0.0
    %1262 = vmatprep.subr.mxu0 0.0
    %1263 = vmatpush1.xpose.msra.mxu0 0.0
    %1264 = vmatprep.subr.mxu0 0.0
    %1265 = vmatpush1.xpose.msra.mxu0 0.0
    %1266 = vmatprep.mubr.f32.mxu0 0.0
    %1267 = vmatmul.mubr.f32.gmra.mrb[0].mxu0 %v1197
    %v1268 = vpop.f32.mrb[0].mxu0
    %v1269 = vadd.f32 0.0, %v1268
    %v1270 = vpop.f32.mrb[0].mxu0
    %1271 = vdwg.mxu0
    %v1272 = vmul.f32 %v1269, 0.35355338
    %v1273 = vsel %vm123, -1e+09, %v1272
    %v1274 = vsel %vm1030, %v1273, -inf
    %1275 = vmax.xlane.f32.xlu0 %v1274
    %v1276 = vpop.xlane.xlu0 %1275
    %v1277 = vsub.f32 %v1273, %v1276
    %v1278 = vmul.f32 %v1277, 1.442695
    %v1279 = vpow.pop %v1278
    %v1280 = vsel %vm1030, %v1279, 0.0
    %1281 = vadd.xlane.f32.xlu0 %v1280
    %v1282 = vpop.xlane.xlu0 %1281
    %v1283 = vrcp.pop %v1282
    %v1284 = vmul.f32 %v1282, %v1283
    %v1285 = vsub.f32 2.0, %v1284
    %v1286 = vmul.f32 %v1283, %v1285
    %v1287 = vmul.f32 %v1279, %v1286
    %v1289 = vsel %vm1030, %v1287, 0
    %1291 = vmatprep.subr.mxu0 0.0
    %1292 = vmatpush1.msra.mxu0 %v872
    %1293 = vmatprep.subr.mxu0 0.0
    %1294 = vmatpush1.msra.mxu0 0.0
    %1295 = vmatprep.subr.mxu0 0.0
    %1296 = vmatpush1.msra.mxu0 0.0
    %1297 = vmatprep.subr.mxu0 0.0
    %1298 = vmatpush1.msra.mxu0 0.0
    %1299 = vmatprep.subr.mxu0 0.0
    %1300 = vmatpush1.msra.mxu0 0.0
    %1301 = vmatprep.subr.mxu0 0.0
    %1302 = vmatpush1.msra.mxu0 0.0
    %1303 = vmatprep.subr.mxu0 0.0
    %1304 = vmatpush1.msra.mxu0 0.0
    %1305 = vmatprep.subr.mxu0 0.0
    %1306 = vmatpush1.msra.mxu0 0.0
    %1307 = vmatprep.subr.mxu0 0.0
    %1308 = vmatpush1.msra.mxu0 0.0
    %1309 = vmatprep.subr.mxu0 0.0
    %1310 = vmatpush1.msra.mxu0 0.0
    %1311 = vmatprep.subr.mxu0 0.0
    %1312 = vmatpush1.msra.mxu0 0.0
    %1313 = vmatprep.subr.mxu0 0.0
    %1314 = vmatpush1.msra.mxu0 0.0
    %1315 = vmatprep.subr.mxu0 0.0
    %1316 = vmatpush1.msra.mxu0 0.0
    %1317 = vmatprep.subr.mxu0 0.0
    %1318 = vmatpush1.msra.mxu0 0.0
    %1319 = vmatprep.subr.mxu0 0.0
    %1320 = vmatpush1.msra.mxu0 0.0
    %1321 = vmatprep.subr.mxu0 0.0
    %1322 = vmatpush1.msra.mxu0 0.0
    %1323 = vmatprep.subr.mxu0 0.0
    %1324 = vmatpush1.msra.mxu0 0.0
    %1325 = vmatprep.subr.mxu0 0.0
    %1326 = vmatpush1.msra.mxu0 0.0
    %1327 = vmatprep.subr.mxu0 0.0
    %1328 = vmatpush1.msra.mxu0 0.0
    %1329 = vmatprep.subr.mxu0 0.0
    %1330 = vmatpush1.msra.mxu0 0.0
    %1331 = vmatprep.subr.mxu0 0.0
    %1332 = vmatpush1.msra.mxu0 0.0
    %1333 = vmatprep.subr.mxu0 0.0
    %1334 = vmatpush1.msra.mxu0 0.0
    %1335 = vmatprep.subr.mxu0 0.0
    %1336 = vmatpush1.msra.mxu0 0.0
    %1337 = vmatprep.subr.mxu0 0.0
    %1338 = vmatpush1.msra.mxu0 0.0
    %1339 = vmatprep.subr.mxu0 0.0
    %1340 = vmatpush1.msra.mxu0 0.0
    %1341 = vmatprep.subr.mxu0 0.0
    %1342 = vmatpush1.msra.mxu0 0.0
    %1343 = vmatprep.subr.mxu0 0.0
    %1344 = vmatpush1.msra.mxu0 0.0
    %1345 = vmatprep.subr.mxu0 0.0
    %1346 = vmatpush1.msra.mxu0 0.0
    %1347 = vmatprep.subr.mxu0 0.0
    %1348 = vmatpush1.msra.mxu0 0.0
    %1349 = vmatprep.subr.mxu0 0.0
    %1350 = vmatpush1.msra.mxu0 0.0
    %1351 = vmatprep.subr.mxu0 0.0
    %1352 = vmatpush1.msra.mxu0 0.0
    %1353 = vmatprep.subr.mxu0 0.0
    %1354 = vmatpush1.msra.mxu0 0.0
    %1355 = vmatprep.mubr.f32.mxu0 0.0
    %1356 = vmatmul.mubr.f32.gmra.mrb[0].mxu0 %v1289
    %v1357 = vpop.f32.mrb[0].mxu0
    %v1358 = vadd.f32 0.0, %v1357
    %v1359 = vpop.f32.mrb[0].mxu0
    %1360 = vdwg.mxu0
    %v1362 = vsel %vm1030, %v1358, 0
    %1364 = vmatprep.subr.mxu0 0.0
    %1365 = vmatpush1.msra.mxu0 %v116
    %1366 = vmatprep.subr.mxu0 0.0
    %1367 = vmatpush1.msra.mxu0 0.0
    %1368 = vmatprep.subr.mxu0 0.0
    %1369 = vmatpush1.msra.mxu0 0.0
    %1370 = vmatprep.subr.mxu0 0.0
    %1371 = vmatpush1.msra.mxu0 0.0
    %1372 = vmatprep.subr.mxu0 0.0
    %1373 = vmatpush1.msra.mxu0 0.0
    %1374 = vmatprep.subr.mxu0 0.0
    %1375 = vmatpush1.msra.mxu0 0.0
    %1376 = vmatprep.subr.mxu0 0.0
    %1377 = vmatpush1.msra.mxu0 0.0
    %1378 = vmatprep.subr.mxu0 0.0
    %1379 = vmatpush1.msra.mxu0 0.0
    %1380 = vmatprep.subr.mxu0 0.0
    %1381 = vmatpush1.msra.mxu0 0.0
    %1382 = vmatprep.subr.mxu0 0.0
    %1383 = vmatpush1.msra.mxu0 0.0
    %1384 = vmatprep.subr.mxu0 0.0
    %1385 = vmatpush1.msra.mxu0 0.0
    %1386 = vmatprep.subr.mxu0 0.0
    %1387 = vmatpush1.msra.mxu0 0.0
    %1388 = vmatprep.subr.mxu0 0.0
    %1389 = vmatpush1.msra.mxu0 0.0
    %1390 = vmatprep.subr.mxu0 0.0
    %1391 = vmatpush1.msra.mxu0 0.0
    %1392 = vmatprep.subr.mxu0 0.0
    %1393 = vmatpush1.msra.mxu0 0.0
    %1394 = vmatprep.subr.mxu0 0.0
    %1395 = vmatpush1.msra.mxu0 0.0
    %1396 = vmatprep.subr.mxu0 0.0
    %1397 = vmatpush1.msra.mxu0 0.0
    %1398 = vmatprep.subr.mxu0 0.0
    %1399 = vmatpush1.msra.mxu0 0.0
    %1400 = vmatprep.subr.mxu0 0.0
    %1401 = vmatpush1.msra.mxu0 0.0
    %1402 = vmatprep.subr.mxu0 0.0
    %1403 = vmatpush1.msra.mxu0 0.0
    %1404 = vmatprep.subr.mxu0 0.0
    %1405 = vmatpush1.msra.mxu0 0.0
    %1406 = vmatprep.subr.mxu0 0.0
    %1407 = vmatpush1.msra.mxu0 0.0
    %1408 = vmatprep.subr.mxu0 0.0
    %1409 = vmatpush1.msra.mxu0 0.0
    %1410 = vmatprep.subr.mxu0 0.0
    %1411 = vmatpush1.msra.mxu0 0.0
    %1412 = vmatprep.subr.mxu0 0.0
    %1413 = vmatpush1.msra.mxu0 0.0
    %1414 = vmatprep.subr.mxu0 0.0
    %1415 = vmatpush1.msra.mxu0 0.0
    %1416 = vmatprep.subr.mxu0 0.0
    %1417 = vmatpush1.msra.mxu0 0.0
    %1418 = vmatprep.subr.mxu0 0.0
    %1419 = vmatpush1.msra.mxu0 0.0
    %1420 = vmatprep.subr.mxu0 0.0
    %1421 = vmatpush1.msra.mxu0 0.0
    %1422 = vmatprep.subr.mxu0 0.0
    %1423 = vmatpush1.msra.mxu0 0.0
    %1424 = vmatprep.subr.mxu0 0.0
    %1425 = vmatpush1.msra.mxu0 0.0
    %1426 = vmatprep.subr.mxu0 0.0
    %1427 = vmatpush1.msra.mxu0 0.0
    %1428 = vmatprep.mubr.f32.mxu0 0.0
    %1429 = vmatmul.mubr.f32.gmra.mrb[0].mxu0 %v1362
    %v1430 = vpop.f32.mrb[0].mxu0
    %v1431 = vadd.f32 0.0, %v1430
    %v1432 = vpop.f32.mrb[0].mxu0
    %1433 = vdwg.mxu0
    %v1435 = vsel %vm1030, %v1193, 0
    %1437 = vmatprep.subr.mxu0 0.0
    %1438 = vmatpush1.msra.mxu0 %v115
    %1439 = vmatprep.subr.mxu0 0.0
    %1440 = vmatpush1.msra.mxu0 0.0
    %1441 = vmatprep.subr.mxu0 0.0
    %1442 = vmatpush1.msra.mxu0 0.0
    %1443 = vmatprep.subr.mxu0 0.0
    %1444 = vmatpush1.msra.mxu0 0.0
    %1445 = vmatprep.subr.mxu0 0.0
    %1446 = vmatpush1.msra.mxu0 0.0
    %1447 = vmatprep.subr.mxu0 0.0
    %1448 = vmatpush1.msra.mxu0 0.0
    %1449 = vmatprep.subr.mxu0 0.0
    %1450 = vmatpush1.msra.mxu0 0.0
    %1451 = vmatprep.subr.mxu0 0.0
    %1452 = vmatpush1.msra.mxu0 0.0
    %1453 = vmatprep.subr.mxu0 0.0
    %1454 = vmatpush1.msra.mxu0 0.0
    %1455 = vmatprep.subr.mxu0 0.0
    %1456 = vmatpush1.msra.mxu0 0.0
    %1457 = vmatprep.subr.mxu0 0.0
    %1458 = vmatpush1.msra.mxu0 0.0
    %1459 = vmatprep.subr.mxu0 0.0
    %1460 = vmatpush1.msra.mxu0 0.0
    %1461 = vmatprep.subr.mxu0 0.0
    %1462 = vmatpush1.msra.mxu0 0.0
    %1463 = vmatprep.subr.mxu0 0.0
    %1464 = vmatpush1.msra.mxu0 0.0
    %1465 = vmatprep.subr.mxu0 0.0
    %1466 = vmatpush1.msra.mxu0 0.0
    %1467 = vmatprep.subr.mxu0 0.0
    %1468 = vmatpush1.msra.mxu0 0.0
    %1469 = vmatprep.subr.mxu0 0.0
    %1470 = vmatpush1.msra.mxu0 0.0
    %1471 = vmatprep.subr.mxu0 0.0
    %1472 = vmatpush1.msra.mxu0 0.0
    %1473 = vmatprep.subr.mxu0 0.0
    %1474 = vmatpush1.msra.mxu0 0.0
    %1475 = vmatprep.subr.mxu0 0.0
    %1476 = vmatpush1.msra.mxu0 0.0
    %1477 = vmatprep.subr.mxu0 0.0
    %1478 = vmatpush1.msra.mxu0 0.0
    %1479 = vmatprep.subr.mxu0 0.0
    %1480 = vmatpush1.msra.mxu0 0.0
    %1481 = vmatprep.subr.mxu0 0.0
    %1482 = vmatpush1.msra.mxu0 0.0
    %1483 = vmatprep.subr.mxu0 0.0
    %1484 = vmatpush1.msra.mxu0 0.0
    %1485 = vmatprep.subr.mxu0 0.0
    %1486 = vmatpush1.msra.mxu0 0.0
    %1487 = vmatprep.subr.mxu0 0.0
    %1488 = vmatpush1.msra.mxu0 0.0
    %1489 = vmatprep.subr.mxu0 0.0
    %1490 = vmatpush1.msra.mxu0 0.0
    %1491 = vmatprep.subr.mxu0 0.0
    %1492 = vmatpush1.msra.mxu0 0.0
    %1493 = vmatprep.subr.mxu0 0.0
    %1494 = vmatpush1.msra.mxu0 0.0
    %1495 = vmatprep.subr.mxu0 0.0
    %1496 = vmatpush1.msra.mxu0 0.0
    %1497 = vmatprep.subr.mxu0 0.0
    %1498 = vmatpush1.msra.mxu0 0.0
    %1499 = vmatprep.subr.mxu0 0.0
    %1500 = vmatpush1.msra.mxu0 0.0
    %1501 = vmatprep.mubr.f32.mxu0 0.0
    %1502 = vmatmul.mubr.f32.gmra.mrb[0].mxu0 %v1435
    %v1503 = vpop.f32.mrb[0].mxu0
    %v1504 = vadd.f32 %v1431, %v1503
    %v1505 = vpop.f32.mrb[0].mxu0
    %1506 = vdwg.mxu0
    %v1508 = vsel %vm1030, %v347, 0
    %v1511 = vsel %vm1030, %v647, 0
    %1513 = vmatprep.subr.mxu0 0.0
    %1514 = vmatpush1.xpose.msra.mxu0 %v1511
    %1515 = vmatprep.subr.mxu0 0.0
    %1516 = vmatpush1.xpose.msra.mxu0 0.0
    %1517 = vmatprep.subr.mxu0 0.0
    %1518 = vmatpush1.xpose.msra.mxu0 0.0
    %1519 = vmatprep.subr.mxu0 0.0
    %1520 = vmatpush1.xpose.msra.mxu0 0.0
    %1521 = vmatprep.subr.mxu0 0.0
    %1522 = vmatpush1.xpose.msra.mxu0 0.0
    %1523 = vmatprep.subr.mxu0 0.0
    %1524 = vmatpush1.xpose.msra.mxu0 0.0
    %1525 = vmatprep.subr.mxu0 0.0
    %1526 = vmatpush1.xpose.msra.mxu0 0.0
    %1527 = vmatprep.subr.mxu0 0.0
    %1528 = vmatpush1.xpose.msra.mxu0 0.0
    %1529 = vmatprep.subr.mxu0 0.0
    %1530 = vmatpush1.xpose.msra.mxu0 0.0
    %1531 = vmatprep.subr.mxu0 0.0
    %1532 = vmatpush1.xpose.msra.mxu0 0.0
    %1533 = vmatprep.subr.mxu0 0.0
    %1534 = vmatpush1.xpose.msra.mxu0 0.0
    %1535 = vmatprep.subr.mxu0 0.0
    %1536 = vmatpush1.xpose.msra.mxu0 0.0
    %1537 = vmatprep.subr.mxu0 0.0
    %1538 = vmatpush1.xpose.msra.mxu0 0.0
    %1539 = vmatprep.subr.mxu0 0.0
    %1540 = vmatpush1.xpose.msra.mxu0 0.0
    %1541 = vmatprep.subr.mxu0 0.0
    %1542 = vmatpush1.xpose.msra.mxu0 0.0
    %1543 = vmatprep.subr.mxu0 0.0
    %1544 = vmatpush1.xpose.msra.mxu0 0.0
    %1545 = vmatprep.subr.mxu0 0.0
    %1546 = vmatpush1.xpose.msra.mxu0 0.0
    %1547 = vmatprep.subr.mxu0 0.0
    %1548 = vmatpush1.xpose.msra.mxu0 0.0
    %1549 = vmatprep.subr.mxu0 0.0
    %1550 = vmatpush1.xpose.msra.mxu0 0.0
    %1551 = vmatprep.subr.mxu0 0.0
    %1552 = vmatpush1.xpose.msra.mxu0 0.0
    %1553 = vmatprep.subr.mxu0 0.0
    %1554 = vmatpush1.xpose.msra.mxu0 0.0
    %1555 = vmatprep.subr.mxu0 0.0
    %1556 = vmatpush1.xpose.msra.mxu0 0.0
    %1557 = vmatprep.subr.mxu0 0.0
    %1558 = vmatpush1.xpose.msra.mxu0 0.0
    %1559 = vmatprep.subr.mxu0 0.0
    %1560 = vmatpush1.xpose.msra.mxu0 0.0
    %1561 = vmatprep.subr.mxu0 0.0
    %1562 = vmatpush1.xpose.msra.mxu0 0.0
    %1563 = vmatprep.subr.mxu0 0.0
    %1564 = vmatpush1.xpose.msra.mxu0 0.0
    %1565 = vmatprep.subr.mxu0 0.0
    %1566 = vmatpush1.xpose.msra.mxu0 0.0
    %1567 = vmatprep.subr.mxu0 0.0
    %1568 = vmatpush1.xpose.msra.mxu0 0.0
    %1569 = vmatprep.subr.mxu0 0.0
    %1570 = vmatpush1.xpose.msra.mxu0 0.0
    %1571 = vmatprep.subr.mxu0 0.0
    %1572 = vmatpush1.xpose.msra.mxu0 0.0
    %1573 = vmatprep.subr.mxu0 0.0
    %1574 = vmatpush1.xpose.msra.mxu0 0.0
    %1575 = vmatprep.subr.mxu0 0.0
    %1576 = vmatpush1.xpose.msra.mxu0 0.0
    %1577 = vmatprep.mubr.f32.mxu0 0.0
    %1578 = vmatmul.mubr.f32.gmra.mrb[0].mxu0 %v1508
    %v1579 = vpop.f32.mrb[0].mxu0
    %v1580 = vadd.f32 0.0, %v1579
    %v1581 = vpop.f32.mrb[0].mxu0
    %1582 = vdwg.mxu0
    %v1583 = vmul.f32 %v1580, 0.35355338
    %v1584 = vsel %vm123, -1e+09, %v1583
    %v1585 = vsel %vm1030, %v1584, -inf
    %1586 = vmax.xlane.f32.xlu0 %v1585
    %v1587 = vpop.xlane.xlu0 %1586
    %v1588 = vsub.f32 %v1584, %v1587
    %v1589 = vmul.f32 %v1588, 1.442695
    %v1590 = vpow.pop %v1589
    %v1591 = vsel %vm1030, %v1590, 0.0
    %1592 = vadd.xlane.f32.xlu0 %v1591
    %v1593 = vpop.xlane.xlu0 %1592
    %v1594 = vrcp.pop %v1593
    %v1595 = vmul.f32 %v1593, %v1594
    %v1596 = vsub.f32 2.0, %v1595
    %v1597 = vmul.f32 %v1594, %v1596
    %v1598 = vmul.f32 %v1590, %v1597
    %v1600 = vsel %vm1030, %v1598, 0
    %1602 = vmatprep.subr.mxu0 0.0
    %1603 = vmatpush1.msra.mxu0 %v947
    %1604 = vmatprep.subr.mxu0 0.0
    %1605 = vmatpush1.msra.mxu0 0.0
    %1606 = vmatprep.subr.mxu0 0.0
    %1607 = vmatpush1.msra.mxu0 0.0
    %1608 = vmatprep.subr.mxu0 0.0
    %1609 = vmatpush1.msra.mxu0 0.0
    %1610 = vmatprep.subr.mxu0 0.0
    %1611 = vmatpush1.msra.mxu0 0.0
    %1612 = vmatprep.subr.mxu0 0.0
    %1613 = vmatpush1.msra.mxu0 0.0
    %1614 = vmatprep.subr.mxu0 0.0
    %1615 = vmatpush1.msra.mxu0 0.0
    %1616 = vmatprep.subr.mxu0 0.0
    %1617 = vmatpush1.msra.mxu0 0.0
    %1618 = vmatprep.subr.mxu0 0.0
    %1619 = vmatpush1.msra.mxu0 0.0
    %1620 = vmatprep.subr.mxu0 0.0
    %1621 = vmatpush1.msra.mxu0 0.0
    %1622 = vmatprep.subr.mxu0 0.0
    %1623 = vmatpush1.msra.mxu0 0.0
    %1624 = vmatprep.subr.mxu0 0.0
    %1625 = vmatpush1.msra.mxu0 0.0
    %1626 = vmatprep.subr.mxu0 0.0
    %1627 = vmatpush1.msra.mxu0 0.0
    %1628 = vmatprep.subr.mxu0 0.0
    %1629 = vmatpush1.msra.mxu0 0.0
    %1630 = vmatprep.subr.mxu0 0.0
    %1631 = vmatpush1.msra.mxu0 0.0
    %1632 = vmatprep.subr.mxu0 0.0
    %1633 = vmatpush1.msra.mxu0 0.0
    %1634 = vmatprep.subr.mxu0 0.0
    %1635 = vmatpush1.msra.mxu0 0.0
    %1636 = vmatprep.subr.mxu0 0.0
    %1637 = vmatpush1.msra.mxu0 0.0
    %1638 = vmatprep.subr.mxu0 0.0
    %1639 = vmatpush1.msra.mxu0 0.0
    %1640 = vmatprep.subr.mxu0 0.0
    %1641 = vmatpush1.msra.mxu0 0.0
    %1642 = vmatprep.subr.mxu0 0.0
    %1643 = vmatpush1.msra.mxu0 0.0
    %1644 = vmatprep.subr.mxu0 0.0
    %1645 = vmatpush1.msra.mxu0 0.0
    %1646 = vmatprep.subr.mxu0 0.0
    %1647 = vmatpush1.msra.mxu0 0.0
    %1648 = vmatprep.subr.mxu0 0.0
    %1649 = vmatpush1.msra.mxu0 0.0
    %1650 = vmatprep.subr.mxu0 0.0
    %1651 = vmatpush1.msra.mxu0 0.0
    %1652 = vmatprep.subr.mxu0 0.0
    %1653 = vmatpush1.msra.mxu0 0.0
    %1654 = vmatprep.subr.mxu0 0.0
    %1655 = vmatpush1.msra.mxu0 0.0
    %1656 = vmatprep.subr.mxu0 0.0
    %1657 = vmatpush1.msra.mxu0 0.0
    %1658 = vmatprep.subr.mxu0 0.0
    %1659 = vmatpush1.msra.mxu0 0.0
    %1660 = vmatprep.subr.mxu0 0.0
    %1661 = vmatpush1.msra.mxu0 0.0
    %1662 = vmatprep.subr.mxu0 0.0
    %1663 = vmatpush1.msra.mxu0 0.0
    %1664 = vmatprep.subr.mxu0 0.0
    %1665 = vmatpush1.msra.mxu0 0.0
    %1666 = vmatprep.mubr.f32.mxu0 0.0
    %1667 = vmatmul.mubr.f32.gmra.mrb[0].mxu0 %v1600
    %v1668 = vpop.f32.mrb[0].mxu0
    %v1669 = vadd.f32 0.0, %v1668
    %v1670 = vpop.f32.mrb[0].mxu0
    %1671 = vdwg.mxu0
    %v1673 = vsel %vm1030, %v1669, 0
    %1675 = vmatprep.subr.mxu0 0.0
    %1676 = vmatpush1.msra.mxu0 %v117
    %1677 = vmatprep.subr.mxu0 0.0
    %1678 = vmatpush1.msra.mxu0 0.0
    %1679 = vmatprep.subr.mxu0 0.0
    %1680 = vmatpush1.msra.mxu0 0.0
    %1681 = vmatprep.subr.mxu0 0.0
    %1682 = vmatpush1.msra.mxu0 0.0
    %1683 = vmatprep.subr.mxu0 0.0
    %1684 = vmatpush1.msra.mxu0 0.0
    %1685 = vmatprep.subr.mxu0 0.0
    %1686 = vmatpush1.msra.mxu0 0.0
    %1687 = vmatprep.subr.mxu0 0.0
    %1688 = vmatpush1.msra.mxu0 0.0
    %1689 = vmatprep.subr.mxu0 0.0
    %1690 = vmatpush1.msra.mxu0 0.0
    %1691 = vmatprep.subr.mxu0 0.0
    %1692 = vmatpush1.msra.mxu0 0.0
    %1693 = vmatprep.subr.mxu0 0.0
    %1694 = vmatpush1.msra.mxu0 0.0
    %1695 = vmatprep.subr.mxu0 0.0
    %1696 = vmatpush1.msra.mxu0 0.0
    %1697 = vmatprep.subr.mxu0 0.0
    %1698 = vmatpush1.msra.mxu0 0.0
    %1699 = vmatprep.subr.mxu0 0.0
    %1700 = vmatpush1.msra.mxu0 0.0
    %1701 = vmatprep.subr.mxu0 0.0
    %1702 = vmatpush1.msra.mxu0 0.0
    %1703 = vmatprep.subr.mxu0 0.0
    %1704 = vmatpush1.msra.mxu0 0.0
    %1705 = vmatprep.subr.mxu0 0.0
    %1706 = vmatpush1.msra.mxu0 0.0
    %1707 = vmatprep.subr.mxu0 0.0
    %1708 = vmatpush1.msra.mxu0 0.0
    %1709 = vmatprep.subr.mxu0 0.0
    %1710 = vmatpush1.msra.mxu0 0.0
    %1711 = vmatprep.subr.mxu0 0.0
    %1712 = vmatpush1.msra.mxu0 0.0
    %1713 = vmatprep.subr.mxu0 0.0
    %1714 = vmatpush1.msra.mxu0 0.0
    %1715 = vmatprep.subr.mxu0 0.0
    %1716 = vmatpush1.msra.mxu0 0.0
    %1717 = vmatprep.subr.mxu0 0.0
    %1718 = vmatpush1.msra.mxu0 0.0
    %1719 = vmatprep.subr.mxu0 0.0
    %1720 = vmatpush1.msra.mxu0 0.0
    %1721 = vmatprep.subr.mxu0 0.0
    %1722 = vmatpush1.msra.mxu0 0.0
    %1723 = vmatprep.subr.mxu0 0.0
    %1724 = vmatpush1.msra.mxu0 0.0
    %1725 = vmatprep.subr.mxu0 0.0
    %1726 = vmatpush1.msra.mxu0 0.0
    %1727 = vmatprep.subr.mxu0 0.0
    %1728 = vmatpush1.msra.mxu0 0.0
    %1729 = vmatprep.subr.mxu0 0.0
    %1730 = vmatpush1.msra.mxu0 0.0
    %1731 = vmatprep.subr.mxu0 0.0
    %1732 = vmatpush1.msra.mxu0 0.0
    %1733 = vmatprep.subr.mxu0 0.0
    %1734 = vmatpush1.msra.mxu0 0.0
    %1735 = vmatprep.subr.mxu0 0.0
    %1736 = vmatpush1.msra.mxu0 0.0
    %1737 = vmatprep.subr.mxu0 0.0
    %1738 = vmatpush1.msra.mxu0 0.0
    %1739 = vmatprep.mubr.f32.mxu0 0.0
    %1740 = vmatmul.mubr.f32.gmra.mrb[0].mxu0 %v1673
    %v1741 = vpop.f32.mrb[0].mxu0
    %v1742 = vadd.f32 0.0, %v1741
    %v1743 = vpop.f32.mrb[0].mxu0
    %1744 = vdwg.mxu0
    %v1745 = vadd.f32 %v1504, %v1742
    %v1747 = vsel %vm1030, %v422, 0
    %v1750 = vsel %vm1030, %v722, 0
    %1752 = vmatprep.subr.mxu0 0.0
    %1753 = vmatpush1.xpose.msra.mxu0 %v1750
    %1754 = vmatprep.subr.mxu0 0.0
    %1755 = vmatpush1.xpose.msra.mxu0 0.0
    %1756 = vmatprep.subr.mxu0 0.0
    %1757 = vmatpush1.xpose.msra.mxu0 0.0
    %1758 = vmatprep.subr.mxu0 0.0
    %1759 = vmatpush1.xpose.msra.mxu0 0.0
    %1760 = vmatprep.subr.mxu0 0.0
    %1761 = vmatpush1.xpose.msra.mxu0 0.0
    %1762 = vmatprep.subr.mxu0 0.0
    %1763 = vmatpush1.xpose.msra.mxu0 0.0
    %1764 = vmatprep.subr.mxu0 0.0
    %1765 = vmatpush1.xpose.msra.mxu0 0.0
    %1766 = vmatprep.subr.mxu0 0.0
    %1767 = vmatpush1.xpose.msra.mxu0 0.0
    %1768 = vmatprep.subr.mxu0 0.0
    %1769 = vmatpush1.xpose.msra.mxu0 0.0
    %1770 = vmatprep.subr.mxu0 0.0
    %1771 = vmatpush1.xpose.msra.mxu0 0.0
    %1772 = vmatprep.subr.mxu0 0.0
    %1773 = vmatpush1.xpose.msra.mxu0 0.0
    %1774 = vmatprep.subr.mxu0 0.0
    %1775 = vmatpush1.xpose.msra.mxu0 0.0
    %1776 = vmatprep.subr.mxu0 0.0
    %1777 = vmatpush1.xpose.msra.mxu0 0.0
    %1778 = vmatprep.subr.mxu0 0.0
    %1779 = vmatpush1.xpose.msra.mxu0 0.0
    %1780 = vmatprep.subr.mxu0 0.0
    %1781 = vmatpush1.xpose.msra.mxu0 0.0
    %1782 = vmatprep.subr.mxu0 0.0
    %1783 = vmatpush1.xpose.msra.mxu0 0.0
    %1784 = vmatprep.subr.mxu0 0.0
    %1785 = vmatpush1.xpose.msra.mxu0 0.0
    %1786 = vmatprep.subr.mxu0 0.0
    %1787 = vmatpush1.xpose.msra.mxu0 0.0
    %1788 = vmatprep.subr.mxu0 0.0
    %1789 = vmatpush1.xpose.msra.mxu0 0.0
    %1790 = vmatprep.subr.mxu0 0.0
    %1791 = vmatpush1.xpose.msra.mxu0 0.0
    %1792 = vmatprep.subr.mxu0 0.0
    %1793 = vmatpush1.xpose.msra.mxu0 0.0
    %1794 = vmatprep.subr.mxu0 0.0
    %1795 = vmatpush1.xpose.msra.mxu0 0.0
    %1796 = vmatprep.subr.mxu0 0.0
    %1797 = vmatpush1.xpose.msra.mxu0 0.0
    %1798 = vmatprep.subr.mxu0 0.0
    %1799 = vmatpush1.xpose.msra.mxu0 0.0
    %1800 = vmatprep.subr.mxu0 0.0
    %1801 = vmatpush1.xpose.msra.mxu0 0.0
    %1802 = vmatprep.subr.mxu0 0.0
    %1803 = vmatpush1.xpose.msra.mxu0 0.0
    %1804 = vmatprep.subr.mxu0 0.0
    %1805 = vmatpush1.xpose.msra.mxu0 0.0
    %1806 = vmatprep.subr.mxu0 0.0
    %1807 = vmatpush1.xpose.msra.mxu0 0.0
    %1808 = vmatprep.subr.mxu0 0.0
    %1809 = vmatpush1.xpose.msra.mxu0 0.0
    %1810 = vmatprep.subr.mxu0 0.0
    %1811 = vmatpush1.xpose.msra.mxu0 0.0
    %1812 = vmatprep.subr.mxu0 0.0
    %1813 = vmatpush1.xpose.msra.mxu0 0.0
    %1814 = vmatprep.subr.mxu0 0.0
    %1815 = vmatpush1.xpose.msra.mxu0 0.0
    %1816 = vmatprep.mubr.f32.mxu0 0.0
    %1817 = vmatmul.mubr.f32.gmra.mrb[0].mxu0 %v1747
    %v1818 = vpop.f32.mrb[0].mxu0
    %v1819 = vadd.f32 0.0, %v1818
    %v1820 = vpop.f32.mrb[0].mxu0
    %1821 = vdwg.mxu0
    %v1822 = vmul.f32 %v1819, 0.35355338
    %v1823 = vsel %vm123, -1e+09, %v1822
    %v1824 = vsel %vm1030, %v1823, -inf
    %1825 = vmax.xlane.f32.xlu0 %v1824
    %v1826 = vpop.xlane.xlu0 %1825
    %v1827 = vsub.f32 %v1823, %v1826
    %v1828 = vmul.f32 %v1827, 1.442695
    %v1829 = vpow.pop %v1828
    %v1830 = vsel %vm1030, %v1829, 0.0
    %1831 = vadd.xlane.f32.xlu0 %v1830
    %v1832 = vpop.xlane.xlu0 %1831
    %v1833 = vrcp.pop %v1832
    %v1834 = vmul.f32 %v1832, %v1833
    %v1835 = vsub.f32 2.0, %v1834
    %v1836 = vmul.f32 %v1833, %v1835
    %v1837 = vmul.f32 %v1829, %v1836
    %v1839 = vsel %vm1030, %v1837, 0
    %1841 = vmatprep.subr.mxu0 0.0
    %1842 = vmatpush1.msra.mxu0 %v1022
    %1843 = vmatprep.subr.mxu0 0.0
    %1844 = vmatpush1.msra.mxu0 0.0
    %1845 = vmatprep.subr.mxu0 0.0
    %1846 = vmatpush1.msra.mxu0 0.0
    %1847 = vmatprep.subr.mxu0 0.0
    %1848 = vmatpush1.msra.mxu0 0.0
    %1849 = vmatprep.subr.mxu0 0.0
    %1850 = vmatpush1.msra.mxu0 0.0
    %1851 = vmatprep.subr.mxu0 0.0
    %1852 = vmatpush1.msra.mxu0 0.0
    %1853 = vmatprep.subr.mxu0 0.0
    %1854 = vmatpush1.msra.mxu0 0.0
    %1855 = vmatprep.subr.mxu0 0.0
    %1856 = vmatpush1.msra.mxu0 0.0
    %1857 = vmatprep.subr.mxu0 0.0
    %1858 = vmatpush1.msra.mxu0 0.0
    %1859 = vmatprep.subr.mxu0 0.0
    %1860 = vmatpush1.msra.mxu0 0.0
    %1861 = vmatprep.subr.mxu0 0.0
    %1862 = vmatpush1.msra.mxu0 0.0
    %1863 = vmatprep.subr.mxu0 0.0
    %1864 = vmatpush1.msra.mxu0 0.0
    %1865 = vmatprep.subr.mxu0 0.0
    %1866 = vmatpush1.msra.mxu0 0.0
    %1867 = vmatprep.subr.mxu0 0.0
    %1868 = vmatpush1.msra.mxu0 0.0
    %1869 = vmatprep.subr.mxu0 0.0
    %1870 = vmatpush1.msra.mxu0 0.0
    %1871 = vmatprep.subr.mxu0 0.0
    %1872 = vmatpush1.msra.mxu0 0.0
    %1873 = vmatprep.subr.mxu0 0.0
    %1874 = vmatpush1.msra.mxu0 0.0
    %1875 = vmatprep.subr.mxu0 0.0
    %1876 = vmatpush1.msra.mxu0 0.0
    %1877 = vmatprep.subr.mxu0 0.0
    %1878 = vmatpush1.msra.mxu0 0.0
    %1879 = vmatprep.subr.mxu0 0.0
    %1880 = vmatpush1.msra.mxu0 0.0
    %1881 = vmatprep.subr.mxu0 0.0
    %1882 = vmatpush1.msra.mxu0 0.0
    %1883 = vmatprep.subr.mxu0 0.0
    %1884 = vmatpush1.msra.mxu0 0.0
    %1885 = vmatprep.subr.mxu0 0.0
    %1886 = vmatpush1.msra.mxu0 0.0
    %1887 = vmatprep.subr.mxu0 0.0
    %1888 = vmatpush1.msra.mxu0 0.0
    %1889 = vmatprep.subr.mxu0 0.0
    %1890 = vmatpush1.msra.mxu0 0.0
    %1891 = vmatprep.subr.mxu0 0.0
    %1892 = vmatpush1.msra.mxu0 0.0
    %1893 = vmatprep.subr.mxu0 0.0
    %1894 = vmatpush1.msra.mxu0 0.0
    %1895 = vmatprep.subr.mxu0 0.0
    %1896 = vmatpush1.msra.mxu0 0.0
    %1897 = vmatprep.subr.mxu0 0.0
    %1898 = vmatpush1.msra.mxu0 0.0
    %1899 = vmatprep.subr.mxu0 0.0
    %1900 = vmatpush1.msra.mxu0 0.0
    %1901 = vmatprep.subr.mxu0 0.0
    %1902 = vmatpush1.msra.mxu0 0.0
    %1903 = vmatprep.subr.mxu0 0.0
    %1904 = vmatpush1.msra.mxu0 0.0
    %1905 = vmatprep.mubr.f32.mxu0 0.0
    %1906 = vmatmul.mubr.f32.gmra.mrb[0].mxu0 %v1839
    %v1907 = vpop.f32.mrb[0].mxu0
    %v1908 = vadd.f32 0.0, %v1907
    %v1909 = vpop.f32.mrb[0].mxu0
    %1910 = vdwg.mxu0
    %v1912 = vsel %vm1030, %v1908, 0
    %1914 = vmatprep.subr.mxu0 0.0
    %1915 = vmatpush1.msra.mxu0 %v118
    %1916 = vmatprep.subr.mxu0 0.0
    %1917 = vmatpush1.msra.mxu0 0.0
    %1918 = vmatprep.subr.mxu0 0.0
    %1919 = vmatpush1.msra.mxu0 0.0
    %1920 = vmatprep.subr.mxu0 0.0
    %1921 = vmatpush1.msra.mxu0 0.0
    %1922 = vmatprep.subr.mxu0 0.0
    %1923 = vmatpush1.msra.mxu0 0.0
    %1924 = vmatprep.subr.mxu0 0.0
    %1925 = vmatpush1.msra.mxu0 0.0
    %1926 = vmatprep.subr.mxu0 0.0
    %1927 = vmatpush1.msra.mxu0 0.0
    %1928 = vmatprep.subr.mxu0 0.0
    %1929 = vmatpush1.msra.mxu0 0.0
    %1930 = vmatprep.subr.mxu0 0.0
    %1931 = vmatpush1.msra.mxu0 0.0
    %1932 = vmatprep.subr.mxu0 0.0
    %1933 = vmatpush1.msra.mxu0 0.0
    %1934 = vmatprep.subr.mxu0 0.0
    %1935 = vmatpush1.msra.mxu0 0.0
    %1936 = vmatprep.subr.mxu0 0.0
    %1937 = vmatpush1.msra.mxu0 0.0
    %1938 = vmatprep.subr.mxu0 0.0
    %1939 = vmatpush1.msra.mxu0 0.0
    %1940 = vmatprep.subr.mxu0 0.0
    %1941 = vmatpush1.msra.mxu0 0.0
    %1942 = vmatprep.subr.mxu0 0.0
    %1943 = vmatpush1.msra.mxu0 0.0
    %1944 = vmatprep.subr.mxu0 0.0
    %1945 = vmatpush1.msra.mxu0 0.0
    %1946 = vmatprep.subr.mxu0 0.0
    %1947 = vmatpush1.msra.mxu0 0.0
    %1948 = vmatprep.subr.mxu0 0.0
    %1949 = vmatpush1.msra.mxu0 0.0
    %1950 = vmatprep.subr.mxu0 0.0
    %1951 = vmatpush1.msra.mxu0 0.0
    %1952 = vmatprep.subr.mxu0 0.0
    %1953 = vmatpush1.msra.mxu0 0.0
    %1954 = vmatprep.subr.mxu0 0.0
    %1955 = vmatpush1.msra.mxu0 0.0
    %1956 = vmatprep.subr.mxu0 0.0
    %1957 = vmatpush1.msra.mxu0 0.0
    %1958 = vmatprep.subr.mxu0 0.0
    %1959 = vmatpush1.msra.mxu0 0.0
    %1960 = vmatprep.subr.mxu0 0.0
    %1961 = vmatpush1.msra.mxu0 0.0
    %1962 = vmatprep.subr.mxu0 0.0
    %1963 = vmatpush1.msra.mxu0 0.0
    %1964 = vmatprep.subr.mxu0 0.0
    %1965 = vmatpush1.msra.mxu0 0.0
    %1966 = vmatprep.subr.mxu0 0.0
    %1967 = vmatpush1.msra.mxu0 0.0
    %1968 = vmatprep.subr.mxu0 0.0
    %1969 = vmatpush1.msra.mxu0 0.0
    %1970 = vmatprep.subr.mxu0 0.0
    %1971 = vmatpush1.msra.mxu0 0.0
    %1972 = vmatprep.subr.mxu0 0.0
    %1973 = vmatpush1.msra.mxu0 0.0
    %1974 = vmatprep.subr.mxu0 0.0
    %1975 = vmatpush1.msra.mxu0 0.0
    %1976 = vmatprep.subr.mxu0 0.0
    %1977 = vmatpush1.msra.mxu0 0.0
    %1978 = vmatprep.mubr.f32.mxu0 0.0
    %1979 = vmatmul.mubr.f32.gmra.mrb[0].mxu0 %v1912
    %v1980 = vpop.f32.mrb[0].mxu0
    %v1981 = vadd.f32 0.0, %v1980
    %v1982 = vpop.f32.mrb[0].mxu0
    %1983 = vdwg.mxu0
    %v1984 = vadd.f32 %v1745, %v1981
    %v1986 = vsel %vm1030, %v202, 0
    %v1989 = vsel %vm1030, %v502, 0
    %1991 = vmatprep.subr.mxu0 0.0
    %1992 = vmatpush1.xpose.msra.mxu0 %v1989
    %1993 = vmatprep.subr.mxu0 0.0
    %1994 = vmatpush1.xpose.msra.mxu0 0.0
    %1995 = vmatprep.subr.mxu0 0.0
    %1996 = vmatpush1.xpose.msra.mxu0 0.0
    %1997 = vmatprep.subr.mxu0 0.0
    %1998 = vmatpush1.xpose.msra.mxu0 0.0
    %1999 = vmatprep.subr.mxu0 0.0
    %2000 = vmatpush1.xpose.msra.mxu0 0.0
    %2001 = vmatprep.subr.mxu0 0.0
    %2002 = vmatpush1.xpose.msra.mxu0 0.0
    %2003 = vmatprep.subr.mxu0 0.0
    %2004 = vmatpush1.xpose.msra.mxu0 0.0
    %2005 = vmatprep.subr.mxu0 0.0
    %2006 = vmatpush1.xpose.msra.mxu0 0.0
    %2007 = vmatprep.subr.mxu0 0.0
    %2008 = vmatpush1.xpose.msra.mxu0 0.0
    %2009 = vmatprep.subr.mxu0 0.0
    %2010 = vmatpush1.xpose.msra.mxu0 0.0
    %2011 = vmatprep.subr.mxu0 0.0
    %2012 = vmatpush1.xpose.msra.mxu0 0.0
    %2013 = vmatprep.subr.mxu0 0.0
    %2014 = vmatpush1.xpose.msra.mxu0 0.0
    %2015 = vmatprep.subr.mxu0 0.0
    %2016 = vmatpush1.xpose.msra.mxu0 0.0
    %2017 = vmatprep.subr.mxu0 0.0
    %2018 = vmatpush1.xpose.msra.mxu0 0.0
    %2019 = vmatprep.subr.mxu0 0.0
    %2020 = vmatpush1.xpose.msra.mxu0 0.0
    %2021 = vmatprep.subr.mxu0 0.0
    %2022 = vmatpush1.xpose.msra.mxu0 0.0
    %2023 = vmatprep.subr.mxu0 0.0
    %2024 = vmatpush1.xpose.msra.mxu0 0.0
    %2025 = vmatprep.subr.mxu0 0.0
    %2026 = vmatpush1.xpose.msra.mxu0 0.0
    %2027 = vmatprep.subr.mxu0 0.0
    %2028 = vmatpush1.xpose.msra.mxu0 0.0
    %2029 = vmatprep.subr.mxu0 0.0
    %2030 = vmatpush1.xpose.msra.mxu0 0.0
    %2031 = vmatprep.subr.mxu0 0.0
    %2032 = vmatpush1.xpose.msra.mxu0 0.0
    %2033 = vmatprep.subr.mxu0 0.0
    %2034 = vmatpush1.xpose.msra.mxu0 0.0
    %2035 = vmatprep.subr.mxu0 0.0
    %2036 = vmatpush1.xpose.msra.mxu0 0.0
    %2037 = vmatprep.subr.mxu0 0.0
    %2038 = vmatpush1.xpose.msra.mxu0 0.0
    %2039 = vmatprep.subr.mxu0 0.0
    %2040 = vmatpush1.xpose.msra.mxu0 0.0
    %2041 = vmatprep.subr.mxu0 0.0
    %2042 = vmatpush1.xpose.msra.mxu0 0.0
    %2043 = vmatprep.subr.mxu0 0.0
    %2044 = vmatpush1.xpose.msra.mxu0 0.0
    %2045 = vmatprep.subr.mxu0 0.0
    %2046 = vmatpush1.xpose.msra.mxu0 0.0
    %2047 = vmatprep.subr.mxu0 0.0
    %2048 = vmatpush1.xpose.msra.mxu0 0.0
    %2049 = vmatprep.subr.mxu0 0.0
    %2050 = vmatpush1.xpose.msra.mxu0 0.0
    %2051 = vmatprep.subr.mxu0 0.0
    %2052 = vmatpush1.xpose.msra.mxu0 0.0
    %2053 = vmatprep.subr.mxu0 0.0
    %2054 = vmatpush1.xpose.msra.mxu0 0.0
    %2055 = vmatprep.mubr.f32.mxu0 0.0
    %2056 = vmatmul.mubr.f32.gmra.mrb[0].mxu0 %v1986
    %v2057 = vpop.f32.mrb[0].mxu0
    %v2058 = vadd.f32 0.0, %v2057
    %v2059 = vpop.f32.mrb[0].mxu0
    %2060 = vdwg.mxu0
    %v2061 = vmul.f32 %v2058, 0.35355338
    %v2062 = vsel %vm123, -1e+09, %v2061
    %v2063 = vsel %vm1030, %v2062, -inf
    %2064 = vmax.xlane.f32.xlu0 %v2063
    %v2065 = vpop.xlane.xlu0 %2064
    %v2066 = vsub.f32 %v2062, %v2065
    %v2067 = vmul.f32 %v2066, 1.442695
    %v2068 = vpow.pop %v2067
    %v2069 = vsel %vm1030, %v2068, 0.0
    %2070 = vadd.xlane.f32.xlu0 %v2069
    %v2071 = vpop.xlane.xlu0 %2070
    %v2072 = vrcp.pop %v2071
    %v2073 = vmul.f32 %v2071, %v2072
    %v2074 = vsub.f32 2.0, %v2073
    %v2075 = vmul.f32 %v2072, %v2074
    %v2076 = vmul.f32 %v2068, %v2075
    %v2078 = vsel %vm1030, %v2076, 0
    %2080 = vmatprep.subr.mxu0 0.0
    %2081 = vmatpush1.msra.mxu0 %v802
    %2082 = vmatprep.subr.mxu0 0.0
    %2083 = vmatpush1.msra.mxu0 0.0
    %2084 = vmatprep.subr.mxu0 0.0
    %2085 = vmatpush1.msra.mxu0 0.0
    %2086 = vmatprep.subr.mxu0 0.0
    %2087 = vmatpush1.msra.mxu0 0.0
    %2088 = vmatprep.subr.mxu0 0.0
    %2089 = vmatpush1.msra.mxu0 0.0
    %2090 = vmatprep.subr.mxu0 0.0
    %2091 = vmatpush1.msra.mxu0 0.0
    %2092 = vmatprep.subr.mxu0 0.0
    %2093 = vmatpush1.msra.mxu0 0.0
    %2094 = vmatprep.subr.mxu0 0.0
    %2095 = vmatpush1.msra.mxu0 0.0
    %2096 = vmatprep.subr.mxu0 0.0
    %2097 = vmatpush1.msra.mxu0 0.0
    %2098 = vmatprep.subr.mxu0 0.0
    %2099 = vmatpush1.msra.mxu0 0.0
    %2100 = vmatprep.subr.mxu0 0.0
    %2101 = vmatpush1.msra.mxu0 0.0
    %2102 = vmatprep.subr.mxu0 0.0
    %2103 = vmatpush1.msra.mxu0 0.0
    %2104 = vmatprep.subr.mxu0 0.0
    %2105 = vmatpush1.msra.mxu0 0.0
    %2106 = vmatprep.subr.mxu0 0.0
    %2107 = vmatpush1.msra.mxu0 0.0
    %2108 = vmatprep.subr.mxu0 0.0
    %2109 = vmatpush1.msra.mxu0 0.0
    %2110 = vmatprep.subr.mxu0 0.0
    %2111 = vmatpush1.msra.mxu0 0.0
    %2112 = vmatprep.subr.mxu0 0.0
    %2113 = vmatpush1.msra.mxu0 0.0
    %2114 = vmatprep.subr.mxu0 0.0
    %2115 = vmatpush1.msra.mxu0 0.0
    %2116 = vmatprep.subr.mxu0 0.0
    %2117 = vmatpush1.msra.mxu0 0.0
    %2118 = vmatprep.subr.mxu0 0.0
    %2119 = vmatpush1.msra.mxu0 0.0
    %2120 = vmatprep.subr.mxu0 0.0
    %2121 = vmatpush1.msra.mxu0 0.0
    %2122 = vmatprep.subr.mxu0 0.0
    %2123 = vmatpush1.msra.mxu0 0.0
    %2124 = vmatprep.subr.mxu0 0.0
    %2125 = vmatpush1.msra.mxu0 0.0
    %2126 = vmatprep.subr.mxu0 0.0
    %2127 = vmatpush1.msra.mxu0 0.0
    %2128 = vmatprep.subr.mxu0 0.0
    %2129 = vmatpush1.msra.mxu0 0.0
    %2130 = vmatprep.subr.mxu0 0.0
    %2131 = vmatpush1.msra.mxu0 0.0
    %2132 = vmatprep.subr.mxu0 0.0
    %2133 = vmatpush1.msra.mxu0 0.0
    %2134 = vmatprep.subr.mxu0 0.0
    %2135 = vmatpush1.msra.mxu0 0.0
    %2136 = vmatprep.subr.mxu0 0.0
    %2137 = vmatpush1.msra.mxu0 0.0
    %2138 = vmatprep.subr.mxu0 0.0
    %2139 = vmatpush1.msra.mxu0 0.0
    %2140 = vmatprep.subr.mxu0 0.0
    %2141 = vmatpush1.msra.mxu0 0.0
    %2142 = vmatprep.subr.mxu0 0.0
    %2143 = vmatpush1.msra.mxu0 0.0
    %2144 = vmatprep.mubr.f32.mxu0 0.0
    %2145 = vmatmul.mubr.f32.gmra.mrb[0].mxu0 %v2078
    %v2146 = vpop.f32.mrb[0].mxu0
    %v2147 = vadd.f32 0.0, %v2146
    %v2148 = vpop.f32.mrb[0].mxu0
    %2149 = vdwg.mxu0
    %v2151 = vsel %vm1030, %v277, 0
    %v2154 = vsel %vm1030, %v577, 0
    %2156 = vmatprep.subr.mxu0 0.0
    %2157 = vmatpush1.xpose.msra.mxu0 %v2154
    %2158 = vmatprep.subr.mxu0 0.0
    %2159 = vmatpush1.xpose.msra.mxu0 0.0
    %2160 = vmatprep.subr.mxu0 0.0
    %2161 = vmatpush1.xpose.msra.mxu0 0.0
    %2162 = vmatprep.subr.mxu0 0.0
    %2163 = vmatpush1.xpose.msra.mxu0 0.0
    %2164 = vmatprep.subr.mxu0 0.0
    %2165 = vmatpush1.xpose.msra.mxu0 0.0
    %2166 = vmatprep.subr.mxu0 0.0
    %2167 = vmatpush1.xpose.msra.mxu0 0.0
    %2168 = vmatprep.subr.mxu0 0.0
    %2169 = vmatpush1.xpose.msra.mxu0 0.0
    %2170 = vmatprep.subr.mxu0 0.0
    %2171 = vmatpush1.xpose.msra.mxu0 0.0
    %2172 = vmatprep.subr.mxu0 0.0
    %2173 = vmatpush1.xpose.msra.mxu0 0.0
    %2174 = vmatprep.subr.mxu0 0.0
    %2175 = vmatpush1.xpose.msra.mxu0 0.0
    %2176 = vmatprep.subr.mxu0 0.0
    %2177 = vmatpush1.xpose.msra.mxu0 0.0
    %2178 = vmatprep.subr.mxu0 0.0
    %2179 = vmatpush1.xpose.msra.mxu0 0.0
    %2180 = vmatprep.subr.mxu0 0.0
    %2181 = vmatpush1.xpose.msra.mxu0 0.0
    %2182 = vmatprep.subr.mxu0 0.0
    %2183 = vmatpush1.xpose.msra.mxu0 0.0
    %2184 = vmatprep.subr.mxu0 0.0
    %2185 = vmatpush1.xpose.msra.mxu0 0.0
    %2186 = vmatprep.subr.mxu0 0.0
    %2187 = vmatpush1.xpose.msra.mxu0 0.0
    %2188 = vmatprep.subr.mxu0 0.0
    %2189 = vmatpush1.xpose.msra.mxu0 0.0
    %2190 = vmatprep.subr.mxu0 0.0
    %2191 = vmatpush1.xpose.msra.mxu0 0.0
    %2192 = vmatprep.subr.mxu0 0.0
    %2193 = vmatpush1.xpose.msra.mxu0 0.0
    %2194 = vmatprep.subr.mxu0 0.0
    %2195 = vmatpush1.xpose.msra.mxu0 0.0
    %2196 = vmatprep.subr.mxu0 0.0
    %2197 = vmatpush1.xpose.msra.mxu0 0.0
    %2198 = vmatprep.subr.mxu0 0.0
    %2199 = vmatpush1.xpose.msra.mxu0 0.0
    %2200 = vmatprep.subr.mxu0 0.0
    %2201 = vmatpush1.xpose.msra.mxu0 0.0
    %2202 = vmatprep.subr.mxu0 0.0
    %2203 = vmatpush1.xpose.msra.mxu0 0.0
    %2204 = vmatprep.subr.mxu0 0.0
    %2205 = vmatpush1.xpose.msra.mxu0 0.0
    %2206 = vmatprep.subr.mxu0 0.0
    %2207 = vmatpush1.xpose.msra.mxu0 0.0
    %2208 = vmatprep.subr.mxu0 0.0
    %2209 = vmatpush1.xpose.msra.mxu0 0.0
    %2210 = vmatprep.subr.mxu0 0.0
    %2211 = vmatpush1.xpose.msra.mxu0 0.0
    %2212 = vmatprep.subr.mxu0 0.0
    %2213 = vmatpush1.xpose.msra.mxu0 0.0
    %2214 = vmatprep.subr.mxu0 0.0
    %2215 = vmatpush1.xpose.msra.mxu0 0.0
    %2216 = vmatprep.subr.mxu0 0.0
    %2217 = vmatpush1.xpose.msra.mxu0 0.0
    %2218 = vmatprep.subr.mxu0 0.0
    %2219 = vmatpush1.xpose.msra.mxu0 0.0
    %2220 = vmatprep.mubr.f32.mxu0 0.0
    %2221 = vmatmul.mubr.f32.gmra.mrb[0].mxu0 %v2151
    %v2222 = vpop.f32.mrb[0].mxu0
    %v2223 = vadd.f32 0.0, %v2222
    %v2224 = vpop.f32.mrb[0].mxu0
    %2225 = vdwg.mxu0
    %v2226 = vmul.f32 %v2223, 0.35355338
    %v2227 = vsel %vm123, -1e+09, %v2226
    %v2228 = vsel %vm1030, %v2227, -inf
    %2229 = vmax.xlane.f32.xlu0 %v2228
    %v2230 = vpop.xlane.xlu0 %2229
    %v2231 = vsub.f32 %v2227, %v2230
    %v2232 = vmul.f32 %v2231, 1.442695
    %v2233 = vpow.pop %v2232
    %v2234 = vsel %vm1030, %v2233, 0.0
    %2235 = vadd.xlane.f32.xlu0 %v2234
    %v2236 = vpop.xlane.xlu0 %2235
    %v2237 = vrcp.pop %v2236
    %v2238 = vmul.f32 %v2236, %v2237
    %v2239 = vsub.f32 2.0, %v2238
    %v2240 = vmul.f32 %v2237, %v2239
    %v2241 = vmul.f32 %v2233, %v2240
    %v2243 = vsel %vm1030, %v2241, 0
    %2245 = vmatprep.subr.mxu0 0.0
    %2246 = vmatpush1.msra.mxu0 %v877
    %2247 = vmatprep.subr.mxu0 0.0
    %2248 = vmatpush1.msra.mxu0 0.0
    %2249 = vmatprep.subr.mxu0 0.0
    %2250 = vmatpush1.msra.mxu0 0.0
    %2251 = vmatprep.subr.mxu0 0.0
    %2252 = vmatpush1.msra.mxu0 0.0
    %2253 = vmatprep.subr.mxu0 0.0
    %2254 = vmatpush1.msra.mxu0 0.0
    %2255 = vmatprep.subr.mxu0 0.0
    %2256 = vmatpush1.msra.mxu0 0.0
    %2257 = vmatprep.subr.mxu0 0.0
    %2258 = vmatpush1.msra.mxu0 0.0
    %2259 = vmatprep.subr.mxu0 0.0
    %2260 = vmatpush1.msra.mxu0 0.0
    %2261 = vmatprep.subr.mxu0 0.0
    %2262 = vmatpush1.msra.mxu0 0.0
    %2263 = vmatprep.subr.mxu0 0.0
    %2264 = vmatpush1.msra.mxu0 0.0
    %2265 = vmatprep.subr.mxu0 0.0
    %2266 = vmatpush1.msra.mxu0 0.0
    %2267 = vmatprep.subr.mxu0 0.0
    %2268 = vmatpush1.msra.mxu0 0.0
    %2269 = vmatprep.subr.mxu0 0.0
    %2270 = vmatpush1.msra.mxu0 0.0
    %2271 = vmatprep.subr.mxu0 0.0
    %2272 = vmatpush1.msra.mxu0 0.0
    %2273 = vmatprep.subr.mxu0 0.0
    %2274 = vmatpush1.msra.mxu0 0.0
    %2275 = vmatprep.subr.mxu0 0.0
    %2276 = vmatpush1.msra.mxu0 0.0
    %2277 = vmatprep.subr.mxu0 0.0
    %2278 = vmatpush1.msra.mxu0 0.0
    %2279 = vmatprep.subr.mxu0 0.0
    %2280 = vmatpush1.msra.mxu0 0.0
    %2281 = vmatprep.subr.mxu0 0.0
    %2282 = vmatpush1.msra.mxu0 0.0
    %2283 = vmatprep.subr.mxu0 0.0
    %2284 = vmatpush1.msra.mxu0 0.0
    %2285 = vmatprep.subr.mxu0 0.0
    %2286 = vmatpush1.msra.mxu0 0.0
    %2287 = vmatprep.subr.mxu0 0.0
    %2288 = vmatpush1.msra.mxu0 0.0
    %2289 = vmatprep.subr.mxu0 0.0
    %2290 = vmatpush1.msra.mxu0 0.0
    %2291 = vmatprep.subr.mxu0 0.0
    %2292 = vmatpush1.msra.mxu0 0.0
    %2293 = vmatprep.subr.mxu0 0.0
    %2294 = vmatpush1.msra.mxu0 0.0
    %2295 = vmatprep.subr.mxu0 0.0
    %2296 = vmatpush1.msra.mxu0 0.0
    %2297 = vmatprep.subr.mxu0 0.0
    %2298 = vmatpush1.msra.mxu0 0.0
    %2299 = vmatprep.subr.mxu0 0.0
    %2300 = vmatpush1.msra.mxu0 0.0
    %2301 = vmatprep.subr.mxu0 0.0
    %2302 = vmatpush1.msra.mxu0 0.0
    %2303 = vmatprep.subr.mxu0 0.0
    %2304 = vmatpush1.msra.mxu0 0.0
    %2305 = vmatprep.subr.mxu0 0.0
    %2306 = vmatpush1.msra.mxu0 0.0
    %2307 = vmatprep.subr.mxu0 0.0
    %2308 = vmatpush1.msra.mxu0 0.0
    %2309 = vmatprep.mubr.f32.mxu0 0.0
    %2310 = vmatmul.mubr.f32.gmra.mrb[0].mxu0 %v2243
    %v2311 = vpop.f32.mrb[0].mxu0
    %v2312 = vadd.f32 0.0, %v2311
    %v2313 = vpop.f32.mrb[0].mxu0
    %2314 = vdwg.mxu0
    %v2316 = vsel %vm1030, %v2312, 0
    %2318 = vmatprep.subr.mxu0 0.0
    %2319 = vmatpush1.msra.mxu0 %v116
    %2320 = vmatprep.subr.mxu0 0.0
    %2321 = vmatpush1.msra.mxu0 0.0
    %2322 = vmatprep.subr.mxu0 0.0
    %2323 = vmatpush1.msra.mxu0 0.0
    %2324 = vmatprep.subr.mxu0 0.0
    %2325 = vmatpush1.msra.mxu0 0.0
    %2326 = vmatprep.subr.mxu0 0.0
    %2327 = vmatpush1.msra.mxu0 0.0
    %2328 = vmatprep.subr.mxu0 0.0
    %2329 = vmatpush1.msra.mxu0 0.0
    %2330 = vmatprep.subr.mxu0 0.0
    %2331 = vmatpush1.msra.mxu0 0.0
    %2332 = vmatprep.subr.mxu0 0.0
    %2333 = vmatpush1.msra.mxu0 0.0
    %2334 = vmatprep.subr.mxu0 0.0
    %2335 = vmatpush1.msra.mxu0 0.0
    %2336 = vmatprep.subr.mxu0 0.0
    %2337 = vmatpush1.msra.mxu0 0.0
    %2338 = vmatprep.subr.mxu0 0.0
    %2339 = vmatpush1.msra.mxu0 0.0
    %2340 = vmatprep.subr.mxu0 0.0
    %2341 = vmatpush1.msra.mxu0 0.0
    %2342 = vmatprep.subr.mxu0 0.0
    %2343 = vmatpush1.msra.mxu0 0.0
    %2344 = vmatprep.subr.mxu0 0.0
    %2345 = vmatpush1.msra.mxu0 0.0
    %2346 = vmatprep.subr.mxu0 0.0
    %2347 = vmatpush1.msra.mxu0 0.0
    %2348 = vmatprep.subr.mxu0 0.0
    %2349 = vmatpush1.msra.mxu0 0.0
    %2350 = vmatprep.subr.mxu0 0.0
    %2351 = vmatpush1.msra.mxu0 0.0
    %2352 = vmatprep.subr.mxu0 0.0
    %2353 = vmatpush1.msra.mxu0 0.0
    %2354 = vmatprep.subr.mxu0 0.0
    %2355 = vmatpush1.msra.mxu0 0.0
    %2356 = vmatprep.subr.mxu0 0.0
    %2357 = vmatpush1.msra.mxu0 0.0
    %2358 = vmatprep.subr.mxu0 0.0
    %2359 = vmatpush1.msra.mxu0 0.0
    %2360 = vmatprep.subr.mxu0 0.0
    %2361 = vmatpush1.msra.mxu0 0.0
    %2362 = vmatprep.subr.mxu0 0.0
    %2363 = vmatpush1.msra.mxu0 0.0
    %2364 = vmatprep.subr.mxu0 0.0
    %2365 = vmatpush1.msra.mxu0 0.0
    %2366 = vmatprep.subr.mxu0 0.0
    %2367 = vmatpush1.msra.mxu0 0.0
    %2368 = vmatprep.subr.mxu0 0.0
    %2369 = vmatpush1.msra.mxu0 0.0
    %2370 = vmatprep.subr.mxu0 0.0
    %2371 = vmatpush1.msra.mxu0 0.0
    %2372 = vmatprep.subr.mxu0 0.0
    %2373 = vmatpush1.msra.mxu0 0.0
    %2374 = vmatprep.subr.mxu0 0.0
    %2375 = vmatpush1.msra.mxu0 0.0
    %2376 = vmatprep.subr.mxu0 0.0
    %2377 = vmatpush1.msra.mxu0 0.0
    %2378 = vmatprep.subr.mxu0 0.0
    %2379 = vmatpush1.msra.mxu0 0.0
    %2380 = vmatprep.subr.mxu0 0.0
    %2381 = vmatpush1.msra.mxu0 0.0
    %2382 = vmatprep.mubr.f32.mxu0 0.0
    %2383 = vmatmul.mubr.f32.gmra.mrb[0].mxu0 %v2316
    %v2384 = vpop.f32.mrb[0].mxu0
    %v2385 = vadd.f32 0.0, %v2384
    %v2386 = vpop.f32.mrb[0].mxu0
    %2387 = vdwg.mxu0
    %v2389 = vsel %vm1030, %v2147, 0
    %2391 = vmatprep.subr.mxu0 0.0
    %2392 = vmatpush1.msra.mxu0 %v115
    %2393 = vmatprep.subr.mxu0 0.0
    %2394 = vmatpush1.msra.mxu0 0.0
    %2395 = vmatprep.subr.mxu0 0.0
    %2396 = vmatpush1.msra.mxu0 0.0
    %2397 = vmatprep.subr.mxu0 0.0
    %2398 = vmatpush1.msra.mxu0 0.0
    %2399 = vmatprep.subr.mxu0 0.0
    %2400 = vmatpush1.msra.mxu0 0.0
    %2401 = vmatprep.subr.mxu0 0.0
    %2402 = vmatpush1.msra.mxu0 0.0
    %2403 = vmatprep.subr.mxu0 0.0
    %2404 = vmatpush1.msra.mxu0 0.0
    %2405 = vmatprep.subr.mxu0 0.0
    %2406 = vmatpush1.msra.mxu0 0.0
    %2407 = vmatprep.subr.mxu0 0.0
    %2408 = vmatpush1.msra.mxu0 0.0
    %2409 = vmatprep.subr.mxu0 0.0
    %2410 = vmatpush1.msra.mxu0 0.0
    %2411 = vmatprep.subr.mxu0 0.0
    %2412 = vmatpush1.msra.mxu0 0.0
    %2413 = vmatprep.subr.mxu0 0.0
    %2414 = vmatpush1.msra.mxu0 0.0
    %2415 = vmatprep.subr.mxu0 0.0
    %2416 = vmatpush1.msra.mxu0 0.0
    %2417 = vmatprep.subr.mxu0 0.0
    %2418 = vmatpush1.msra.mxu0 0.0
    %2419 = vmatprep.subr.mxu0 0.0
    %2420 = vmatpush1.msra.mxu0 0.0
    %2421 = vmatprep.subr.mxu0 0.0
    %2422 = vmatpush1.msra.mxu0 0.0
    %2423 = vmatprep.subr.mxu0 0.0
    %2424 = vmatpush1.msra.mxu0 0.0
    %2425 = vmatprep.subr.mxu0 0.0
    %2426 = vmatpush1.msra.mxu0 0.0
    %2427 = vmatprep.subr.mxu0 0.0
    %2428 = vmatpush1.msra.mxu0 0.0
    %2429 = vmatprep.subr.mxu0 0.0
    %2430 = vmatpush1.msra.mxu0 0.0
    %2431 = vmatprep.subr.mxu0 0.0
    %2432 = vmatpush1.msra.mxu0 0.0
    %2433 = vmatprep.subr.mxu0 0.0
    %2434 = vmatpush1.msra.mxu0 0.0
    %2435 = vmatprep.subr.mxu0 0.0
    %2436 = vmatpush1.msra.mxu0 0.0
    %2437 = vmatprep.subr.mxu0 0.0
    %2438 = vmatpush1.msra.mxu0 0.0
    %2439 = vmatprep.subr.mxu0 0.0
    %2440 = vmatpush1.msra.mxu0 0.0
    %2441 = vmatprep.subr.mxu0 0.0
    %2442 = vmatpush1.msra.mxu0 0.0
    %2443 = vmatprep.subr.mxu0 0.0
    %2444 = vmatpush1.msra.mxu0 0.0
    %2445 = vmatprep.subr.mxu0 0.0
    %2446 = vmatpush1.msra.mxu0 0.0
    %2447 = vmatprep.subr.mxu0 0.0
    %2448 = vmatpush1.msra.mxu0 0.0
    %2449 = vmatprep.subr.mxu0 0.0
    %2450 = vmatpush1.msra.mxu0 0.0
    %2451 = vmatprep.subr.mxu0 0.0
    %2452 = vmatpush1.msra.mxu0 0.0
    %2453 = vmatprep.subr.mxu0 0.0
    %2454 = vmatpush1.msra.mxu0 0.0
    %2455 = vmatprep.mubr.f32.mxu0 0.0
    %2456 = vmatmul.mubr.f32.gmra.mrb[0].mxu0 %v2389
    %v2457 = vpop.f32.mrb[0].mxu0
    %v2458 = vadd.f32 %v2385, %v2457
    %v2459 = vpop.f32.mrb[0].mxu0
    %2460 = vdwg.mxu0
    %v2462 = vsel %vm1030, %v352, 0
    %v2465 = vsel %vm1030, %v652, 0
    %2467 = vmatprep.subr.mxu0 0.0
    %2468 = vmatpush1.xpose.msra.mxu0 %v2465
    %2469 = vmatprep.subr.mxu0 0.0
    %2470 = vmatpush1.xpose.msra.mxu0 0.0
    %2471 = vmatprep.subr.mxu0 0.0
    %2472 = vmatpush1.xpose.msra.mxu0 0.0
    %2473 = vmatprep.subr.mxu0 0.0
    %2474 = vmatpush1.xpose.msra.mxu0 0.0
    %2475 = vmatprep.subr.mxu0 0.0
    %2476 = vmatpush1.xpose.msra.mxu0 0.0
    %2477 = vmatprep.subr.mxu0 0.0
    %2478 = vmatpush1.xpose.msra.mxu0 0.0
    %2479 = vmatprep.subr.mxu0 0.0
    %2480 = vmatpush1.xpose.msra.mxu0 0.0
    %2481 = vmatprep.subr.mxu0 0.0
    %2482 = vmatpush1.xpose.msra.mxu0 0.0
    %2483 = vmatprep.subr.mxu0 0.0
    %2484 = vmatpush1.xpose.msra.mxu0 0.0
    %2485 = vmatprep.subr.mxu0 0.0
    %2486 = vmatpush1.xpose.msra.mxu0 0.0
    %2487 = vmatprep.subr.mxu0 0.0
    %2488 = vmatpush1.xpose.msra.mxu0 0.0
    %2489 = vmatprep.subr.mxu0 0.0
    %2490 = vmatpush1.xpose.msra.mxu0 0.0
    %2491 = vmatprep.subr.mxu0 0.0
    %2492 = vmatpush1.xpose.msra.mxu0 0.0
    %2493 = vmatprep.subr.mxu0 0.0
    %2494 = vmatpush1.xpose.msra.mxu0 0.0
    %2495 = vmatprep.subr.mxu0 0.0
    %2496 = vmatpush1.xpose.msra.mxu0 0.0
    %2497 = vmatprep.subr.mxu0 0.0
    %2498 = vmatpush1.xpose.msra.mxu0 0.0
    %2499 = vmatprep.subr.mxu0 0.0
    %2500 = vmatpush1.xpose.msra.mxu0 0.0
    %2501 = vmatprep.subr.mxu0 0.0
    %2502 = vmatpush1.xpose.msra.mxu0 0.0
    %2503 = vmatprep.subr.mxu0 0.0
    %2504 = vmatpush1.xpose.msra.mxu0 0.0
    %2505 = vmatprep.subr.mxu0 0.0
    %2506 = vmatpush1.xpose.msra.mxu0 0.0
    %2507 = vmatprep.subr.mxu0 0.0
    %2508 = vmatpush1.xpose.msra.mxu0 0.0
    %2509 = vmatprep.subr.mxu0 0.0
    %2510 = vmatpush1.xpose.msra.mxu0 0.0
    %2511 = vmatprep.subr.mxu0 0.0
    %2512 = vmatpush1.xpose.msra.mxu0 0.0
    %2513 = vmatprep.subr.mxu0 0.0
    %2514 = vmatpush1.xpose.msra.mxu0 0.0
    %2515 = vmatprep.subr.mxu0 0.0
    %2516 = vmatpush1.xpose.msra.mxu0 0.0
    %2517 = vmatprep.subr.mxu0 0.0
    %2518 = vmatpush1.xpose.msra.mxu0 0.0
    %2519 = vmatprep.subr.mxu0 0.0
    %2520 = vmatpush1.xpose.msra.mxu0 0.0
    %2521 = vmatprep.subr.mxu0 0.0
    %2522 = vmatpush1.xpose.msra.mxu0 0.0
    %2523 = vmatprep.subr.mxu0 0.0
    %2524 = vmatpush1.xpose.msra.mxu0 0.0
    %2525 = vmatprep.subr.mxu0 0.0
    %2526 = vmatpush1.xpose.msra.mxu0 0.0
    %2527 = vmatprep.subr.mxu0 0.0
    %2528 = vmatpush1.xpose.msra.mxu0 0.0
    %2529 = vmatprep.subr.mxu0 0.0
    %2530 = vmatpush1.xpose.msra.mxu0 0.0
    %2531 = vmatprep.mubr.f32.mxu0 0.0
    %2532 = vmatmul.mubr.f32.gmra.mrb[0].mxu0 %v2462
    %v2533 = vpop.f32.mrb[0].mxu0
    %v2534 = vadd.f32 0.0, %v2533
    %v2535 = vpop.f32.mrb[0].mxu0
    %2536 = vdwg.mxu0
    %v2537 = vmul.f32 %v2534, 0.35355338
    %v2538 = vsel %vm123, -1e+09, %v2537
    %v2539 = vsel %vm1030, %v2538, -inf
    %2540 = vmax.xlane.f32.xlu0 %v2539
    %v2541 = vpop.xlane.xlu0 %2540
    %v2542 = vsub.f32 %v2538, %v2541
    %v2543 = vmul.f32 %v2542, 1.442695
    %v2544 = vpow.pop %v2543
    %v2545 = vsel %vm1030, %v2544, 0.0
    %2546 = vadd.xlane.f32.xlu0 %v2545
    %v2547 = vpop.xlane.xlu0 %2546
    %v2548 = vrcp.pop %v2547
    %v2549 = vmul.f32 %v2547, %v2548
    %v2550 = vsub.f32 2.0, %v2549
    %v2551 = vmul.f32 %v2548, %v2550
    %v2552 = vmul.f32 %v2544, %v2551
    %v2554 = vsel %vm1030, %v2552, 0
    %2556 = vmatprep.subr.mxu0 0.0
    %2557 = vmatpush1.msra.mxu0 %v952
    %2558 = vmatprep.subr.mxu0 0.0
    %2559 = vmatpush1.msra.mxu0 0.0
    %2560 = vmatprep.subr.mxu0 0.0
    %2561 = vmatpush1.msra.mxu0 0.0
    %2562 = vmatprep.subr.mxu0 0.0
    %2563 = vmatpush1.msra.mxu0 0.0
    %2564 = vmatprep.subr.mxu0 0.0
    %2565 = vmatpush1.msra.mxu0 0.0
    %2566 = vmatprep.subr.mxu0 0.0
    %2567 = vmatpush1.msra.mxu0 0.0
    %2568 = vmatprep.subr.mxu0 0.0
    %2569 = vmatpush1.msra.mxu0 0.0
    %2570 = vmatprep.subr.mxu0 0.0
    %2571 = vmatpush1.msra.mxu0 0.0
    %2572 = vmatprep.subr.mxu0 0.0
    %2573 = vmatpush1.msra.mxu0 0.0
    %2574 = vmatprep.subr.mxu0 0.0
    %2575 = vmatpush1.msra.mxu0 0.0
    %2576 = vmatprep.subr.mxu0 0.0
    %2577 = vmatpush1.msra.mxu0 0.0
    %2578 = vmatprep.subr.mxu0 0.0
    %2579 = vmatpush1.msra.mxu0 0.0
    %2580 = vmatprep.subr.mxu0 0.0
    %2581 = vmatpush1.msra.mxu0 0.0
    %2582 = vmatprep.subr.mxu0 0.0
    %2583 = vmatpush1.msra.mxu0 0.0
    %2584 = vmatprep.subr.mxu0 0.0
    %2585 = vmatpush1.msra.mxu0 0.0
    %2586 = vmatprep.subr.mxu0 0.0
    %2587 = vmatpush1.msra.mxu0 0.0
    %2588 = vmatprep.subr.mxu0 0.0
    %2589 = vmatpush1.msra.mxu0 0.0
    %2590 = vmatprep.subr.mxu0 0.0
    %2591 = vmatpush1.msra.mxu0 0.0
    %2592 = vmatprep.subr.mxu0 0.0
    %2593 = vmatpush1.msra.mxu0 0.0
    %2594 = vmatprep.subr.mxu0 0.0
    %2595 = vmatpush1.msra.mxu0 0.0
    %2596 = vmatprep.subr.mxu0 0.0
    %2597 = vmatpush1.msra.mxu0 0.0
    %2598 = vmatprep.subr.mxu0 0.0
    %2599 = vmatpush1.msra.mxu0 0.0
    %2600 = vmatprep.subr.mxu0 0.0
    %2601 = vmatpush1.msra.mxu0 0.0
    %2602 = vmatprep.subr.mxu0 0.0
    %2603 = vmatpush1.msra.mxu0 0.0
    %2604 = vmatprep.subr.mxu0 0.0
    %2605 = vmatpush1.msra.mxu0 0.0
    %2606 = vmatprep.subr.mxu0 0.0
    %2607 = vmatpush1.msra.mxu0 0.0
    %2608 = vmatprep.subr.mxu0 0.0
    %2609 = vmatpush1.msra.mxu0 0.0
    %2610 = vmatprep.subr.mxu0 0.0
    %2611 = vmatpush1.msra.mxu0 0.0
    %2612 = vmatprep.subr.mxu0 0.0
    %2613 = vmatpush1.msra.mxu0 0.0
    %2614 = vmatprep.subr.mxu0 0.0
    %2615 = vmatpush1.msra.mxu0 0.0
    %2616 = vmatprep.subr.mxu0 0.0
    %2617 = vmatpush1.msra.mxu0 0.0
    %2618 = vmatprep.subr.mxu0 0.0
    %2619 = vmatpush1.msra.mxu0 0.0
    %2620 = vmatprep.mubr.f32.mxu0 0.0
    %2621 = vmatmul.mubr.f32.gmra.mrb[0].mxu0 %v2554
    %v2622 = vpop.f32.mrb[0].mxu0
    %v2623 = vadd.f32 0.0, %v2622
    %v2624 = vpop.f32.mrb[0].mxu0
    %2625 = vdwg.mxu0
    %v2627 = vsel %vm1030, %v2623, 0
    %2629 = vmatprep.subr.mxu0 0.0
    %2630 = vmatpush1.msra.mxu0 %v117
    %2631 = vmatprep.subr.mxu0 0.0
    %2632 = vmatpush1.msra.mxu0 0.0
    %2633 = vmatprep.subr.mxu0 0.0
    %2634 = vmatpush1.msra.mxu0 0.0
    %2635 = vmatprep.subr.mxu0 0.0
    %2636 = vmatpush1.msra.mxu0 0.0
    %2637 = vmatprep.subr.mxu0 0.0
    %2638 = vmatpush1.msra.mxu0 0.0
    %2639 = vmatprep.subr.mxu0 0.0
    %2640 = vmatpush1.msra.mxu0 0.0
    %2641 = vmatprep.subr.mxu0 0.0
    %2642 = vmatpush1.msra.mxu0 0.0
    %2643 = vmatprep.subr.mxu0 0.0
    %2644 = vmatpush1.msra.mxu0 0.0
    %2645 = vmatprep.subr.mxu0 0.0
    %2646 = vmatpush1.msra.mxu0 0.0
    %2647 = vmatprep.subr.mxu0 0.0
    %2648 = vmatpush1.msra.mxu0 0.0
    %2649 = vmatprep.subr.mxu0 0.0
    %2650 = vmatpush1.msra.mxu0 0.0
    %2651 = vmatprep.subr.mxu0 0.0
    %2652 = vmatpush1.msra.mxu0 0.0
    %2653 = vmatprep.subr.mxu0 0.0
    %2654 = vmatpush1.msra.mxu0 0.0
    %2655 = vmatprep.subr.mxu0 0.0
    %2656 = vmatpush1.msra.mxu0 0.0
    %2657 = vmatprep.subr.mxu0 0.0
    %2658 = vmatpush1.msra.mxu0 0.0
    %2659 = vmatprep.subr.mxu0 0.0
    %2660 = vmatpush1.msra.mxu0 0.0
    %2661 = vmatprep.subr.mxu0 0.0
    %2662 = vmatpush1.msra.mxu0 0.0
    %2663 = vmatprep.subr.mxu0 0.0
    %2664 = vmatpush1.msra.mxu0 0.0
    %2665 = vmatprep.subr.mxu0 0.0
    %2666 = vmatpush1.msra.mxu0 0.0
    %2667 = vmatprep.subr.mxu0 0.0
    %2668 = vmatpush1.msra.mxu0 0.0
    %2669 = vmatprep.subr.mxu0 0.0
    %2670 = vmatpush1.msra.mxu0 0.0
    %2671 = vmatprep.subr.mxu0 0.0
    %2672 = vmatpush1.msra.mxu0 0.0
    %2673 = vmatprep.subr.mxu0 0.0
    %2674 = vmatpush1.msra.mxu0 0.0
    %2675 = vmatprep.subr.mxu0 0.0
    %2676 = vmatpush1.msra.mxu0 0.0
    %2677 = vmatprep.subr.mxu0 0.0
    %2678 = vmatpush1.msra.mxu0 0.0
    %2679 = vmatprep.subr.mxu0 0.0
    %2680 = vmatpush1.msra.mxu0 0.0
    %2681 = vmatprep.subr.mxu0 0.0
    %2682 = vmatpush1.msra.mxu0 0.0
    %2683 = vmatprep.subr.mxu0 0.0
    %2684 = vmatpush1.msra.mxu0 0.0
    %2685 = vmatprep.subr.mxu0 0.0
    %2686 = vmatpush1.msra.mxu0 0.0
    %2687 = vmatprep.subr.mxu0 0.0
    %2688 = vmatpush1.msra.mxu0 0.0
    %2689 = vmatprep.subr.mxu0 0.0
    %2690 = vmatpush1.msra.mxu0 0.0
    %2691 = vmatprep.subr.mxu0 0.0
    %2692 = vmatpush1.msra.mxu0 0.0
    %2693 = vmatprep.mubr.f32.mxu0 0.0
    %2694 = vmatmul.mubr.f32.gmra.mrb[0].mxu0 %v2627
    %v2695 = vpop.f32.mrb[0].mxu0
    %v2696 = vadd.f32 0.0, %v2695
    %v2697 = vpop.f32.mrb[0].mxu0
    %2698 = vdwg.mxu0
    %v2699 = vadd.f32 %v2458, %v2696
    %v2701 = vsel %vm1030, %v427, 0
    %v2704 = vsel %vm1030, %v727, 0
    %2706 = vmatprep.subr.mxu0 0.0
    %2707 = vmatpush1.xpose.msra.mxu0 %v2704
    %2708 = vmatprep.subr.mxu0 0.0
    %2709 = vmatpush1.xpose.msra.mxu0 0.0
    %2710 = vmatprep.subr.mxu0 0.0
    %2711 = vmatpush1.xpose.msra.mxu0 0.0
    %2712 = vmatprep.subr.mxu0 0.0
    %2713 = vmatpush1.xpose.msra.mxu0 0.0
    %2714 = vmatprep.subr.mxu0 0.0
    %2715 = vmatpush1.xpose.msra.mxu0 0.0
    %2716 = vmatprep.subr.mxu0 0.0
    %2717 = vmatpush1.xpose.msra.mxu0 0.0
    %2718 = vmatprep.subr.mxu0 0.0
    %2719 = vmatpush1.xpose.msra.mxu0 0.0
    %2720 = vmatprep.subr.mxu0 0.0
    %2721 = vmatpush1.xpose.msra.mxu0 0.0
    %2722 = vmatprep.subr.mxu0 0.0
    %2723 = vmatpush1.xpose.msra.mxu0 0.0
    %2724 = vmatprep.subr.mxu0 0.0
    %2725 = vmatpush1.xpose.msra.mxu0 0.0
    %2726 = vmatprep.subr.mxu0 0.0
    %2727 = vmatpush1.xpose.msra.mxu0 0.0
    %2728 = vmatprep.subr.mxu0 0.0
    %2729 = vmatpush1.xpose.msra.mxu0 0.0
    %2730 = vmatprep.subr.mxu0 0.0
    %2731 = vmatpush1.xpose.msra.mxu0 0.0
    %2732 = vmatprep.subr.mxu0 0.0
    %2733 = vmatpush1.xpose.msra.mxu0 0.0
    %2734 = vmatprep.subr.mxu0 0.0
    %2735 = vmatpush1.xpose.msra.mxu0 0.0
    %2736 = vmatprep.subr.mxu0 0.0
    %2737 = vmatpush1.xpose.msra.mxu0 0.0
    %2738 = vmatprep.subr.mxu0 0.0
    %2739 = vmatpush1.xpose.msra.mxu0 0.0
    %2740 = vmatprep.subr.mxu0 0.0
    %2741 = vmatpush1.xpose.msra.mxu0 0.0
    %2742 = vmatprep.subr.mxu0 0.0
    %2743 = vmatpush1.xpose.msra.mxu0 0.0
    %2744 = vmatprep.subr.mxu0 0.0
    %2745 = vmatpush1.xpose.msra.mxu0 0.0
    %2746 = vmatprep.subr.mxu0 0.0
    %2747 = vmatpush1.xpose.msra.mxu0 0.0
    %2748 = vmatprep.subr.mxu0 0.0
    %2749 = vmatpush1.xpose.msra.mxu0 0.0
    %2750 = vmatprep.subr.mxu0 0.0
    %2751 = vmatpush1.xpose.msra.mxu0 0.0
    %2752 = vmatprep.subr.mxu0 0.0
    %2753 = vmatpush1.xpose.msra.mxu0 0.0
    %2754 = vmatprep.subr.mxu0 0.0
    %2755 = vmatpush1.xpose.msra.mxu0 0.0
    %2756 = vmatprep.subr.mxu0 0.0
    %2757 = vmatpush1.xpose.msra.mxu0 0.0
    %2758 = vmatprep.subr.mxu0 0.0
    %2759 = vmatpush1.xpose.msra.mxu0 0.0
    %2760 = vmatprep.subr.mxu0 0.0
    %2761 = vmatpush1.xpose.msra.mxu0 0.0
    %2762 = vmatprep.subr.mxu0 0.0
    %2763 = vmatpush1.xpose.msra.mxu0 0.0
    %2764 = vmatprep.subr.mxu0 0.0
    %2765 = vmatpush1.xpose.msra.mxu0 0.0
    %2766 = vmatprep.subr.mxu0 0.0
    %2767 = vmatpush1.xpose.msra.mxu0 0.0
    %2768 = vmatprep.subr.mxu0 0.0
    %2769 = vmatpush1.xpose.msra.mxu0 0.0
    %2770 = vmatprep.mubr.f32.mxu0 0.0
    %2771 = vmatmul.mubr.f32.gmra.mrb[0].mxu0 %v2701
    %v2772 = vpop.f32.mrb[0].mxu0
    %v2773 = vadd.f32 0.0, %v2772
    %v2774 = vpop.f32.mrb[0].mxu0
    %2775 = vdwg.mxu0
    %v2776 = vmul.f32 %v2773, 0.35355338
    %v2777 = vsel %vm123, -1e+09, %v2776
    %v2778 = vsel %vm1030, %v2777, -inf
    %2779 = vmax.xlane.f32.xlu0 %v2778
    %v2780 = vpop.xlane.xlu0 %2779
    %v2781 = vsub.f32 %v2777, %v2780
    %v2782 = vmul.f32 %v2781, 1.442695
    %v2783 = vpow.pop %v2782
    %v2784 = vsel %vm1030, %v2783, 0.0
    %2785 = vadd.xlane.f32.xlu0 %v2784
    %v2786 = vpop.xlane.xlu0 %2785
    %v2787 = vrcp.pop %v2786
    %v2788 = vmul.f32 %v2786, %v2787
    %v2789 = vsub.f32 2.0, %v2788
    %v2790 = vmul.f32 %v2787, %v2789
    %v2791 = vmul.f32 %v2783, %v2790
    %v2793 = vsel %vm1030, %v2791, 0
    %2795 = vmatprep.subr.mxu0 0.0
    %2796 = vmatpush1.msra.mxu0 %v1027
    %2797 = vmatprep.subr.mxu0 0.0
    %2798 = vmatpush1.msra.mxu0 0.0
    %2799 = vmatprep.subr.mxu0 0.0
    %2800 = vmatpush1.msra.mxu0 0.0
    %2801 = vmatprep.subr.mxu0 0.0
    %2802 = vmatpush1.msra.mxu0 0.0
    %2803 = vmatprep.subr.mxu0 0.0
    %2804 = vmatpush1.msra.mxu0 0.0
    %2805 = vmatprep.subr.mxu0 0.0
    %2806 = vmatpush1.msra.mxu0 0.0
    %2807 = vmatprep.subr.mxu0 0.0
    %2808 = vmatpush1.msra.mxu0 0.0
    %2809 = vmatprep.subr.mxu0 0.0
    %2810 = vmatpush1.msra.mxu0 0.0
    %2811 = vmatprep.subr.mxu0 0.0
    %2812 = vmatpush1.msra.mxu0 0.0
    %2813 = vmatprep.subr.mxu0 0.0
    %2814 = vmatpush1.msra.mxu0 0.0
    %2815 = vmatprep.subr.mxu0 0.0
    %2816 = vmatpush1.msra.mxu0 0.0
    %2817 = vmatprep.subr.mxu0 0.0
    %2818 = vmatpush1.msra.mxu0 0.0
    %2819 = vmatprep.subr.mxu0 0.0
    %2820 = vmatpush1.msra.mxu0 0.0
    %2821 = vmatprep.subr.mxu0 0.0
    %2822 = vmatpush1.msra.mxu0 0.0
    %2823 = vmatprep.subr.mxu0 0.0
    %2824 = vmatpush1.msra.mxu0 0.0
    %2825 = vmatprep.subr.mxu0 0.0
    %2826 = vmatpush1.msra.mxu0 0.0
    %2827 = vmatprep.subr.mxu0 0.0
    %2828 = vmatpush1.msra.mxu0 0.0
    %2829 = vmatprep.subr.mxu0 0.0
    %2830 = vmatpush1.msra.mxu0 0.0
    %2831 = vmatprep.subr.mxu0 0.0
    %2832 = vmatpush1.msra.mxu0 0.0
    %2833 = vmatprep.subr.mxu0 0.0
    %2834 = vmatpush1.msra.mxu0 0.0
    %2835 = vmatprep.subr.mxu0 0.0
    %2836 = vmatpush1.msra.mxu0 0.0
    %2837 = vmatprep.subr.mxu0 0.0
    %2838 = vmatpush1.msra.mxu0 0.0
    %2839 = vmatprep.subr.mxu0 0.0
    %2840 = vmatpush1.msra.mxu0 0.0
    %2841 = vmatprep.subr.mxu0 0.0
    %2842 = vmatpush1.msra.mxu0 0.0
    %2843 = vmatprep.subr.mxu0 0.0
    %2844 = vmatpush1.msra.mxu0 0.0
    %2845 = vmatprep.subr.mxu0 0.0
    %2846 = vmatpush1.msra.mxu0 0.0
    %2847 = vmatprep.subr.mxu0 0.0
    %2848 = vmatpush1.msra.mxu0 0.0
    %2849 = vmatprep.subr.mxu0 0.0
    %2850 = vmatpush1.msra.mxu0 0.0
    %2851 = vmatprep.subr.mxu0 0.0
    %2852 = vmatpush1.msra.mxu0 0.0
    %2853 = vmatprep.subr.mxu0 0.0
    %2854 = vmatpush1.msra.mxu0 0.0
    %2855 = vmatprep.subr.mxu0 0.0
    %2856 = vmatpush1.msra.mxu0 0.0
    %2857 = vmatprep.subr.mxu0 0.0
    %2858 = vmatpush1.msra.mxu0 0.0
    %2859 = vmatprep.mubr.f32.mxu0 0.0
    %2860 = vmatmul.mubr.f32.gmra.mrb[0].mxu0 %v2793
    %v2861 = vpop.f32.mrb[0].mxu0
    %v2862 = vadd.f32 0.0, %v2861
    %v2863 = vpop.f32.mrb[0].mxu0
    %2864 = vdwg.mxu0
    %v2866 = vsel %vm1030, %v2862, 0
    %2868 = vmatprep.subr.mxu0 0.0
    %2869 = vmatpush1.msra.mxu0 %v118
    %2870 = vmatprep.subr.mxu0 0.0
    %2871 = vmatpush1.msra.mxu0 0.0
    %2872 = vmatprep.subr.mxu0 0.0
    %2873 = vmatpush1.msra.mxu0 0.0
    %2874 = vmatprep.subr.mxu0 0.0
    %2875 = vmatpush1.msra.mxu0 0.0
    %2876 = vmatprep.subr.mxu0 0.0
    %2877 = vmatpush1.msra.mxu0 0.0
    %2878 = vmatprep.subr.mxu0 0.0
    %2879 = vmatpush1.msra.mxu0 0.0
    %2880 = vmatprep.subr.mxu0 0.0
    %2881 = vmatpush1.msra.mxu0 0.0
    %2882 = vmatprep.subr.mxu0 0.0
    %2883 = vmatpush1.msra.mxu0 0.0
    %2884 = vmatprep.subr.mxu0 0.0
    %2885 = vmatpush1.msra.mxu0 0.0
    %2886 = vmatprep.subr.mxu0 0.0
    %2887 = vmatpush1.msra.mxu0 0.0
    %2888 = vmatprep.subr.mxu0 0.0
    %2889 = vmatpush1.msra.mxu0 0.0
    %2890 = vmatprep.subr.mxu0 0.0
    %2891 = vmatpush1.msra.mxu0 0.0
    %2892 = vmatprep.subr.mxu0 0.0
    %2893 = vmatpush1.msra.mxu0 0.0
    %2894 = vmatprep.subr.mxu0 0.0
    %2895 = vmatpush1.msra.mxu0 0.0
    %2896 = vmatprep.subr.mxu0 0.0
    %2897 = vmatpush1.msra.mxu0 0.0
    %2898 = vmatprep.subr.mxu0 0.0
    %2899 = vmatpush1.msra.mxu0 0.0
    %2900 = vmatprep.subr.mxu0 0.0
    %2901 = vmatpush1.msra.mxu0 0.0
    %2902 = vmatprep.subr.mxu0 0.0
    %2903 = vmatpush1.msra.mxu0 0.0
    %2904 = vmatprep.subr.mxu0 0.0
    %2905 = vmatpush1.msra.mxu0 0.0
    %2906 = vmatprep.subr.mxu0 0.0
    %2907 = vmatpush1.msra.mxu0 0.0
    %2908 = vmatprep.subr.mxu0 0.0
    %2909 = vmatpush1.msra.mxu0 0.0
    %2910 = vmatprep.subr.mxu0 0.0
    %2911 = vmatpush1.msra.mxu0 0.0
    %2912 = vmatprep.subr.mxu0 0.0
    %2913 = vmatpush1.msra.mxu0 0.0
    %2914 = vmatprep.subr.mxu0 0.0
    %2915 = vmatpush1.msra.mxu0 0.0
    %2916 = vmatprep.subr.mxu0 0.0
    %2917 = vmatpush1.msra.mxu0 0.0
    %2918 = vmatprep.subr.mxu0 0.0
    %2919 = vmatpush1.msra.mxu0 0.0
    %2920 = vmatprep.subr.mxu0 0.0
    %2921 = vmatpush1.msra.mxu0 0.0
    %2922 = vmatprep.subr.mxu0 0.0
    %2923 = vmatpush1.msra.mxu0 0.0
    %2924 = vmatprep.subr.mxu0 0.0
    %2925 = vmatpush1.msra.mxu0 0.0
    %2926 = vmatprep.subr.mxu0 0.0
    %2927 = vmatpush1.msra.mxu0 0.0
    %2928 = vmatprep.subr.mxu0 0.0
    %2929 = vmatpush1.msra.mxu0 0.0
    %2930 = vmatprep.subr.mxu0 0.0
    %2931 = vmatpush1.msra.mxu0 0.0
    %2932 = vmatprep.mubr.f32.mxu0 0.0
    %2933 = vmatmul.mubr.f32.gmra.mrb[0].mxu0 %v2866
    %v2934 = vpop.f32.mrb[0].mxu0
    %v2935 = vadd.f32 0.0, %v2934
    %v2936 = vpop.f32.mrb[0].mxu0
    %2937 = vdwg.mxu0
    %v2938 = vadd.f32 %v2699, %v2935
    %v2939 = vlaneseq
    %v2940 = vshrl.u32 %v2939, 7
    %v2941 = vsub.s32 2, %v2940
    %v2942 = vrot.slane %v26, %v2941
    %v2943 = vadd.f32 %v1984, %v2942
    %v2944 = vadd.f32 %v2938, %v2942
    %v2945 = vadd.f32 %v24, %v2943
    %v2946 = vadd.f32 %v25, %v2944
    %v2947 = vsel %vm27, %v2945, 0.0
    %2948 = vadd.xlane.f32.xlu0 %v2947
    %v2949 = vpop.xlane.xlu0 %2948
    %v2950 = vsel %vm27, %v2946, 0.0
    %2951 = vadd.xlane.f32.xlu0 %v2950
    %v2952 = vpop.xlane.xlu0 %2951
    %v2953 = vmul.f32 %v2949, %v34
    %v2954 = vmul.f32 %v2952, %v34
    %v2955 = vsub.f32 %v2945, %v2953
    %v2956 = vsub.f32 %v2946, %v2954
    %v2957 = vmul.f32 %v2955, %v2955
    %v2958 = vmul.f32 %v2956, %v2956
    %v2959 = vsel %vm27, %v2957, 0.0
    %2960 = vadd.xlane.f32.xlu0 %v2959
    %v2961 = vpop.xlane.xlu0 %2960
    %v2962 = vsel %vm27, %v2958, 0.0
    %2963 = vadd.xlane.f32.xlu0 %v2962
    %v2964 = vpop.xlane.xlu0 %2963
    %v2965 = vmul.f32 %v2961, %v34
    %v2966 = vmul.f32 %v2964, %v34
    %v2967 = vadd.f32 %v2965, 1e-05
    %v2968 = vadd.f32 %v2966, 1e-05
    %v2969 = vrsqrt.pop %v2967
    %v2970 = vrsqrt.pop %v2968
    %v2971 = vmul.f32 %v2955, %v2969
    %v2972 = vmul.f32 %v2956, %v2970
    %v2973 = vlaneseq
    %v2974 = vshrl.u32 %v2973, 7
    %v2975 = vsub.s32 3, %v2974
    %v2976 = vrot.slane %v26, %v2975
    %v2977 = vmul.f32 %v2971, %v2976
    %v2978 = vmul.f32 %v2972, %v2976
    %v2979 = vlaneseq
    %v2980 = vshrl.u32 %v2979, 7
    %v2981 = vsub.s32 4, %v2980
    %v2982 = vrot.slane %v26, %v2981
    %v2983 = vadd.f32 %v2977, %v2982
    %v2984 = vadd.f32 %v2978, %v2982
    %v2985 = vld [vmem:[%s4] sm:$0xff]
    %v2986 = vld [vmem:[%s4 + $0x8] sm:$0xff]
    %v2987 = vld [vmem:[%s4 + $0x10] sm:$0xff]
    %v2988 = vld [vmem:[%s4 + $0x18] sm:$0xff]
    %v2989 = vlaneseq
    %v2990 = vshrl.u32 %v2989, 7
    %v2991 = vsub.s32 5, %v2990
    %v2992 = vrot.slane %v26, %v2991
    %v2994 = vsel %vm27, %v2983, 0
    %v2997 = vsel %vm27, %v2984, 0
    %2999 = vmatprep.subr.mxu0 0.0
    %3000 = vmatpush1.msra.mxu0 %v2985
    %3001 = vmatprep.subr.mxu0 0.0
    %3002 = vmatpush1.msra.mxu0 %v2986
    %3003 = vmatprep.subr.mxu0 0.0
    %3004 = vmatpush1.msra.mxu0 %v2987
    %3005 = vmatprep.subr.mxu0 0.0
    %3006 = vmatpush1.msra.mxu0 %v2988
    %3007 = vmatprep.subr.mxu0 0.0
    %3008 = vmatpush1.msra.mxu0 0.0
    %3009 = vmatprep.subr.mxu0 0.0
    %3010 = vmatpush1.msra.mxu0 0.0
    %3011 = vmatprep.subr.mxu0 0.0
    %3012 = vmatpush1.msra.mxu0 0.0
    %3013 = vmatprep.subr.mxu0 0.0
    %3014 = vmatpush1.msra.mxu0 0.0
    %3015 = vmatprep.subr.mxu0 0.0
    %3016 = vmatpush1.msra.mxu0 0.0
    %3017 = vmatprep.subr.mxu0 0.0
    %3018 = vmatpush1.msra.mxu0 0.0
    %3019 = vmatprep.subr.mxu0 0.0
    %3020 = vmatpush1.msra.mxu0 0.0
    %3021 = vmatprep.subr.mxu0 0.0
    %3022 = vmatpush1.msra.mxu0 0.0
    %3023 = vmatprep.subr.mxu0 0.0
    %3024 = vmatpush1.msra.mxu0 0.0
    %3025 = vmatprep.subr.mxu0 0.0
    %3026 = vmatpush1.msra.mxu0 0.0
    %3027 = vmatprep.subr.mxu0 0.0
    %3028 = vmatpush1.msra.mxu0 0.0
    %3029 = vmatprep.subr.mxu0 0.0
    %3030 = vmatpush1.msra.mxu0 0.0
    %3031 = vmatprep.subr.mxu0 0.0
    %3032 = vmatpush1.msra.mxu0 0.0
    %3033 = vmatprep.subr.mxu0 0.0
    %3034 = vmatpush1.msra.mxu0 0.0
    %3035 = vmatprep.subr.mxu0 0.0
    %3036 = vmatpush1.msra.mxu0 0.0
    %3037 = vmatprep.subr.mxu0 0.0
    %3038 = vmatpush1.msra.mxu0 0.0
    %3039 = vmatprep.subr.mxu0 0.0
    %3040 = vmatpush1.msra.mxu0 0.0
    %3041 = vmatprep.subr.mxu0 0.0
    %3042 = vmatpush1.msra.mxu0 0.0
    %3043 = vmatprep.subr.mxu0 0.0
    %3044 = vmatpush1.msra.mxu0 0.0
    %3045 = vmatprep.subr.mxu0 0.0
    %3046 = vmatpush1.msra.mxu0 0.0
    %3047 = vmatprep.subr.mxu0 0.0
    %3048 = vmatpush1.msra.mxu0 0.0
    %3049 = vmatprep.subr.mxu0 0.0
    %3050 = vmatpush1.msra.mxu0 0.0
    %3051 = vmatprep.subr.mxu0 0.0
    %3052 = vmatpush1.msra.mxu0 0.0
    %3053 = vmatprep.subr.mxu0 0.0
    %3054 = vmatpush1.msra.mxu0 0.0
    %3055 = vmatprep.subr.mxu0 0.0
    %3056 = vmatpush1.msra.mxu0 0.0
    %3057 = vmatprep.subr.mxu0 0.0
    %3058 = vmatpush1.msra.mxu0 0.0
    %3059 = vmatprep.subr.mxu0 0.0
    %3060 = vmatpush1.msra.mxu0 0.0
    %3061 = vmatprep.subr.mxu0 0.0
    %3062 = vmatpush1.msra.mxu0 0.0
    %3063 = vmatprep.mubr.f32.mxu0 0.0
    %3064 = vmatmul.mubr.f32.gmra.mrb[0].mxu0 %v2994
    %v3065 = vpop.f32.mrb[0].mxu0
    %v3066 = vadd.f32 %v2992, %v3065
    %v3067 = vpop.f32.mrb[0].mxu0
    %3068 = vmatprep.mubr.f32.mxu0 0.0
    %3069 = vmatmul.mubr.f32.gmra.mrb[0].mxu0 %v2997
    %v3070 = vpop.f32.mrb[0].mxu0
    %v3071 = vadd.f32 %v2992, %v3070
    %v3072 = vpop.f32.mrb[0].mxu0
    %3073 = vdwg.mxu0
    %v3074 = vmul.f32 %v3066, 0.5
    %v3075 = vmul.f32 %v3071, 0.5
    %v3076 = vmul.f32 %v3066, 0.70710677
    %v3077 = vmul.f32 %v3071, 0.70710677
    %v3078 = vand.u32 2147483647, %v3076
    %v3079 = vand.u32 2147483647, %v3077
    %v3080 = vmul.f32 %v3078, 0.3275911
    %v3081 = vmul.f32 %v3079, 0.3275911
    %v3082 = vadd.f32 %v3080, 1.0
    %v3083 = vadd.f32 %v3081, 1.0
    %v3084 = vrcp.pop %v3082
    %v3085 = vrcp.pop %v3083
    %v3086 = vmul.f32 %v3082, %v3084
    %v3087 = vmul.f32 %v3083, %v3085
    %v3088 = vsub.f32 2.0, %v3086
    %v3089 = vsub.f32 2.0, %v3087
    %v3090 = vmul.f32 %v3084, %v3088
    %v3091 = vmul.f32 %v3085, %v3089
    %v3092 = vmul.f32 %v3090, 1.0614054
    %v3093 = vmul.f32 %v3091, 1.0614054
    %v3094 = vadd.f32 %v3092, -1.4531521
    %v3095 = vadd.f32 %v3093, -1.4531521
    %v3096 = vmul.f32 %v3094, %v3090
    %v3097 = vmul.f32 %v3095, %v3091
    %v3098 = vadd.f32 %v3096, 1.4214138
    %v3099 = vadd.f32 %v3097, 1.4214138
    %v3100 = vmul.f32 %v3098, %v3090
    %v3101 = vmul.f32 %v3099, %v3091
    %v3102 = vadd.f32 %v3100, -0.28449672
    %v3103 = vadd.f32 %v3101, -0.28449672
    %v3104 = vmul.f32 %v3102, %v3090
    %v3105 = vmul.f32 %v3103, %v3091
    %v3106 = vadd.f32 %v3104, 0.2548296
    %v3107 = vadd.f32 %v3105, 0.2548296
    %v3108 = vmul.f32 %v3106, %v3090
    %v3109 = vmul.f32 %v3107, %v3091
    %v3110 = vsub.f32 0.0, %v3078
    %v3111 = vsub.f32 0.0, %v3079
    %v3112 = vmul.f32 %v3110, %v3078
    %v3113 = vmul.f32 %v3111, %v3079
    %v3114 = vmul.f32 %v3112, 1.442695
    %v3115 = vpow.pop %v3114
    %v3116 = vmul.f32 %v3113, 1.442695
    %v3117 = vpow.pop %v3116
    %v3118 = vmul.f32 %v3108, %v3115
    %v3119 = vmul.f32 %v3109, %v3117
    %v3120 = vsub.f32 1.0, %v3118
    %v3121 = vsub.f32 1.0, %v3119
    %vm3122 = vcmp.ge.f32.partialorder %v3076, 0.0
    %vm3123 = vcmp.ge.f32.partialorder %v3077, 0.0
    %v3124 = vsub.f32 0.0, %v3120
    %v3125 = vsub.f32 0.0, %v3121
    %v3126 = vsel %vm3122, %v3120, %v3124
    %v3127 = vsel %vm3123, %v3121, %v3125
    %v3128 = vadd.f32 %v3126, 1.0
    %v3129 = vadd.f32 %v3127, 1.0
    %v3130 = vmul.f32 %v3074, %v3128
    %v3131 = vmul.f32 %v3075, %v3129
    %v3132 = vld [vmem:[%s5] sm:$0xff]
    %v3133 = vld [vmem:[%s5 + $0x8] sm:$0xff]
    %v3134 = vld [vmem:[%s5 + $0x10] sm:$0xff]
    %v3135 = vld [vmem:[%s5 + $0x18] sm:$0xff]
    %v3136 = vld [vmem:[%s5 + $0x20] sm:$0xff]
    %v3137 = vld [vmem:[%s5 + $0x28] sm:$0xff]
    %v3138 = vld [vmem:[%s5 + $0x30] sm:$0xff]
    %v3139 = vld [vmem:[%s5 + $0x38] sm:$0xff]
    %v3140 = vld [vmem:[%s5 + $0x40] sm:$0xff]
    %v3141 = vld [vmem:[%s5 + $0x48] sm:$0xff]
    %v3142 = vld [vmem:[%s5 + $0x50] sm:$0xff]
    %v3143 = vld [vmem:[%s5 + $0x58] sm:$0xff]
    %v3144 = vld [vmem:[%s5 + $0x60] sm:$0xff]
    %v3145 = vld [vmem:[%s5 + $0x68] sm:$0xff]
    %v3146 = vld [vmem:[%s5 + $0x70] sm:$0xff]
    %v3147 = vld [vmem:[%s5 + $0x78] sm:$0xff]
    %v3148 = vlaneseq
    %v3149 = vshrl.u32 %v3148, 7
    %v3150 = vsub.s32 6, %v3149
    %v3151 = vrot.slane %v26, %v3150
    %3152 = vmatprep.subr.mxu0 0.0
    %3153 = vmatpush1.msra.mxu0 %v3132
    %3154 = vmatprep.subr.mxu0 0.0
    %3155 = vmatpush1.msra.mxu0 %v3133
    %3156 = vmatprep.subr.mxu0 0.0
    %3157 = vmatpush1.msra.mxu0 %v3134
    %3158 = vmatprep.subr.mxu0 0.0
    %3159 = vmatpush1.msra.mxu0 %v3135
    %3160 = vmatprep.subr.mxu0 0.0
    %3161 = vmatpush1.msra.mxu0 %v3136
    %3162 = vmatprep.subr.mxu0 0.0
    %3163 = vmatpush1.msra.mxu0 %v3137
    %3164 = vmatprep.subr.mxu0 0.0
    %3165 = vmatpush1.msra.mxu0 %v3138
    %3166 = vmatprep.subr.mxu0 0.0
    %3167 = vmatpush1.msra.mxu0 %v3139
    %3168 = vmatprep.subr.mxu0 0.0
    %3169 = vmatpush1.msra.mxu0 %v3140
    %3170 = vmatprep.subr.mxu0 0.0
    %3171 = vmatpush1.msra.mxu0 %v3141
    %3172 = vmatprep.subr.mxu0 0.0
    %3173 = vmatpush1.msra.mxu0 %v3142
    %3174 = vmatprep.subr.mxu0 0.0
    %3175 = vmatpush1.msra.mxu0 %v3143
    %3176 = vmatprep.subr.mxu0 0.0
    %3177 = vmatpush1.msra.mxu0 %v3144
    %3178 = vmatprep.subr.mxu0 0.0
    %3179 = vmatpush1.msra.mxu0 %v3145
    %3180 = vmatprep.subr.mxu0 0.0
    %3181 = vmatpush1.msra.mxu0 %v3146
    %3182 = vmatprep.subr.mxu0 0.0
    %3183 = vmatpush1.msra.mxu0 %v3147
    %3184 = vmatprep.subr.mxu0 0.0
    %3185 = vmatpush1.msra.mxu0 0.0
    %3186 = vmatprep.subr.mxu0 0.0
    %3187 = vmatpush1.msra.mxu0 0.0
    %3188 = vmatprep.subr.mxu0 0.0
    %3189 = vmatpush1.msra.mxu0 0.0
    %3190 = vmatprep.subr.mxu0 0.0
    %3191 = vmatpush1.msra.mxu0 0.0
    %3192 = vmatprep.subr.mxu0 0.0
    %3193 = vmatpush1.msra.mxu0 0.0
    %3194 = vmatprep.subr.mxu0 0.0
    %3195 = vmatpush1.msra.mxu0 0.0
    %3196 = vmatprep.subr.mxu0 0.0
    %3197 = vmatpush1.msra.mxu0 0.0
    %3198 = vmatprep.subr.mxu0 0.0
    %3199 = vmatpush1.msra.mxu0 0.0
    %3200 = vmatprep.subr.mxu0 0.0
    %3201 = vmatpush1.msra.mxu0 0.0
    %3202 = vmatprep.subr.mxu0 0.0
    %3203 = vmatpush1.msra.mxu0 0.0
    %3204 = vmatprep.subr.mxu0 0.0
    %3205 = vmatpush1.msra.mxu0 0.0
    %3206 = vmatprep.subr.mxu0 0.0
    %3207 = vmatpush1.msra.mxu0 0.0
    %3208 = vmatprep.subr.mxu0 0.0
    %3209 = vmatpush1.msra.mxu0 0.0
    %3210 = vmatprep.subr.mxu0 0.0
    %3211 = vmatpush1.msra.mxu0 0.0
    %3212 = vmatprep.subr.mxu0 0.0
    %3213 = vmatpush1.msra.mxu0 0.0
    %3214 = vmatprep.subr.mxu0 0.0
    %3215 = vmatpush1.msra.mxu0 0.0
    %3216 = vmatprep.mubr.f32.mxu0 0.0
    %3217 = vmatmul.mubr.f32.gmra.mrb[0].mxu0 %v3130
    %v3218 = vpop.f32.mrb[0].mxu0
    %v3219 = vadd.f32 %v3151, %v3218
    %v3220 = vpop.f32.mrb[0].mxu0
    %3221 = vmatprep.mubr.f32.mxu0 0.0
    %3222 = vmatmul.mubr.f32.gmra.mrb[0].mxu0 %v3131
    %v3223 = vpop.f32.mrb[0].mxu0
    %v3224 = vadd.f32 %v3151, %v3223
    %v3225 = vpop.f32.mrb[0].mxu0
    %3226 = vdwg.mxu0
    %v3227 = vadd.f32 %v2945, %v3219
    %v3228 = vadd.f32 %v2946, %v3224
    %3229 = vst.msk [vmem:[#allocation2] sm:$0xff] %vm27, %v3227
    %3230 = vst.msk [vmem:[#allocation2 + $0x8] sm:$0xff] %vm27, %v3228
    // Predicated region
    $region26: #{tpu_custom_call.1} parent=1 // pred_check
      _
    $region27: #{tpu_custom_call.1} parent=1 // pred_check_branch
      %3232 = sbr.rel (0) target = $region29
    $region28: #{tpu_custom_call.1} parent=1 // pred_region
      %s3234 = ssub.s32 256, 256
      %3235 = vsyncadd [#allocation3], %s3234
      %s3236 = sshll.u32 [#allocation2], 4
      %s3237 = int_to_ptr.vmem [resolvable:$true] %s3236
      %3242 = dma.vmem_to_hbm [thread:$0]  %s3237, 256, %s6, [#allocation3], 128, 128, 8
    $region29: #{tpu_custom_call.1} parent=1 // pred_fallthru
      _
    // Predicated region
    $region30: #{tpu_custom_call.1} parent=1 // pred_check
      _
    $region31: #{tpu_custom_call.1} parent=1 // pred_check_branch
      %3244 = sbr.rel (0) target = $region33
    $region32: #{tpu_custom_call.1} parent=1 // pred_region
      %3245 = dma.done [#allocation3], 256
    $region33: #{tpu_custom_call.1} parent=1 // pred_fallthru
      _
    %3246 = vsyncpa [#allocation3], 1

</llo_original>
